<compile_context>
chip_gen: v6e
topology: v6e:2x2x1
jax: 0.10.0
libtpu: 0.0.40
codegen_flags: <defaults>
</compile_context>

<pallas_src>
import math

import jax
import jax.numpy as jnp
from jax.experimental import pallas as pl
from jax.experimental.pallas import tpu as pltpu

# Small shapes consistent with the module structure (d_model % head == 0, d_ff = 64).
B, S, D, H, DFF = 2, 8, 32, 4, 64
NLAYERS = 2                      # spec uses N=6; only scales the stacked leading axis
DK = D // H
NUM_NORMS = 3 * NLAYERS + 1      # 3 SublayerConnections per layer + Decoder.norm
LN_EPS = 1e6                     # LayerNorm(features) default eps in the reference code
NEG_INF = -1.0e9
INV_SQRT_DK = 1.0 / math.sqrt(DK)
LANE = 128

# ---- weight slab lane offsets (per layer: [Wq*s | Wk | Wv | Wo | W1 | W2^T], width 256) ----
WQKV0 = 0
WO0 = 3 * D
W10 = 4 * D
W2T0 = 4 * D + DFF
WROW = 4 * D + 2 * DFF           # 256 == 2*128 lanes, fully lane-dense

# ---- vec slab rows (each bias / LN vector is one zero-padded 128-lane row) ----
def _row_bqkv(l): return 4 * l + 0     # [bq*s | bk | bv]  (96 wide)
def _row_b1(l):   return 4 * l + 1     # b1                (64 wide)
def _row_bo(l):   return 4 * l + 2     # bo                (32 wide)
def _row_b2(l):   return 4 * l + 3     # b2                (32 wide)
LN_ROW0 = 4 * NLAYERS                  # then a/b rows per LayerNorm (32 wide each)
NUM_VEC_ROWS = 4 * NLAYERS + 2 * NUM_NORMS


def make_decoder_kernel(nb):
    """Kernel processing `nb` batch elements per grid step (rows = nb*S)."""
    R = nb * S              # activation rows per invocation
    AH = H * R              # attention rows (head[, batch]-stacked along sublanes)

    def kernel(x_ref, mem_ref, maskb_ref, w_ref, vec_ref, out_ref):

        def vrow(r, width):
            return vec_ref[r:r + 1, :width]                    # (1, width) static slice

        def layer_norm(v, idx):
            a = vrow(LN_ROW0 + 2 * idx, D)
            b = vrow(LN_ROW0 + 2 * idx + 1, D)
            mean = jnp.mean(v, axis=-1, keepdims=True)
            var = jnp.sum((v - mean) ** 2, axis=-1, keepdims=True) * (1.0 / (D - 1))
            inv = pl.reciprocal(jnp.sqrt(var) + LN_EPS, approx=True)   # 1/(std_unbiased + eps)
            return a * (v - mean) * inv + b

        def stack_heads(m):   # (R, H*DK), heads on lanes -> (H*R, DK), heads on sublanes
            return jnp.concatenate([m[:, h * DK:(h + 1) * DK] for h in range(H)], axis=0)

        def unstack_heads(m):  # (H*R, DK) -> (R, H*DK)
            return jnp.concatenate([m[h * R:(h + 1) * R, :] for h in range(H)], axis=1)

        def mha(q_in, kv_in, l, mi, fused):
            bqkv = vrow(_row_bqkv(l), 3 * D)                   # (1, 3D); q part pre-scaled
            if fused:        # self-attention: one fused (R, D) @ (D, 3D) projection
                qkv = jnp.dot(q_in, w_ref[l, :, WQKV0:WQKV0 + 3 * D],
                              preferred_element_type=jnp.float32) + bqkv
                q, k, v = qkv[:, :D], qkv[:, D:2 * D], qkv[:, 2 * D:]
            else:            # cross-attention: q from x, k/v from raw memory
                q = jnp.dot(q_in, w_ref[l, :, WQKV0:WQKV0 + D],
                            preferred_element_type=jnp.float32) + bqkv[:, :D]
                kv = jnp.dot(kv_in, w_ref[l, :, WQKV0 + D:WQKV0 + 3 * D],
                             preferred_element_type=jnp.float32) + bqkv[:, D:]
                k, v = kv[:, :D], kv[:, D:]
            qb, kb, vb = stack_heads(q), stack_heads(k), stack_heads(v)   # (AH, DK)
            # One score matmul for all heads (and folded batches); block-diag additive bias
            # kills cross-block terms exactly after the softmax max-subtraction.
            scores = jax.lax.dot_general(
                qb, kb, dimension_numbers=(((1,), (1,)), ((), ())),
                preferred_element_type=jnp.float32)                       # (AH, AH)
            scores = scores + maskb_ref[mi]
            mrow = jnp.max(scores, axis=-1, keepdims=True)
            e = jnp.exp(scores - mrow)
            p = e * pl.reciprocal(jnp.sum(e, axis=-1, keepdims=True), approx=True)
            ho = unstack_heads(jnp.dot(p, vb, preferred_element_type=jnp.float32))  # (R, D)
            return (jnp.dot(ho, w_ref[l, :, WO0:WO0 + D],
                            preferred_element_type=jnp.float32) + vrow(_row_bo(l), D))

        x = x_ref[...]          # (R, D)
        mem = mem_ref[...]      # (R, D)
        h_state = x
        for l in range(NLAYERS):
            xn = layer_norm(h_state, 3 * l + 0)
            h_state = h_state + mha(xn, xn, l, 0, fused=True)     # self-attn, target mask
            xn = layer_norm(h_state, 3 * l + 1)
            h_state = h_state + mha(xn, mem, l, 1, fused=False)   # src-attn over raw memory
            xn = layer_norm(h_state, 3 * l + 2)
            hid = jnp.maximum(
                jnp.dot(xn, w_ref[l, :, W10:W10 + DFF],
                        preferred_element_type=jnp.float32) + vrow(_row_b1(l), DFF), 0.0)
            ffn = jax.lax.dot_general(                            # hid @ W2 (W2^T stored)
                hid, w_ref[l, :, W2T0:W2T0 + DFF],
                dimension_numbers=(((1,), (1,)), ((), ())),
                preferred_element_type=jnp.float32) + vrow(_row_b2(l), D)
            h_state = h_state + ffn

        out_ref[...] = layer_norm(h_state, 3 * NLAYERS)           # Decoder.norm

    return kernel


def _default_batches_per_step():
    # v7x has 2 TensorCores/chip -> keep grid=(B,) so batches shard across them.
    # v5e / v6e are single-TC -> fold both batch elements into one grid step.
    try:
        kind = jax.devices()[0].device_kind.lower()
    except Exception:
        kind = ""
    return 1 if "v7" in kind else B


def decoder_forward(x, memory, target_mask, source_mask, params, batches_per_step=None):
    nb = _default_batches_per_step() if batches_per_step is None else batches_per_step
    assert B % nb == 0
    steps = B // nb
    R = nb * S
    AH = H * R

    # ---- wrapper-side packing (trace-time, free) ----
    # Weight slab: per layer [Wq*1/sqrt(dk) | Wk | Wv | Wo | W1 | W2^T] -> (NLAYERS, D, 256).
    w_slab = jnp.concatenate(
        [params["wq"] * INV_SQRT_DK, params["wk"], params["wv"], params["wo"],
         params["w1"], jnp.swapaxes(params["w2"], 1, 2)], axis=2)

    # Vec slab: one zero-padded 128-lane row per bias / LayerNorm vector -> (22, 128).
    def pad_row(v):
        return jnp.pad(v, (0, LANE - v.shape[0]))
    rows = []
    for l in range(NLAYERS):
        rows.append(pad_row(jnp.concatenate(
            [params["bq"][l, 0] * INV_SQRT_DK, params["bk"][l, 0], params["bv"][l, 0]])))
        rows.append(pad_row(params["b1"][l, 0]))
        rows.append(pad_row(params["bo"][l, 0]))
        rows.append(pad_row(params["b2"][l, 0]))
    for n in range(NUM_NORMS):
        rows.append(pad_row(params["ln_a"][n]))
        rows.append(pad_row(params["ln_b"][n]))
    vec_slab = jnp.stack(rows, axis=0)
    assert vec_slab.shape == (NUM_VEC_ROWS, LANE)

    # Masks -> additive block-diagonal biases over the (head[, batch])-stacked rows.
    # Stacked row index = (h*nb + b)*S + s, so block g uses mask head g // nb.
    def block_bias(m):
        bias = jnp.where(m == 0, NEG_INF, 0.0).astype(jnp.float32)   # (H, S, S)
        G = H * nb
        diag = bias[jnp.arange(G) // nb]                             # (G, S, S)
        full = jnp.full((G, S, G, S), NEG_INF, jnp.float32)
        g = jnp.arange(G)
        full = full.at[g, :, g, :].set(diag)
        return full.reshape(G * S, G * S)
    maskb = jnp.stack([block_bias(target_mask), block_bias(source_mask)], axis=0)  # (2,AH,AH)

    x2d = x.reshape(B * S, D)
    mem2d = memory.reshape(B * S, D)

    in_specs = [
        pl.BlockSpec((R, D), lambda i: (i, 0)),          # x rows for this step
        pl.BlockSpec((R, D), lambda i: (i, 0)),          # memory rows for this step
        pl.BlockSpec((2, AH, AH), lambda i: (0, 0, 0)),  # mask biases (grid-invariant)
        pl.BlockSpec((NLAYERS, D, WROW), lambda i: (0, 0, 0)),        # weight slab
        pl.BlockSpec((NUM_VEC_ROWS, LANE), lambda i: (0, 0)),         # bias / LN slab
    ]
    out_specs = pl.BlockSpec((R, D), lambda i: (i, 0))

    out = pl.pallas_call(
        make_decoder_kernel(nb),
        out_shape=jax.ShapeDtypeStruct((B * S, D), jnp.float32),
        grid=(steps,),
        in_specs=in_specs,
        out_specs=out_specs,
        compiler_params=pltpu.CompilerParams(dimension_semantics=("parallel",)),
    )(x2d, mem2d, maskb, w_slab, vec_slab)
    return out.reshape(B, S, D)


def reference(x, memory, target_mask, source_mask, p):
    def ln(v, a, b):
        mean = v.mean(-1, keepdims=True)
        std = jnp.sqrt(((v - mean) ** 2).sum(-1, keepdims=True) / (v.shape[-1] - 1))
        return a * (v - mean) / (std + LN_EPS) + b

    def mha(q_in, k_in, v_in, mask, wq, bq, wk, bk, wv, bv, wo, bo):
        q = q_in @ wq + bq
        k = k_in @ wk + bk
        v = v_in @ wv + bv
        qh = q.reshape(B, S, H, DK).transpose(0, 2, 1, 3)
        kh = k.reshape(B, S, H, DK).transpose(0, 2, 1, 3)
        vh = v.reshape(B, S, H, DK).transpose(0, 2, 1, 3)
        scores = jnp.einsum("bhqd,bhkd->bhqk", qh, kh * INV_SQRT_DK)
        scores = jnp.where(mask[None] == 0, NEG_INF, scores)
        prob = jax.nn.softmax(scores, axis=-1)
        o = jnp.einsum("bhqk,bhkd->bhqd", prob, vh)
        o = o.transpose(0, 2, 1, 3).reshape(B, S, D)
        return o @ wo + bo

    h = x
    for l in range(NLAYERS):
        att = (p["wq"][l], p["bq"][l], p["wk"][l], p["bk"][l],
               p["wv"][l], p["bv"][l], p["wo"][l], p["bo"][l])
        hn = ln(h, p["ln_a"][3 * l + 0], p["ln_b"][3 * l + 0])
        h = h + mha(hn, hn, hn, target_mask, *att)
        hn = ln(h, p["ln_a"][3 * l + 1], p["ln_b"][3 * l + 1])
        h = h + mha(hn, memory, memory, source_mask, *att)
        hn = ln(h, p["ln_a"][3 * l + 2], p["ln_b"][3 * l + 2])
        h = h + (jnp.maximum(hn @ p["w1"][l] + p["b1"][l], 0.0) @ p["w2"][l] + p["b2"][l])
    return ln(h, p["ln_a"][3 * NLAYERS], p["ln_b"][3 * NLAYERS])


if __name__ == "__main__":
    key = jax.random.PRNGKey(0)
    ks = jax.random.split(key, 16)
    sc = 0.1
    params = {
        "wq": sc * jax.random.normal(ks[0], (NLAYERS, D, D), jnp.float32),
        "bq": sc * jax.random.normal(ks[1], (NLAYERS, 1, D), jnp.float32),
        "wk": sc * jax.random.normal(ks[2], (NLAYERS, D, D), jnp.float32),
        "bk": sc * jax.random.normal(ks[3], (NLAYERS, 1, D), jnp.float32),
        "wv": sc * jax.random.normal(ks[4], (NLAYERS, D, D), jnp.float32),
        "bv": sc * jax.random.normal(ks[5], (NLAYERS, 1, D), jnp.float32),
        "wo": sc * jax.random.normal(ks[6], (NLAYERS, D, D), jnp.float32),
        "bo": sc * jax.random.normal(ks[7], (NLAYERS, 1, D), jnp.float32),
        "w1": sc * jax.random.normal(ks[8], (NLAYERS, D, DFF), jnp.float32),
        "b1": sc * jax.random.normal(ks[9], (NLAYERS, 1, DFF), jnp.float32),
        "w2": sc * jax.random.normal(ks[10], (NLAYERS, DFF, D), jnp.float32),
        "b2": sc * jax.random.normal(ks[11], (NLAYERS, 1, D), jnp.float32),
        # LayerNorm init: a2 = ones, b2 = zeros (3 per layer + final Decoder norm)
        "ln_a": jnp.ones((NUM_NORMS, D), jnp.float32),
        "ln_b": jnp.zeros((NUM_NORMS, D), jnp.float32),
    }
    x = jax.random.normal(ks[12], (B, S, D), jnp.float32)
    memory = jax.random.normal(ks[13], (B, S, D), jnp.float32)
    diag = jnp.eye(S, dtype=jnp.float32)[None]
    target_mask = jnp.maximum(
        jax.random.bernoulli(ks[14], 0.7, (H, S, S)).astype(jnp.float32), diag)
    source_mask = jnp.maximum(
        jax.random.bernoulli(ks[15], 0.7, (H, S, S)).astype(jnp.float32), diag)

    out = decoder_forward(x, memory, target_mask, source_mask, params)
    out = jax.block_until_ready(out)

    ref = reference(x, memory, target_mask, source_mask, params)
    assert out.shape == (B, S, D)
    # Final Decoder.norm with eps=1e6 makes outputs ~1e-6 in magnitude; compare with a
    # relative-dominated tolerance (approx reciprocal is the only intentional deviation).
    assert jnp.allclose(out, ref, atol=1e-7, rtol=1e-2), "mismatch vs JAX reference"
    print("KERNEL_OK")
</pallas_src>

<mosaic_0001>
module attributes {stable_mosaic.version = 11 : i64} {
  func.func @kernel(%arg0: i32, %arg1: memref<16x32xf32, #tpu.memory_space<vmem>>, %arg2: memref<16x32xf32, #tpu.memory_space<vmem>>, %arg3: memref<2x64x64xf32, #tpu.memory_space<vmem>>, %arg4: memref<2x32x256xf32, #tpu.memory_space<vmem>>, %arg5: memref<22x128xf32, #tpu.memory_space<vmem>>, %arg6: memref<16x32xf32, #tpu.memory_space<vmem>>) attributes {dimension_semantics = [#tpu.dimension_semantics<parallel>], iteration_bounds = array<i64: 1>, scalar_prefetch = 0 : i64, scratch_operands = 0 : i64, tpu.core_type = #tpu.core_type<tc>, window_params = [{transform_indices = @transform_0, window_bounds = array<i64: 16, 32>}, {transform_indices = @transform_1, window_bounds = array<i64: 16, 32>}, {pipeline_mode = #tpu.pipeline_mode<synchronous>, transform_indices = @transform_2, window_bounds = array<i64: 2, 64, 64>}, {pipeline_mode = #tpu.pipeline_mode<synchronous>, transform_indices = @transform_3, window_bounds = array<i64: 2, 32, 256>}, {pipeline_mode = #tpu.pipeline_mode<synchronous>, transform_indices = @transform_4, window_bounds = array<i64: 22, 128>}, {transform_indices = @transform_5, window_bounds = array<i64: 16, 32>}]} {
    %c0 = arith.constant 0 : index
    %c0_0 = arith.constant 0 : index
    %0 = vector.load %arg1[%c0, %c0_0] : memref<16x32xf32, #tpu.memory_space<vmem>>, vector<16x32xf32>
    %c0_1 = arith.constant 0 : index
    %c0_2 = arith.constant 0 : index
    %1 = vector.load %arg2[%c0_1, %c0_2] : memref<16x32xf32, #tpu.memory_space<vmem>>, vector<16x32xf32>
    %c8 = arith.constant 8 : index
    %c0_3 = arith.constant 0 : index
    %2 = vector.load %arg5[%c8, %c0_3] : memref<22x128xf32, #tpu.memory_space<vmem>>, vector<1x32xf32>
    %c9 = arith.constant 9 : index
    %c0_4 = arith.constant 0 : index
    %3 = vector.load %arg5[%c9, %c0_4] : memref<22x128xf32, #tpu.memory_space<vmem>>, vector<1x32xf32>
    %cst = arith.constant dense<0.000000e+00> : vector<16xf32>
    %4 = vector.multi_reduction <add>, %0, %cst [1] : vector<16x32xf32> to vector<16xf32>
    %5 = vector.shape_cast %4 : vector<16xf32> to vector<16x1xf32>
    %cst_5 = arith.constant 3.200000e+01 : f32
    %6 = vector.broadcast %cst_5 : f32 to vector<16x1xf32>
    %7 = arith.divf %5, %6 : vector<16x1xf32>
    %8 = vector.broadcast %7 : vector<16x1xf32> to vector<16x32xf32>
    %9 = arith.subf %0, %8 : vector<16x32xf32>
    %10 = arith.mulf %9, %9 : vector<16x32xf32>
    %cst_6 = arith.constant dense<0.000000e+00> : vector<16xf32>
    %11 = vector.multi_reduction <add>, %10, %cst_6 [1] : vector<16x32xf32> to vector<16xf32>
    %12 = vector.shape_cast %11 : vector<16xf32> to vector<16x1xf32>
    %cst_7 = arith.constant 0.0322580636 : f32
    %13 = vector.broadcast %cst_7 : f32 to vector<16x1xf32>
    %14 = arith.mulf %12, %13 : vector<16x1xf32>
    %15 = math.sqrt %14 : vector<16x1xf32>
    %cst_8 = arith.constant 1.000000e+06 : f32
    %16 = vector.broadcast %cst_8 : f32 to vector<16x1xf32>
    %17 = arith.addf %15, %16 : vector<16x1xf32>
    %18 = tpu.reciprocal %17 {approx = true} : vector<16x1xf32> -> vector<16x1xf32>
    %19 = vector.broadcast %7 : vector<16x1xf32> to vector<16x32xf32>
    %20 = arith.subf %0, %19 : vector<16x32xf32>
    %21 = vector.broadcast %2 : vector<1x32xf32> to vector<16x32xf32>
    %22 = arith.mulf %21, %20 : vector<16x32xf32>
    %23 = vector.broadcast %18 : vector<16x1xf32> to vector<16x32xf32>
    %24 = arith.mulf %22, %23 : vector<16x32xf32>
    %25 = vector.broadcast %3 : vector<1x32xf32> to vector<16x32xf32>
    %26 = arith.addf %24, %25 : vector<16x32xf32>
    %c0_9 = arith.constant 0 : index
    %c0_10 = arith.constant 0 : index
    %27 = vector.load %arg5[%c0_9, %c0_10] : memref<22x128xf32, #tpu.memory_space<vmem>>, vector<1x96xf32>
    %c0_11 = arith.constant 0 : index
    %c0_12 = arith.constant 0 : index
    %c0_13 = arith.constant 0 : index
    %28 = vector.load %arg4[%c0_11, %c0_12, %c0_13] : memref<2x32x256xf32, #tpu.memory_space<vmem>>, vector<1x32x96xf32>
    %29 = vector.shape_cast %28 : vector<1x32x96xf32> to vector<32x96xf32>
    %cst_14 = arith.constant dense<0.000000e+00> : vector<16x96xf32>
    %30 = tpu.matmul %26, %29, %cst_14 {dimension_numbers = #tpu.dot_dimension_numbers<[1], [0], [0], [1], [0, 0, 1, 1], [], []>} : vector<16x32xf32>, vector<32x96xf32>, vector<16x96xf32> -> vector<16x96xf32>
    %31 = vector.broadcast %27 : vector<1x96xf32> to vector<16x96xf32>
    %32 = arith.addf %30, %31 : vector<16x96xf32>
    %33 = vector.extract_strided_slice %32 {offsets = [0, 0], sizes = [16, 32], strides = [1, 1]} : vector<16x96xf32> to vector<16x32xf32>
    %34 = vector.extract_strided_slice %32 {offsets = [0, 32], sizes = [16, 32], strides = [1, 1]} : vector<16x96xf32> to vector<16x32xf32>
    %35 = vector.extract_strided_slice %32 {offsets = [0, 64], sizes = [16, 32], strides = [1, 1]} : vector<16x96xf32> to vector<16x32xf32>
    %36 = vector.extract_strided_slice %33 {offsets = [0, 0], sizes = [16, 8], strides = [1, 1]} : vector<16x32xf32> to vector<16x8xf32>
    %37 = vector.extract_strided_slice %33 {offsets = [0, 8], sizes = [16, 8], strides = [1, 1]} : vector<16x32xf32> to vector<16x8xf32>
    %38 = vector.extract_strided_slice %33 {offsets = [0, 16], sizes = [16, 8], strides = [1, 1]} : vector<16x32xf32> to vector<16x8xf32>
    %39 = vector.extract_strided_slice %33 {offsets = [0, 24], sizes = [16, 8], strides = [1, 1]} : vector<16x32xf32> to vector<16x8xf32>
    %40 = tpu.concatenate %36, %37, %38, %39 in 0 : vector<16x8xf32>, vector<16x8xf32>, vector<16x8xf32>, vector<16x8xf32> -> vector<64x8xf32>
    %41 = vector.extract_strided_slice %34 {offsets = [0, 0], sizes = [16, 8], strides = [1, 1]} : vector<16x32xf32> to vector<16x8xf32>
    %42 = vector.extract_strided_slice %34 {offsets = [0, 8], sizes = [16, 8], strides = [1, 1]} : vector<16x32xf32> to vector<16x8xf32>
    %43 = vector.extract_strided_slice %34 {offsets = [0, 16], sizes = [16, 8], strides = [1, 1]} : vector<16x32xf32> to vector<16x8xf32>
    %44 = vector.extract_strided_slice %34 {offsets = [0, 24], sizes = [16, 8], strides = [1, 1]} : vector<16x32xf32> to vector<16x8xf32>
    %45 = tpu.concatenate %41, %42, %43, %44 in 0 : vector<16x8xf32>, vector<16x8xf32>, vector<16x8xf32>, vector<16x8xf32> -> vector<64x8xf32>
    %46 = vector.extract_strided_slice %35 {offsets = [0, 0], sizes = [16, 8], strides = [1, 1]} : vector<16x32xf32> to vector<16x8xf32>
    %47 = vector.extract_strided_slice %35 {offsets = [0, 8], sizes = [16, 8], strides = [1, 1]} : vector<16x32xf32> to vector<16x8xf32>
    %48 = vector.extract_strided_slice %35 {offsets = [0, 16], sizes = [16, 8], strides = [1, 1]} : vector<16x32xf32> to vector<16x8xf32>
    %49 = vector.extract_strided_slice %35 {offsets = [0, 24], sizes = [16, 8], strides = [1, 1]} : vector<16x32xf32> to vector<16x8xf32>
    %50 = tpu.concatenate %46, %47, %48, %49 in 0 : vector<16x8xf32>, vector<16x8xf32>, vector<16x8xf32>, vector<16x8xf32> -> vector<64x8xf32>
    %cst_15 = arith.constant dense<0.000000e+00> : vector<64x64xf32>
    %51 = tpu.matmul %40, %45, %cst_15 {dimension_numbers = #tpu.dot_dimension_numbers<[1], [1], [0], [0], [0, 0, 1, 0], [], []>} : vector<64x8xf32>, vector<64x8xf32>, vector<64x64xf32> -> vector<64x64xf32>
    %c0_16 = arith.constant 0 : index
    %c0_17 = arith.constant 0 : index
    %c0_18 = arith.constant 0 : index
    %52 = vector.load %arg3[%c0_16, %c0_17, %c0_18] : memref<2x64x64xf32, #tpu.memory_space<vmem>>, vector<1x64x64xf32>
    %53 = vector.shape_cast %52 : vector<1x64x64xf32> to vector<64x64xf32>
    %54 = arith.addf %51, %53 : vector<64x64xf32>
    %cst_19 = arith.constant dense<0xFF800000> : vector<64xf32>
    %55 = vector.multi_reduction <maximumf>, %54, %cst_19 [1] : vector<64x64xf32> to vector<64xf32>
    %56 = vector.shape_cast %55 : vector<64xf32> to vector<64x1xf32>
    %57 = vector.broadcast %56 : vector<64x1xf32> to vector<64x64xf32>
    %58 = arith.subf %54, %57 : vector<64x64xf32>
    %59 = math.exp %58 : vector<64x64xf32>
    %cst_20 = arith.constant dense<0.000000e+00> : vector<64xf32>
    %60 = vector.multi_reduction <add>, %59, %cst_20 [1] : vector<64x64xf32> to vector<64xf32>
    %61 = vector.shape_cast %60 : vector<64xf32> to vector<64x1xf32>
    %62 = tpu.reciprocal %61 {approx = true} : vector<64x1xf32> -> vector<64x1xf32>
    %63 = vector.broadcast %62 : vector<64x1xf32> to vector<64x64xf32>
    %64 = arith.mulf %59, %63 : vector<64x64xf32>
    %cst_21 = arith.constant dense<0.000000e+00> : vector<64x8xf32>
    %65 = tpu.matmul %64, %50, %cst_21 {dimension_numbers = #tpu.dot_dimension_numbers<[1], [0], [0], [1], [0, 0, 1, 1], [], []>} : vector<64x64xf32>, vector<64x8xf32>, vector<64x8xf32> -> vector<64x8xf32>
    %66 = vector.extract_strided_slice %65 {offsets = [0, 0], sizes = [16, 8], strides = [1, 1]} : vector<64x8xf32> to vector<16x8xf32>
    %67 = vector.extract_strided_slice %65 {offsets = [16, 0], sizes = [16, 8], strides = [1, 1]} : vector<64x8xf32> to vector<16x8xf32>
    %68 = vector.extract_strided_slice %65 {offsets = [32, 0], sizes = [16, 8], strides = [1, 1]} : vector<64x8xf32> to vector<16x8xf32>
    %69 = vector.extract_strided_slice %65 {offsets = [48, 0], sizes = [16, 8], strides = [1, 1]} : vector<64x8xf32> to vector<16x8xf32>
    %70 = tpu.concatenate %66, %67, %68, %69 in 1 : vector<16x8xf32>, vector<16x8xf32>, vector<16x8xf32>, vector<16x8xf32> -> vector<16x32xf32>
    %c0_22 = arith.constant 0 : index
    %c0_23 = arith.constant 0 : index
    %c96 = arith.constant 96 : index
    %71 = vector.load %arg4[%c0_22, %c0_23, %c96] : memref<2x32x256xf32, #tpu.memory_space<vmem>>, vector<1x32x32xf32>
    %72 = vector.shape_cast %71 : vector<1x32x32xf32> to vector<32x32xf32>
    %cst_24 = arith.constant dense<0.000000e+00> : vector<16x32xf32>
    %73 = tpu.matmul %70, %72, %cst_24 {dimension_numbers = #tpu.dot_dimension_numbers<[1], [0], [0], [1], [0, 0, 1, 1], [], []>} : vector<16x32xf32>, vector<32x32xf32>, vector<16x32xf32> -> vector<16x32xf32>
    %c2 = arith.constant 2 : index
    %c0_25 = arith.constant 0 : index
    %74 = vector.load %arg5[%c2, %c0_25] : memref<22x128xf32, #tpu.memory_space<vmem>>, vector<1x32xf32>
    %75 = vector.broadcast %74 : vector<1x32xf32> to vector<16x32xf32>
    %76 = arith.addf %73, %75 : vector<16x32xf32>
    %77 = arith.addf %0, %76 : vector<16x32xf32>
    %c10 = arith.constant 10 : index
    %c0_26 = arith.constant 0 : index
    %78 = vector.load %arg5[%c10, %c0_26] : memref<22x128xf32, #tpu.memory_space<vmem>>, vector<1x32xf32>
    %c11 = arith.constant 11 : index
    %c0_27 = arith.constant 0 : index
    %79 = vector.load %arg5[%c11, %c0_27] : memref<22x128xf32, #tpu.memory_space<vmem>>, vector<1x32xf32>
    %cst_28 = arith.constant dense<0.000000e+00> : vector<16xf32>
    %80 = vector.multi_reduction <add>, %77, %cst_28 [1] : vector<16x32xf32> to vector<16xf32>
    %81 = vector.shape_cast %80 : vector<16xf32> to vector<16x1xf32>
    %cst_29 = arith.constant 3.200000e+01 : f32
    %82 = vector.broadcast %cst_29 : f32 to vector<16x1xf32>
    %83 = arith.divf %81, %82 : vector<16x1xf32>
    %84 = vector.broadcast %83 : vector<16x1xf32> to vector<16x32xf32>
    %85 = arith.subf %77, %84 : vector<16x32xf32>
    %86 = arith.mulf %85, %85 : vector<16x32xf32>
    %cst_30 = arith.constant dense<0.000000e+00> : vector<16xf32>
    %87 = vector.multi_reduction <add>, %86, %cst_30 [1] : vector<16x32xf32> to vector<16xf32>
    %88 = vector.shape_cast %87 : vector<16xf32> to vector<16x1xf32>
    %cst_31 = arith.constant 0.0322580636 : f32
    %89 = vector.broadcast %cst_31 : f32 to vector<16x1xf32>
    %90 = arith.mulf %88, %89 : vector<16x1xf32>
    %91 = math.sqrt %90 : vector<16x1xf32>
    %cst_32 = arith.constant 1.000000e+06 : f32
    %92 = vector.broadcast %cst_32 : f32 to vector<16x1xf32>
    %93 = arith.addf %91, %92 : vector<16x1xf32>
    %94 = tpu.reciprocal %93 {approx = true} : vector<16x1xf32> -> vector<16x1xf32>
    %95 = vector.broadcast %83 : vector<16x1xf32> to vector<16x32xf32>
    %96 = arith.subf %77, %95 : vector<16x32xf32>
    %97 = vector.broadcast %78 : vector<1x32xf32> to vector<16x32xf32>
    %98 = arith.mulf %97, %96 : vector<16x32xf32>
    %99 = vector.broadcast %94 : vector<16x1xf32> to vector<16x32xf32>
    %100 = arith.mulf %98, %99 : vector<16x32xf32>
    %101 = vector.broadcast %79 : vector<1x32xf32> to vector<16x32xf32>
    %102 = arith.addf %100, %101 : vector<16x32xf32>
    %c0_33 = arith.constant 0 : index
    %c0_34 = arith.constant 0 : index
    %103 = vector.load %arg5[%c0_33, %c0_34] : memref<22x128xf32, #tpu.memory_space<vmem>>, vector<1x96xf32>
    %c0_35 = arith.constant 0 : index
    %c0_36 = arith.constant 0 : index
    %c0_37 = arith.constant 0 : index
    %104 = vector.load %arg4[%c0_35, %c0_36, %c0_37] : memref<2x32x256xf32, #tpu.memory_space<vmem>>, vector<1x32x32xf32>
    %105 = vector.shape_cast %104 : vector<1x32x32xf32> to vector<32x32xf32>
    %cst_38 = arith.constant dense<0.000000e+00> : vector<16x32xf32>
    %106 = tpu.matmul %102, %105, %cst_38 {dimension_numbers = #tpu.dot_dimension_numbers<[1], [0], [0], [1], [0, 0, 1, 1], [], []>} : vector<16x32xf32>, vector<32x32xf32>, vector<16x32xf32> -> vector<16x32xf32>
    %107 = vector.extract_strided_slice %103 {offsets = [0, 0], sizes = [1, 32], strides = [1, 1]} : vector<1x96xf32> to vector<1x32xf32>
    %108 = vector.broadcast %107 : vector<1x32xf32> to vector<16x32xf32>
    %109 = arith.addf %106, %108 : vector<16x32xf32>
    %c0_39 = arith.constant 0 : index
    %c0_40 = arith.constant 0 : index
    %c32 = arith.constant 32 : index
    %110 = vector.load %arg4[%c0_39, %c0_40, %c32] : memref<2x32x256xf32, #tpu.memory_space<vmem>>, vector<1x32x64xf32>
    %111 = vector.shape_cast %110 : vector<1x32x64xf32> to vector<32x64xf32>
    %cst_41 = arith.constant dense<0.000000e+00> : vector<16x64xf32>
    %112 = tpu.matmul %1, %111, %cst_41 {dimension_numbers = #tpu.dot_dimension_numbers<[1], [0], [0], [1], [0, 0, 1, 1], [], []>} : vector<16x32xf32>, vector<32x64xf32>, vector<16x64xf32> -> vector<16x64xf32>
    %113 = vector.extract_strided_slice %103 {offsets = [0, 32], sizes = [1, 64], strides = [1, 1]} : vector<1x96xf32> to vector<1x64xf32>
    %114 = vector.broadcast %113 : vector<1x64xf32> to vector<16x64xf32>
    %115 = arith.addf %112, %114 : vector<16x64xf32>
    %116 = vector.extract_strided_slice %115 {offsets = [0, 0], sizes = [16, 32], strides = [1, 1]} : vector<16x64xf32> to vector<16x32xf32>
    %117 = vector.extract_strided_slice %115 {offsets = [0, 32], sizes = [16, 32], strides = [1, 1]} : vector<16x64xf32> to vector<16x32xf32>
    %118 = vector.extract_strided_slice %109 {offsets = [0, 0], sizes = [16, 8], strides = [1, 1]} : vector<16x32xf32> to vector<16x8xf32>
    %119 = vector.extract_strided_slice %109 {offsets = [0, 8], sizes = [16, 8], strides = [1, 1]} : vector<16x32xf32> to vector<16x8xf32>
    %120 = vector.extract_strided_slice %109 {offsets = [0, 16], sizes = [16, 8], strides = [1, 1]} : vector<16x32xf32> to vector<16x8xf32>
    %121 = vector.extract_strided_slice %109 {offsets = [0, 24], sizes = [16, 8], strides = [1, 1]} : vector<16x32xf32> to vector<16x8xf32>
    %122 = tpu.concatenate %118, %119, %120, %121 in 0 : vector<16x8xf32>, vector<16x8xf32>, vector<16x8xf32>, vector<16x8xf32> -> vector<64x8xf32>
    %123 = vector.extract_strided_slice %116 {offsets = [0, 0], sizes = [16, 8], strides = [1, 1]} : vector<16x32xf32> to vector<16x8xf32>
    %124 = vector.extract_strided_slice %116 {offsets = [0, 8], sizes = [16, 8], strides = [1, 1]} : vector<16x32xf32> to vector<16x8xf32>
    %125 = vector.extract_strided_slice %116 {offsets = [0, 16], sizes = [16, 8], strides = [1, 1]} : vector<16x32xf32> to vector<16x8xf32>
    %126 = vector.extract_strided_slice %116 {offsets = [0, 24], sizes = [16, 8], strides = [1, 1]} : vector<16x32xf32> to vector<16x8xf32>
    %127 = tpu.concatenate %123, %124, %125, %126 in 0 : vector<16x8xf32>, vector<16x8xf32>, vector<16x8xf32>, vector<16x8xf32> -> vector<64x8xf32>
    %128 = vector.extract_strided_slice %117 {offsets = [0, 0], sizes = [16, 8], strides = [1, 1]} : vector<16x32xf32> to vector<16x8xf32>
    %129 = vector.extract_strided_slice %117 {offsets = [0, 8], sizes = [16, 8], strides = [1, 1]} : vector<16x32xf32> to vector<16x8xf32>
    %130 = vector.extract_strided_slice %117 {offsets = [0, 16], sizes = [16, 8], strides = [1, 1]} : vector<16x32xf32> to vector<16x8xf32>
    %131 = vector.extract_strided_slice %117 {offsets = [0, 24], sizes = [16, 8], strides = [1, 1]} : vector<16x32xf32> to vector<16x8xf32>
    %132 = tpu.concatenate %128, %129, %130, %131 in 0 : vector<16x8xf32>, vector<16x8xf32>, vector<16x8xf32>, vector<16x8xf32> -> vector<64x8xf32>
    %cst_42 = arith.constant dense<0.000000e+00> : vector<64x64xf32>
    %133 = tpu.matmul %122, %127, %cst_42 {dimension_numbers = #tpu.dot_dimension_numbers<[1], [1], [0], [0], [0, 0, 1, 0], [], []>} : vector<64x8xf32>, vector<64x8xf32>, vector<64x64xf32> -> vector<64x64xf32>
    %c1 = arith.constant 1 : index
    %c0_43 = arith.constant 0 : index
    %c0_44 = arith.constant 0 : index
    %134 = vector.load %arg3[%c1, %c0_43, %c0_44] : memref<2x64x64xf32, #tpu.memory_space<vmem>>, vector<1x64x64xf32>
    %135 = vector.shape_cast %134 : vector<1x64x64xf32> to vector<64x64xf32>
    %136 = arith.addf %133, %135 : vector<64x64xf32>
    %cst_45 = arith.constant dense<0xFF800000> : vector<64xf32>
    %137 = vector.multi_reduction <maximumf>, %136, %cst_45 [1] : vector<64x64xf32> to vector<64xf32>
    %138 = vector.shape_cast %137 : vector<64xf32> to vector<64x1xf32>
    %139 = vector.broadcast %138 : vector<64x1xf32> to vector<64x64xf32>
    %140 = arith.subf %136, %139 : vector<64x64xf32>
    %141 = math.exp %140 : vector<64x64xf32>
    %cst_46 = arith.constant dense<0.000000e+00> : vector<64xf32>
    %142 = vector.multi_reduction <add>, %141, %cst_46 [1] : vector<64x64xf32> to vector<64xf32>
    %143 = vector.shape_cast %142 : vector<64xf32> to vector<64x1xf32>
    %144 = tpu.reciprocal %143 {approx = true} : vector<64x1xf32> -> vector<64x1xf32>
    %145 = vector.broadcast %144 : vector<64x1xf32> to vector<64x64xf32>
    %146 = arith.mulf %141, %145 : vector<64x64xf32>
    %cst_47 = arith.constant dense<0.000000e+00> : vector<64x8xf32>
    %147 = tpu.matmul %146, %132, %cst_47 {dimension_numbers = #tpu.dot_dimension_numbers<[1], [0], [0], [1], [0, 0, 1, 1], [], []>} : vector<64x64xf32>, vector<64x8xf32>, vector<64x8xf32> -> vector<64x8xf32>
    %148 = vector.extract_strided_slice %147 {offsets = [0, 0], sizes = [16, 8], strides = [1, 1]} : vector<64x8xf32> to vector<16x8xf32>
    %149 = vector.extract_strided_slice %147 {offsets = [16, 0], sizes = [16, 8], strides = [1, 1]} : vector<64x8xf32> to vector<16x8xf32>
    %150 = vector.extract_strided_slice %147 {offsets = [32, 0], sizes = [16, 8], strides = [1, 1]} : vector<64x8xf32> to vector<16x8xf32>
    %151 = vector.extract_strided_slice %147 {offsets = [48, 0], sizes = [16, 8], strides = [1, 1]} : vector<64x8xf32> to vector<16x8xf32>
    %152 = tpu.concatenate %148, %149, %150, %151 in 1 : vector<16x8xf32>, vector<16x8xf32>, vector<16x8xf32>, vector<16x8xf32> -> vector<16x32xf32>
    %c0_48 = arith.constant 0 : index
    %c0_49 = arith.constant 0 : index
    %c96_50 = arith.constant 96 : index
    %153 = vector.load %arg4[%c0_48, %c0_49, %c96_50] : memref<2x32x256xf32, #tpu.memory_space<vmem>>, vector<1x32x32xf32>
    %154 = vector.shape_cast %153 : vector<1x32x32xf32> to vector<32x32xf32>
    %cst_51 = arith.constant dense<0.000000e+00> : vector<16x32xf32>
    %155 = tpu.matmul %152, %154, %cst_51 {dimension_numbers = #tpu.dot_dimension_numbers<[1], [0], [0], [1], [0, 0, 1, 1], [], []>} : vector<16x32xf32>, vector<32x32xf32>, vector<16x32xf32> -> vector<16x32xf32>
    %c2_52 = arith.constant 2 : index
    %c0_53 = arith.constant 0 : index
    %156 = vector.load %arg5[%c2_52, %c0_53] : memref<22x128xf32, #tpu.memory_space<vmem>>, vector<1x32xf32>
    %157 = vector.broadcast %156 : vector<1x32xf32> to vector<16x32xf32>
    %158 = arith.addf %155, %157 : vector<16x32xf32>
    %159 = arith.addf %77, %158 : vector<16x32xf32>
    %c12 = arith.constant 12 : index
    %c0_54 = arith.constant 0 : index
    %160 = vector.load %arg5[%c12, %c0_54] : memref<22x128xf32, #tpu.memory_space<vmem>>, vector<1x32xf32>
    %c13 = arith.constant 13 : index
    %c0_55 = arith.constant 0 : index
    %161 = vector.load %arg5[%c13, %c0_55] : memref<22x128xf32, #tpu.memory_space<vmem>>, vector<1x32xf32>
    %cst_56 = arith.constant dense<0.000000e+00> : vector<16xf32>
    %162 = vector.multi_reduction <add>, %159, %cst_56 [1] : vector<16x32xf32> to vector<16xf32>
    %163 = vector.shape_cast %162 : vector<16xf32> to vector<16x1xf32>
    %cst_57 = arith.constant 3.200000e+01 : f32
    %164 = vector.broadcast %cst_57 : f32 to vector<16x1xf32>
    %165 = arith.divf %163, %164 : vector<16x1xf32>
    %166 = vector.broadcast %165 : vector<16x1xf32> to vector<16x32xf32>
    %167 = arith.subf %159, %166 : vector<16x32xf32>
    %168 = arith.mulf %167, %167 : vector<16x32xf32>
    %cst_58 = arith.constant dense<0.000000e+00> : vector<16xf32>
    %169 = vector.multi_reduction <add>, %168, %cst_58 [1] : vector<16x32xf32> to vector<16xf32>
    %170 = vector.shape_cast %169 : vector<16xf32> to vector<16x1xf32>
    %cst_59 = arith.constant 0.0322580636 : f32
    %171 = vector.broadcast %cst_59 : f32 to vector<16x1xf32>
    %172 = arith.mulf %170, %171 : vector<16x1xf32>
    %173 = math.sqrt %172 : vector<16x1xf32>
    %cst_60 = arith.constant 1.000000e+06 : f32
    %174 = vector.broadcast %cst_60 : f32 to vector<16x1xf32>
    %175 = arith.addf %173, %174 : vector<16x1xf32>
    %176 = tpu.reciprocal %175 {approx = true} : vector<16x1xf32> -> vector<16x1xf32>
    %177 = vector.broadcast %165 : vector<16x1xf32> to vector<16x32xf32>
    %178 = arith.subf %159, %177 : vector<16x32xf32>
    %179 = vector.broadcast %160 : vector<1x32xf32> to vector<16x32xf32>
    %180 = arith.mulf %179, %178 : vector<16x32xf32>
    %181 = vector.broadcast %176 : vector<16x1xf32> to vector<16x32xf32>
    %182 = arith.mulf %180, %181 : vector<16x32xf32>
    %183 = vector.broadcast %161 : vector<1x32xf32> to vector<16x32xf32>
    %184 = arith.addf %182, %183 : vector<16x32xf32>
    %c0_61 = arith.constant 0 : index
    %c0_62 = arith.constant 0 : index
    %c128 = arith.constant 128 : index
    %185 = vector.load %arg4[%c0_61, %c0_62, %c128] : memref<2x32x256xf32, #tpu.memory_space<vmem>>, vector<1x32x64xf32>
    %186 = vector.shape_cast %185 : vector<1x32x64xf32> to vector<32x64xf32>
    %cst_63 = arith.constant dense<0.000000e+00> : vector<16x64xf32>
    %187 = tpu.matmul %184, %186, %cst_63 {dimension_numbers = #tpu.dot_dimension_numbers<[1], [0], [0], [1], [0, 0, 1, 1], [], []>} : vector<16x32xf32>, vector<32x64xf32>, vector<16x64xf32> -> vector<16x64xf32>
    %c1_64 = arith.constant 1 : index
    %c0_65 = arith.constant 0 : index
    %188 = vector.load %arg5[%c1_64, %c0_65] : memref<22x128xf32, #tpu.memory_space<vmem>>, vector<1x64xf32>
    %189 = vector.broadcast %188 : vector<1x64xf32> to vector<16x64xf32>
    %190 = arith.addf %187, %189 : vector<16x64xf32>
    %cst_66 = arith.constant 0.000000e+00 : f32
    %191 = vector.broadcast %cst_66 : f32 to vector<16x64xf32>
    %192 = arith.maximumf %190, %191 : vector<16x64xf32>
    %c0_67 = arith.constant 0 : index
    %c0_68 = arith.constant 0 : index
    %c192 = arith.constant 192 : index
    %193 = vector.load %arg4[%c0_67, %c0_68, %c192] : memref<2x32x256xf32, #tpu.memory_space<vmem>>, vector<1x32x64xf32>
    %194 = vector.shape_cast %193 : vector<1x32x64xf32> to vector<32x64xf32>
    %cst_69 = arith.constant dense<0.000000e+00> : vector<16x32xf32>
    %195 = tpu.matmul %192, %194, %cst_69 {dimension_numbers = #tpu.dot_dimension_numbers<[1], [1], [0], [0], [0, 0, 1, 0], [], []>} : vector<16x64xf32>, vector<32x64xf32>, vector<16x32xf32> -> vector<16x32xf32>
    %c3 = arith.constant 3 : index
    %c0_70 = arith.constant 0 : index
    %196 = vector.load %arg5[%c3, %c0_70] : memref<22x128xf32, #tpu.memory_space<vmem>>, vector<1x32xf32>
    %197 = vector.broadcast %196 : vector<1x32xf32> to vector<16x32xf32>
    %198 = arith.addf %195, %197 : vector<16x32xf32>
    %199 = arith.addf %159, %198 : vector<16x32xf32>
    %c14 = arith.constant 14 : index
    %c0_71 = arith.constant 0 : index
    %200 = vector.load %arg5[%c14, %c0_71] : memref<22x128xf32, #tpu.memory_space<vmem>>, vector<1x32xf32>
    %c15 = arith.constant 15 : index
    %c0_72 = arith.constant 0 : index
    %201 = vector.load %arg5[%c15, %c0_72] : memref<22x128xf32, #tpu.memory_space<vmem>>, vector<1x32xf32>
    %cst_73 = arith.constant dense<0.000000e+00> : vector<16xf32>
    %202 = vector.multi_reduction <add>, %199, %cst_73 [1] : vector<16x32xf32> to vector<16xf32>
    %203 = vector.shape_cast %202 : vector<16xf32> to vector<16x1xf32>
    %cst_74 = arith.constant 3.200000e+01 : f32
    %204 = vector.broadcast %cst_74 : f32 to vector<16x1xf32>
    %205 = arith.divf %203, %204 : vector<16x1xf32>
    %206 = vector.broadcast %205 : vector<16x1xf32> to vector<16x32xf32>
    %207 = arith.subf %199, %206 : vector<16x32xf32>
    %208 = arith.mulf %207, %207 : vector<16x32xf32>
    %cst_75 = arith.constant dense<0.000000e+00> : vector<16xf32>
    %209 = vector.multi_reduction <add>, %208, %cst_75 [1] : vector<16x32xf32> to vector<16xf32>
    %210 = vector.shape_cast %209 : vector<16xf32> to vector<16x1xf32>
    %cst_76 = arith.constant 0.0322580636 : f32
    %211 = vector.broadcast %cst_76 : f32 to vector<16x1xf32>
    %212 = arith.mulf %210, %211 : vector<16x1xf32>
    %213 = math.sqrt %212 : vector<16x1xf32>
    %cst_77 = arith.constant 1.000000e+06 : f32
    %214 = vector.broadcast %cst_77 : f32 to vector<16x1xf32>
    %215 = arith.addf %213, %214 : vector<16x1xf32>
    %216 = tpu.reciprocal %215 {approx = true} : vector<16x1xf32> -> vector<16x1xf32>
    %217 = vector.broadcast %205 : vector<16x1xf32> to vector<16x32xf32>
    %218 = arith.subf %199, %217 : vector<16x32xf32>
    %219 = vector.broadcast %200 : vector<1x32xf32> to vector<16x32xf32>
    %220 = arith.mulf %219, %218 : vector<16x32xf32>
    %221 = vector.broadcast %216 : vector<16x1xf32> to vector<16x32xf32>
    %222 = arith.mulf %220, %221 : vector<16x32xf32>
    %223 = vector.broadcast %201 : vector<1x32xf32> to vector<16x32xf32>
    %224 = arith.addf %222, %223 : vector<16x32xf32>
    %c4 = arith.constant 4 : index
    %c0_78 = arith.constant 0 : index
    %225 = vector.load %arg5[%c4, %c0_78] : memref<22x128xf32, #tpu.memory_space<vmem>>, vector<1x96xf32>
    %c1_79 = arith.constant 1 : index
    %c0_80 = arith.constant 0 : index
    %c0_81 = arith.constant 0 : index
    %226 = vector.load %arg4[%c1_79, %c0_80, %c0_81] : memref<2x32x256xf32, #tpu.memory_space<vmem>>, vector<1x32x96xf32>
    %227 = vector.shape_cast %226 : vector<1x32x96xf32> to vector<32x96xf32>
    %cst_82 = arith.constant dense<0.000000e+00> : vector<16x96xf32>
    %228 = tpu.matmul %224, %227, %cst_82 {dimension_numbers = #tpu.dot_dimension_numbers<[1], [0], [0], [1], [0, 0, 1, 1], [], []>} : vector<16x32xf32>, vector<32x96xf32>, vector<16x96xf32> -> vector<16x96xf32>
    %229 = vector.broadcast %225 : vector<1x96xf32> to vector<16x96xf32>
    %230 = arith.addf %228, %229 : vector<16x96xf32>
    %231 = vector.extract_strided_slice %230 {offsets = [0, 0], sizes = [16, 32], strides = [1, 1]} : vector<16x96xf32> to vector<16x32xf32>
    %232 = vector.extract_strided_slice %230 {offsets = [0, 32], sizes = [16, 32], strides = [1, 1]} : vector<16x96xf32> to vector<16x32xf32>
    %233 = vector.extract_strided_slice %230 {offsets = [0, 64], sizes = [16, 32], strides = [1, 1]} : vector<16x96xf32> to vector<16x32xf32>
    %234 = vector.extract_strided_slice %231 {offsets = [0, 0], sizes = [16, 8], strides = [1, 1]} : vector<16x32xf32> to vector<16x8xf32>
    %235 = vector.extract_strided_slice %231 {offsets = [0, 8], sizes = [16, 8], strides = [1, 1]} : vector<16x32xf32> to vector<16x8xf32>
    %236 = vector.extract_strided_slice %231 {offsets = [0, 16], sizes = [16, 8], strides = [1, 1]} : vector<16x32xf32> to vector<16x8xf32>
    %237 = vector.extract_strided_slice %231 {offsets = [0, 24], sizes = [16, 8], strides = [1, 1]} : vector<16x32xf32> to vector<16x8xf32>
    %238 = tpu.concatenate %234, %235, %236, %237 in 0 : vector<16x8xf32>, vector<16x8xf32>, vector<16x8xf32>, vector<16x8xf32> -> vector<64x8xf32>
    %239 = vector.extract_strided_slice %232 {offsets = [0, 0], sizes = [16, 8], strides = [1, 1]} : vector<16x32xf32> to vector<16x8xf32>
    %240 = vector.extract_strided_slice %232 {offsets = [0, 8], sizes = [16, 8], strides = [1, 1]} : vector<16x32xf32> to vector<16x8xf32>
    %241 = vector.extract_strided_slice %232 {offsets = [0, 16], sizes = [16, 8], strides = [1, 1]} : vector<16x32xf32> to vector<16x8xf32>
    %242 = vector.extract_strided_slice %232 {offsets = [0, 24], sizes = [16, 8], strides = [1, 1]} : vector<16x32xf32> to vector<16x8xf32>
    %243 = tpu.concatenate %239, %240, %241, %242 in 0 : vector<16x8xf32>, vector<16x8xf32>, vector<16x8xf32>, vector<16x8xf32> -> vector<64x8xf32>
    %244 = vector.extract_strided_slice %233 {offsets = [0, 0], sizes = [16, 8], strides = [1, 1]} : vector<16x32xf32> to vector<16x8xf32>
    %245 = vector.extract_strided_slice %233 {offsets = [0, 8], sizes = [16, 8], strides = [1, 1]} : vector<16x32xf32> to vector<16x8xf32>
    %246 = vector.extract_strided_slice %233 {offsets = [0, 16], sizes = [16, 8], strides = [1, 1]} : vector<16x32xf32> to vector<16x8xf32>
    %247 = vector.extract_strided_slice %233 {offsets = [0, 24], sizes = [16, 8], strides = [1, 1]} : vector<16x32xf32> to vector<16x8xf32>
    %248 = tpu.concatenate %244, %245, %246, %247 in 0 : vector<16x8xf32>, vector<16x8xf32>, vector<16x8xf32>, vector<16x8xf32> -> vector<64x8xf32>
    %cst_83 = arith.constant dense<0.000000e+00> : vector<64x64xf32>
    %249 = tpu.matmul %238, %243, %cst_83 {dimension_numbers = #tpu.dot_dimension_numbers<[1], [1], [0], [0], [0, 0, 1, 0], [], []>} : vector<64x8xf32>, vector<64x8xf32>, vector<64x64xf32> -> vector<64x64xf32>
    %c0_84 = arith.constant 0 : index
    %c0_85 = arith.constant 0 : index
    %c0_86 = arith.constant 0 : index
    %250 = vector.load %arg3[%c0_84, %c0_85, %c0_86] : memref<2x64x64xf32, #tpu.memory_space<vmem>>, vector<1x64x64xf32>
    %251 = vector.shape_cast %250 : vector<1x64x64xf32> to vector<64x64xf32>
    %252 = arith.addf %249, %251 : vector<64x64xf32>
    %cst_87 = arith.constant dense<0xFF800000> : vector<64xf32>
    %253 = vector.multi_reduction <maximumf>, %252, %cst_87 [1] : vector<64x64xf32> to vector<64xf32>
    %254 = vector.shape_cast %253 : vector<64xf32> to vector<64x1xf32>
    %255 = vector.broadcast %254 : vector<64x1xf32> to vector<64x64xf32>
    %256 = arith.subf %252, %255 : vector<64x64xf32>
    %257 = math.exp %256 : vector<64x64xf32>
    %cst_88 = arith.constant dense<0.000000e+00> : vector<64xf32>
    %258 = vector.multi_reduction <add>, %257, %cst_88 [1] : vector<64x64xf32> to vector<64xf32>
    %259 = vector.shape_cast %258 : vector<64xf32> to vector<64x1xf32>
    %260 = tpu.reciprocal %259 {approx = true} : vector<64x1xf32> -> vector<64x1xf32>
    %261 = vector.broadcast %260 : vector<64x1xf32> to vector<64x64xf32>
    %262 = arith.mulf %257, %261 : vector<64x64xf32>
    %cst_89 = arith.constant dense<0.000000e+00> : vector<64x8xf32>
    %263 = tpu.matmul %262, %248, %cst_89 {dimension_numbers = #tpu.dot_dimension_numbers<[1], [0], [0], [1], [0, 0, 1, 1], [], []>} : vector<64x64xf32>, vector<64x8xf32>, vector<64x8xf32> -> vector<64x8xf32>
    %264 = vector.extract_strided_slice %263 {offsets = [0, 0], sizes = [16, 8], strides = [1, 1]} : vector<64x8xf32> to vector<16x8xf32>
    %265 = vector.extract_strided_slice %263 {offsets = [16, 0], sizes = [16, 8], strides = [1, 1]} : vector<64x8xf32> to vector<16x8xf32>
    %266 = vector.extract_strided_slice %263 {offsets = [32, 0], sizes = [16, 8], strides = [1, 1]} : vector<64x8xf32> to vector<16x8xf32>
    %267 = vector.extract_strided_slice %263 {offsets = [48, 0], sizes = [16, 8], strides = [1, 1]} : vector<64x8xf32> to vector<16x8xf32>
    %268 = tpu.concatenate %264, %265, %266, %267 in 1 : vector<16x8xf32>, vector<16x8xf32>, vector<16x8xf32>, vector<16x8xf32> -> vector<16x32xf32>
    %c1_90 = arith.constant 1 : index
    %c0_91 = arith.constant 0 : index
    %c96_92 = arith.constant 96 : index
    %269 = vector.load %arg4[%c1_90, %c0_91, %c96_92] : memref<2x32x256xf32, #tpu.memory_space<vmem>>, vector<1x32x32xf32>
    %270 = vector.shape_cast %269 : vector<1x32x32xf32> to vector<32x32xf32>
    %cst_93 = arith.constant dense<0.000000e+00> : vector<16x32xf32>
    %271 = tpu.matmul %268, %270, %cst_93 {dimension_numbers = #tpu.dot_dimension_numbers<[1], [0], [0], [1], [0, 0, 1, 1], [], []>} : vector<16x32xf32>, vector<32x32xf32>, vector<16x32xf32> -> vector<16x32xf32>
    %c6 = arith.constant 6 : index
    %c0_94 = arith.constant 0 : index
    %272 = vector.load %arg5[%c6, %c0_94] : memref<22x128xf32, #tpu.memory_space<vmem>>, vector<1x32xf32>
    %273 = vector.broadcast %272 : vector<1x32xf32> to vector<16x32xf32>
    %274 = arith.addf %271, %273 : vector<16x32xf32>
    %275 = arith.addf %199, %274 : vector<16x32xf32>
    %c16 = arith.constant 16 : index
    %c0_95 = arith.constant 0 : index
    %276 = vector.load %arg5[%c16, %c0_95] : memref<22x128xf32, #tpu.memory_space<vmem>>, vector<1x32xf32>
    %c17 = arith.constant 17 : index
    %c0_96 = arith.constant 0 : index
    %277 = vector.load %arg5[%c17, %c0_96] : memref<22x128xf32, #tpu.memory_space<vmem>>, vector<1x32xf32>
    %cst_97 = arith.constant dense<0.000000e+00> : vector<16xf32>
    %278 = vector.multi_reduction <add>, %275, %cst_97 [1] : vector<16x32xf32> to vector<16xf32>
    %279 = vector.shape_cast %278 : vector<16xf32> to vector<16x1xf32>
    %cst_98 = arith.constant 3.200000e+01 : f32
    %280 = vector.broadcast %cst_98 : f32 to vector<16x1xf32>
    %281 = arith.divf %279, %280 : vector<16x1xf32>
    %282 = vector.broadcast %281 : vector<16x1xf32> to vector<16x32xf32>
    %283 = arith.subf %275, %282 : vector<16x32xf32>
    %284 = arith.mulf %283, %283 : vector<16x32xf32>
    %cst_99 = arith.constant dense<0.000000e+00> : vector<16xf32>
    %285 = vector.multi_reduction <add>, %284, %cst_99 [1] : vector<16x32xf32> to vector<16xf32>
    %286 = vector.shape_cast %285 : vector<16xf32> to vector<16x1xf32>
    %cst_100 = arith.constant 0.0322580636 : f32
    %287 = vector.broadcast %cst_100 : f32 to vector<16x1xf32>
    %288 = arith.mulf %286, %287 : vector<16x1xf32>
    %289 = math.sqrt %288 : vector<16x1xf32>
    %cst_101 = arith.constant 1.000000e+06 : f32
    %290 = vector.broadcast %cst_101 : f32 to vector<16x1xf32>
    %291 = arith.addf %289, %290 : vector<16x1xf32>
    %292 = tpu.reciprocal %291 {approx = true} : vector<16x1xf32> -> vector<16x1xf32>
    %293 = vector.broadcast %281 : vector<16x1xf32> to vector<16x32xf32>
    %294 = arith.subf %275, %293 : vector<16x32xf32>
    %295 = vector.broadcast %276 : vector<1x32xf32> to vector<16x32xf32>
    %296 = arith.mulf %295, %294 : vector<16x32xf32>
    %297 = vector.broadcast %292 : vector<16x1xf32> to vector<16x32xf32>
    %298 = arith.mulf %296, %297 : vector<16x32xf32>
    %299 = vector.broadcast %277 : vector<1x32xf32> to vector<16x32xf32>
    %300 = arith.addf %298, %299 : vector<16x32xf32>
    %c4_102 = arith.constant 4 : index
    %c0_103 = arith.constant 0 : index
    %301 = vector.load %arg5[%c4_102, %c0_103] : memref<22x128xf32, #tpu.memory_space<vmem>>, vector<1x96xf32>
    %c1_104 = arith.constant 1 : index
    %c0_105 = arith.constant 0 : index
    %c0_106 = arith.constant 0 : index
    %302 = vector.load %arg4[%c1_104, %c0_105, %c0_106] : memref<2x32x256xf32, #tpu.memory_space<vmem>>, vector<1x32x32xf32>
    %303 = vector.shape_cast %302 : vector<1x32x32xf32> to vector<32x32xf32>
    %cst_107 = arith.constant dense<0.000000e+00> : vector<16x32xf32>
    %304 = tpu.matmul %300, %303, %cst_107 {dimension_numbers = #tpu.dot_dimension_numbers<[1], [0], [0], [1], [0, 0, 1, 1], [], []>} : vector<16x32xf32>, vector<32x32xf32>, vector<16x32xf32> -> vector<16x32xf32>
    %305 = vector.extract_strided_slice %301 {offsets = [0, 0], sizes = [1, 32], strides = [1, 1]} : vector<1x96xf32> to vector<1x32xf32>
    %306 = vector.broadcast %305 : vector<1x32xf32> to vector<16x32xf32>
    %307 = arith.addf %304, %306 : vector<16x32xf32>
    %c1_108 = arith.constant 1 : index
    %c0_109 = arith.constant 0 : index
    %c32_110 = arith.constant 32 : index
    %308 = vector.load %arg4[%c1_108, %c0_109, %c32_110] : memref<2x32x256xf32, #tpu.memory_space<vmem>>, vector<1x32x64xf32>
    %309 = vector.shape_cast %308 : vector<1x32x64xf32> to vector<32x64xf32>
    %cst_111 = arith.constant dense<0.000000e+00> : vector<16x64xf32>
    %310 = tpu.matmul %1, %309, %cst_111 {dimension_numbers = #tpu.dot_dimension_numbers<[1], [0], [0], [1], [0, 0, 1, 1], [], []>} : vector<16x32xf32>, vector<32x64xf32>, vector<16x64xf32> -> vector<16x64xf32>
    %311 = vector.extract_strided_slice %301 {offsets = [0, 32], sizes = [1, 64], strides = [1, 1]} : vector<1x96xf32> to vector<1x64xf32>
    %312 = vector.broadcast %311 : vector<1x64xf32> to vector<16x64xf32>
    %313 = arith.addf %310, %312 : vector<16x64xf32>
    %314 = vector.extract_strided_slice %313 {offsets = [0, 0], sizes = [16, 32], strides = [1, 1]} : vector<16x64xf32> to vector<16x32xf32>
    %315 = vector.extract_strided_slice %313 {offsets = [0, 32], sizes = [16, 32], strides = [1, 1]} : vector<16x64xf32> to vector<16x32xf32>
    %316 = vector.extract_strided_slice %307 {offsets = [0, 0], sizes = [16, 8], strides = [1, 1]} : vector<16x32xf32> to vector<16x8xf32>
    %317 = vector.extract_strided_slice %307 {offsets = [0, 8], sizes = [16, 8], strides = [1, 1]} : vector<16x32xf32> to vector<16x8xf32>
    %318 = vector.extract_strided_slice %307 {offsets = [0, 16], sizes = [16, 8], strides = [1, 1]} : vector<16x32xf32> to vector<16x8xf32>
    %319 = vector.extract_strided_slice %307 {offsets = [0, 24], sizes = [16, 8], strides = [1, 1]} : vector<16x32xf32> to vector<16x8xf32>
    %320 = tpu.concatenate %316, %317, %318, %319 in 0 : vector<16x8xf32>, vector<16x8xf32>, vector<16x8xf32>, vector<16x8xf32> -> vector<64x8xf32>
    %321 = vector.extract_strided_slice %314 {offsets = [0, 0], sizes = [16, 8], strides = [1, 1]} : vector<16x32xf32> to vector<16x8xf32>
    %322 = vector.extract_strided_slice %314 {offsets = [0, 8], sizes = [16, 8], strides = [1, 1]} : vector<16x32xf32> to vector<16x8xf32>
    %323 = vector.extract_strided_slice %314 {offsets = [0, 16], sizes = [16, 8], strides = [1, 1]} : vector<16x32xf32> to vector<16x8xf32>
    %324 = vector.extract_strided_slice %314 {offsets = [0, 24], sizes = [16, 8], strides = [1, 1]} : vector<16x32xf32> to vector<16x8xf32>
    %325 = tpu.concatenate %321, %322, %323, %324 in 0 : vector<16x8xf32>, vector<16x8xf32>, vector<16x8xf32>, vector<16x8xf32> -> vector<64x8xf32>
    %326 = vector.extract_strided_slice %315 {offsets = [0, 0], sizes = [16, 8], strides = [1, 1]} : vector<16x32xf32> to vector<16x8xf32>
    %327 = vector.extract_strided_slice %315 {offsets = [0, 8], sizes = [16, 8], strides = [1, 1]} : vector<16x32xf32> to vector<16x8xf32>
    %328 = vector.extract_strided_slice %315 {offsets = [0, 16], sizes = [16, 8], strides = [1, 1]} : vector<16x32xf32> to vector<16x8xf32>
    %329 = vector.extract_strided_slice %315 {offsets = [0, 24], sizes = [16, 8], strides = [1, 1]} : vector<16x32xf32> to vector<16x8xf32>
    %330 = tpu.concatenate %326, %327, %328, %329 in 0 : vector<16x8xf32>, vector<16x8xf32>, vector<16x8xf32>, vector<16x8xf32> -> vector<64x8xf32>
    %cst_112 = arith.constant dense<0.000000e+00> : vector<64x64xf32>
    %331 = tpu.matmul %320, %325, %cst_112 {dimension_numbers = #tpu.dot_dimension_numbers<[1], [1], [0], [0], [0, 0, 1, 0], [], []>} : vector<64x8xf32>, vector<64x8xf32>, vector<64x64xf32> -> vector<64x64xf32>
    %c1_113 = arith.constant 1 : index
    %c0_114 = arith.constant 0 : index
    %c0_115 = arith.constant 0 : index
    %332 = vector.load %arg3[%c1_113, %c0_114, %c0_115] : memref<2x64x64xf32, #tpu.memory_space<vmem>>, vector<1x64x64xf32>
    %333 = vector.shape_cast %332 : vector<1x64x64xf32> to vector<64x64xf32>
    %334 = arith.addf %331, %333 : vector<64x64xf32>
    %cst_116 = arith.constant dense<0xFF800000> : vector<64xf32>
    %335 = vector.multi_reduction <maximumf>, %334, %cst_116 [1] : vector<64x64xf32> to vector<64xf32>
    %336 = vector.shape_cast %335 : vector<64xf32> to vector<64x1xf32>
    %337 = vector.broadcast %336 : vector<64x1xf32> to vector<64x64xf32>
    %338 = arith.subf %334, %337 : vector<64x64xf32>
    %339 = math.exp %338 : vector<64x64xf32>
    %cst_117 = arith.constant dense<0.000000e+00> : vector<64xf32>
    %340 = vector.multi_reduction <add>, %339, %cst_117 [1] : vector<64x64xf32> to vector<64xf32>
    %341 = vector.shape_cast %340 : vector<64xf32> to vector<64x1xf32>
    %342 = tpu.reciprocal %341 {approx = true} : vector<64x1xf32> -> vector<64x1xf32>
    %343 = vector.broadcast %342 : vector<64x1xf32> to vector<64x64xf32>
    %344 = arith.mulf %339, %343 : vector<64x64xf32>
    %cst_118 = arith.constant dense<0.000000e+00> : vector<64x8xf32>
    %345 = tpu.matmul %344, %330, %cst_118 {dimension_numbers = #tpu.dot_dimension_numbers<[1], [0], [0], [1], [0, 0, 1, 1], [], []>} : vector<64x64xf32>, vector<64x8xf32>, vector<64x8xf32> -> vector<64x8xf32>
    %346 = vector.extract_strided_slice %345 {offsets = [0, 0], sizes = [16, 8], strides = [1, 1]} : vector<64x8xf32> to vector<16x8xf32>
    %347 = vector.extract_strided_slice %345 {offsets = [16, 0], sizes = [16, 8], strides = [1, 1]} : vector<64x8xf32> to vector<16x8xf32>
    %348 = vector.extract_strided_slice %345 {offsets = [32, 0], sizes = [16, 8], strides = [1, 1]} : vector<64x8xf32> to vector<16x8xf32>
    %349 = vector.extract_strided_slice %345 {offsets = [48, 0], sizes = [16, 8], strides = [1, 1]} : vector<64x8xf32> to vector<16x8xf32>
    %350 = tpu.concatenate %346, %347, %348, %349 in 1 : vector<16x8xf32>, vector<16x8xf32>, vector<16x8xf32>, vector<16x8xf32> -> vector<16x32xf32>
    %c1_119 = arith.constant 1 : index
    %c0_120 = arith.constant 0 : index
    %c96_121 = arith.constant 96 : index
    %351 = vector.load %arg4[%c1_119, %c0_120, %c96_121] : memref<2x32x256xf32, #tpu.memory_space<vmem>>, vector<1x32x32xf32>
    %352 = vector.shape_cast %351 : vector<1x32x32xf32> to vector<32x32xf32>
    %cst_122 = arith.constant dense<0.000000e+00> : vector<16x32xf32>
    %353 = tpu.matmul %350, %352, %cst_122 {dimension_numbers = #tpu.dot_dimension_numbers<[1], [0], [0], [1], [0, 0, 1, 1], [], []>} : vector<16x32xf32>, vector<32x32xf32>, vector<16x32xf32> -> vector<16x32xf32>
    %c6_123 = arith.constant 6 : index
    %c0_124 = arith.constant 0 : index
    %354 = vector.load %arg5[%c6_123, %c0_124] : memref<22x128xf32, #tpu.memory_space<vmem>>, vector<1x32xf32>
    %355 = vector.broadcast %354 : vector<1x32xf32> to vector<16x32xf32>
    %356 = arith.addf %353, %355 : vector<16x32xf32>
    %357 = arith.addf %275, %356 : vector<16x32xf32>
    %c18 = arith.constant 18 : index
    %c0_125 = arith.constant 0 : index
    %358 = vector.load %arg5[%c18, %c0_125] : memref<22x128xf32, #tpu.memory_space<vmem>>, vector<1x32xf32>
    %c19 = arith.constant 19 : index
    %c0_126 = arith.constant 0 : index
    %359 = vector.load %arg5[%c19, %c0_126] : memref<22x128xf32, #tpu.memory_space<vmem>>, vector<1x32xf32>
    %cst_127 = arith.constant dense<0.000000e+00> : vector<16xf32>
    %360 = vector.multi_reduction <add>, %357, %cst_127 [1] : vector<16x32xf32> to vector<16xf32>
    %361 = vector.shape_cast %360 : vector<16xf32> to vector<16x1xf32>
    %cst_128 = arith.constant 3.200000e+01 : f32
    %362 = vector.broadcast %cst_128 : f32 to vector<16x1xf32>
    %363 = arith.divf %361, %362 : vector<16x1xf32>
    %364 = vector.broadcast %363 : vector<16x1xf32> to vector<16x32xf32>
    %365 = arith.subf %357, %364 : vector<16x32xf32>
    %366 = arith.mulf %365, %365 : vector<16x32xf32>
    %cst_129 = arith.constant dense<0.000000e+00> : vector<16xf32>
    %367 = vector.multi_reduction <add>, %366, %cst_129 [1] : vector<16x32xf32> to vector<16xf32>
    %368 = vector.shape_cast %367 : vector<16xf32> to vector<16x1xf32>
    %cst_130 = arith.constant 0.0322580636 : f32
    %369 = vector.broadcast %cst_130 : f32 to vector<16x1xf32>
    %370 = arith.mulf %368, %369 : vector<16x1xf32>
    %371 = math.sqrt %370 : vector<16x1xf32>
    %cst_131 = arith.constant 1.000000e+06 : f32
    %372 = vector.broadcast %cst_131 : f32 to vector<16x1xf32>
    %373 = arith.addf %371, %372 : vector<16x1xf32>
    %374 = tpu.reciprocal %373 {approx = true} : vector<16x1xf32> -> vector<16x1xf32>
    %375 = vector.broadcast %363 : vector<16x1xf32> to vector<16x32xf32>
    %376 = arith.subf %357, %375 : vector<16x32xf32>
    %377 = vector.broadcast %358 : vector<1x32xf32> to vector<16x32xf32>
    %378 = arith.mulf %377, %376 : vector<16x32xf32>
    %379 = vector.broadcast %374 : vector<16x1xf32> to vector<16x32xf32>
    %380 = arith.mulf %378, %379 : vector<16x32xf32>
    %381 = vector.broadcast %359 : vector<1x32xf32> to vector<16x32xf32>
    %382 = arith.addf %380, %381 : vector<16x32xf32>
    %c1_132 = arith.constant 1 : index
    %c0_133 = arith.constant 0 : index
    %c128_134 = arith.constant 128 : index
    %383 = vector.load %arg4[%c1_132, %c0_133, %c128_134] : memref<2x32x256xf32, #tpu.memory_space<vmem>>, vector<1x32x64xf32>
    %384 = vector.shape_cast %383 : vector<1x32x64xf32> to vector<32x64xf32>
    %cst_135 = arith.constant dense<0.000000e+00> : vector<16x64xf32>
    %385 = tpu.matmul %382, %384, %cst_135 {dimension_numbers = #tpu.dot_dimension_numbers<[1], [0], [0], [1], [0, 0, 1, 1], [], []>} : vector<16x32xf32>, vector<32x64xf32>, vector<16x64xf32> -> vector<16x64xf32>
    %c5 = arith.constant 5 : index
    %c0_136 = arith.constant 0 : index
    %386 = vector.load %arg5[%c5, %c0_136] : memref<22x128xf32, #tpu.memory_space<vmem>>, vector<1x64xf32>
    %387 = vector.broadcast %386 : vector<1x64xf32> to vector<16x64xf32>
    %388 = arith.addf %385, %387 : vector<16x64xf32>
    %cst_137 = arith.constant 0.000000e+00 : f32
    %389 = vector.broadcast %cst_137 : f32 to vector<16x64xf32>
    %390 = arith.maximumf %388, %389 : vector<16x64xf32>
    %c1_138 = arith.constant 1 : index
    %c0_139 = arith.constant 0 : index
    %c192_140 = arith.constant 192 : index
    %391 = vector.load %arg4[%c1_138, %c0_139, %c192_140] : memref<2x32x256xf32, #tpu.memory_space<vmem>>, vector<1x32x64xf32>
    %392 = vector.shape_cast %391 : vector<1x32x64xf32> to vector<32x64xf32>
    %cst_141 = arith.constant dense<0.000000e+00> : vector<16x32xf32>
    %393 = tpu.matmul %390, %392, %cst_141 {dimension_numbers = #tpu.dot_dimension_numbers<[1], [1], [0], [0], [0, 0, 1, 0], [], []>} : vector<16x64xf32>, vector<32x64xf32>, vector<16x32xf32> -> vector<16x32xf32>
    %c7 = arith.constant 7 : index
    %c0_142 = arith.constant 0 : index
    %394 = vector.load %arg5[%c7, %c0_142] : memref<22x128xf32, #tpu.memory_space<vmem>>, vector<1x32xf32>
    %395 = vector.broadcast %394 : vector<1x32xf32> to vector<16x32xf32>
    %396 = arith.addf %393, %395 : vector<16x32xf32>
    %397 = arith.addf %357, %396 : vector<16x32xf32>
    %c20 = arith.constant 20 : index
    %c0_143 = arith.constant 0 : index
    %398 = vector.load %arg5[%c20, %c0_143] : memref<22x128xf32, #tpu.memory_space<vmem>>, vector<1x32xf32>
    %c21 = arith.constant 21 : index
    %c0_144 = arith.constant 0 : index
    %399 = vector.load %arg5[%c21, %c0_144] : memref<22x128xf32, #tpu.memory_space<vmem>>, vector<1x32xf32>
    %cst_145 = arith.constant dense<0.000000e+00> : vector<16xf32>
    %400 = vector.multi_reduction <add>, %397, %cst_145 [1] : vector<16x32xf32> to vector<16xf32>
    %401 = vector.shape_cast %400 : vector<16xf32> to vector<16x1xf32>
    %cst_146 = arith.constant 3.200000e+01 : f32
    %402 = vector.broadcast %cst_146 : f32 to vector<16x1xf32>
    %403 = arith.divf %401, %402 : vector<16x1xf32>
    %404 = vector.broadcast %403 : vector<16x1xf32> to vector<16x32xf32>
    %405 = arith.subf %397, %404 : vector<16x32xf32>
    %406 = arith.mulf %405, %405 : vector<16x32xf32>
    %cst_147 = arith.constant dense<0.000000e+00> : vector<16xf32>
    %407 = vector.multi_reduction <add>, %406, %cst_147 [1] : vector<16x32xf32> to vector<16xf32>
    %408 = vector.shape_cast %407 : vector<16xf32> to vector<16x1xf32>
    %cst_148 = arith.constant 0.0322580636 : f32
    %409 = vector.broadcast %cst_148 : f32 to vector<16x1xf32>
    %410 = arith.mulf %408, %409 : vector<16x1xf32>
    %411 = math.sqrt %410 : vector<16x1xf32>
    %cst_149 = arith.constant 1.000000e+06 : f32
    %412 = vector.broadcast %cst_149 : f32 to vector<16x1xf32>
    %413 = arith.addf %411, %412 : vector<16x1xf32>
    %414 = tpu.reciprocal %413 {approx = true} : vector<16x1xf32> -> vector<16x1xf32>
    %415 = vector.broadcast %403 : vector<16x1xf32> to vector<16x32xf32>
    %416 = arith.subf %397, %415 : vector<16x32xf32>
    %417 = vector.broadcast %398 : vector<1x32xf32> to vector<16x32xf32>
    %418 = arith.mulf %417, %416 : vector<16x32xf32>
    %419 = vector.broadcast %414 : vector<16x1xf32> to vector<16x32xf32>
    %420 = arith.mulf %418, %419 : vector<16x32xf32>
    %421 = vector.broadcast %399 : vector<1x32xf32> to vector<16x32xf32>
    %422 = arith.addf %420, %421 : vector<16x32xf32>
    %c0_150 = arith.constant 0 : index
    %c0_151 = arith.constant 0 : index
    %423 = vector.load %arg6[%c0_150, %c0_151] : memref<16x32xf32, #tpu.memory_space<vmem>>, vector<16x32xf32>
    tpu.vector_store %arg6[%c0_150, %c0_151], %422 {strides = array<i32>} : memref<16x32xf32, #tpu.memory_space<vmem>>, vector<16x32xf32>,
    return
  }
  func.func @transform_0(%arg0: i32) -> (i32, i32) {
    %c0_i32 = arith.constant 0 : i32
    %c0_i32_0 = arith.constant 0 : i32
    return %arg0, %c0_i32 : i32, i32
  }
  func.func @transform_1(%arg0: i32) -> (i32, i32) {
    %c0_i32 = arith.constant 0 : i32
    %c0_i32_0 = arith.constant 0 : i32
    return %arg0, %c0_i32 : i32, i32
  }
  func.func @transform_2(%arg0: i32) -> (i32, i32, i32) {
    %c0_i32 = arith.constant 0 : i32
    %c0_i32_0 = arith.constant 0 : i32
    %c0_i32_1 = arith.constant 0 : i32
    %c0_i32_2 = arith.constant 0 : i32
    return %c0_i32, %c0_i32_0, %c0_i32_1 : i32, i32, i32
  }
  func.func @transform_3(%arg0: i32) -> (i32, i32, i32) {
    %c0_i32 = arith.constant 0 : i32
    %c0_i32_0 = arith.constant 0 : i32
    %c0_i32_1 = arith.constant 0 : i32
    %c0_i32_2 = arith.constant 0 : i32
    return %c0_i32, %c0_i32_0, %c0_i32_1 : i32, i32, i32
  }
  func.func @transform_4(%arg0: i32) -> (i32, i32) {
    %c0_i32 = arith.constant 0 : i32
    %c0_i32_0 = arith.constant 0 : i32
    %c0_i32_1 = arith.constant 0 : i32
    return %c0_i32, %c0_i32_0 : i32, i32
  }
  func.func @transform_5(%arg0: i32) -> (i32, i32) {
    %c0_i32 = arith.constant 0 : i32
    %c0_i32_0 = arith.constant 0 : i32
    return %arg0, %c0_i32 : i32, i32
  }
}

</mosaic_0001>

<llo_original>
// kernel: tpu_custom_call.1
$region0: #{tpu_custom_call.1}
  #allocation0 [shape = 'u32[]', space=smem, size = 0x4, offset = 0x4, fixed_abs, tag = 'smem constant byte address 0x4 - core index']
  #allocation1 [shape = 'u32[144,128]{1,0:T(1,128)}', space=vmem, size = 0x12000, scoped, tag = 'internal scratch']
  %s0 = inlined_call_operand.hbm [shape: f32[16,32], index: 0, kind: input, shape index: {}]
  %s1 = inlined_call_operand.hbm [shape: f32[16,32], index: 1, kind: input, shape index: {}]
  %s2 = inlined_call_operand.hbm [shape: f32[2,64,64], index: 2, kind: input, shape index: {}]
  %s3 = inlined_call_operand.hbm [shape: f32[2,32,256], index: 3, kind: input, shape index: {}]
  %s4 = inlined_call_operand.hbm [shape: f32[22,128], index: 4, kind: input, shape index: {}]
  %s5 = inlined_call_operand.hbm [shape: f32[16,32], index: 5, kind: output, shape index: {}]
  %s6 = sld [smem:[#allocation0]]
  $region50: #{tpu_custom_call.1} parent=0
    _
  %s8 = ssub.s32 1, %s6
  %s9 = scalar_select 0, %s8, %s6
  $region1: #{tpu_custom_call.1} parent=0
    #allocation2 [shape = 'u8[8192]{0}', space=vmem, size = 0x2000, scoped, tag = 'input window, operand 0, single buffered']
    #allocation3 [shape = 's32[1]{0}', space=sflag, size = 0x4, scoped, tag = 'scoped memory for tpu_custom_call.1']
    #allocation4 [shape = 's32[1]{0}', space=sflag, size = 0x4, scoped, tag = 'scoped memory for tpu_custom_call.1']
    #allocation5 [shape = 'u8[8192]{0}', space=vmem, size = 0x2000, scoped, tag = 'input window, operand 1, single buffered']
    #allocation6 [shape = 's32[1]{0}', space=sflag, size = 0x4, scoped, tag = 'scoped memory for tpu_custom_call.1']
    #allocation7 [shape = 'u8[65536]{0}', space=vmem, size = 0x10000, scoped, tag = 'input window, operand 2, single buffered']
    #allocation8 [shape = 'u8[65536]{0}', space=vmem, size = 0x10000, scoped, tag = 'input window, operand 3, single buffered']
    #allocation9 [shape = 's32[1]{0}', space=sflag, size = 0x4, scoped, tag = 'scoped memory for tpu_custom_call.1']
    #allocation10 [shape = 'u8[12288]{0}', space=vmem, size = 0x3000, scoped, tag = 'input window, operand 4, single buffered']
    #allocation11 [shape = 'u8[8192]{0}', space=vmem, size = 0x2000, scoped, tag = 'output window, operand 0, single buffered']
    %10 = vsyncpa [#allocation3], 0
    %11 = vsyncpa [#allocation6], 0
    %12 = vsyncpa [#allocation9], 0
    %13 = vsyncpa [#allocation4], 0
    // Predicated region
    $region2: #{tpu_custom_call.1} parent=1 // pred_check
      _
    $region3: #{tpu_custom_call.1} parent=1 // pred_check_branch
      %15 = sbr.rel (0) target = $region5
    $region4: #{tpu_custom_call.1} parent=1 // pred_region
      %s17 = ssub.s32 256, 256
      %18 = vsyncadd [#allocation3], %s17
      %s19 = sshll.u32 [#allocation2], 4
      %s20 = int_to_ptr.vmem [resolvable:$true] %s19
      %25 = dma.hbm_to_vmem [thread:$0]  %s0, 256, %s20, [#allocation3], 128, 128, 8
    $region5: #{tpu_custom_call.1} parent=1 // pred_fallthru
      _
    // Predicated region
    $region6: #{tpu_custom_call.1} parent=1 // pred_check
      _
    $region7: #{tpu_custom_call.1} parent=1 // pred_check_branch
      %27 = sbr.rel (0) target = $region9
    $region8: #{tpu_custom_call.1} parent=1 // pred_region
      %s29 = ssub.s32 256, 256
      %30 = vsyncadd [#allocation6], %s29
      %s31 = sshll.u32 [#allocation5], 4
      %s32 = int_to_ptr.vmem [resolvable:$true] %s31
      %37 = dma.hbm_to_vmem [thread:$0]  %s1, 256, %s32, [#allocation6], 128, 128, 8
    $region9: #{tpu_custom_call.1} parent=1 // pred_fallthru
      _
    // Predicated region
    $region10: #{tpu_custom_call.1} parent=1 // pred_check
      _
    $region11: #{tpu_custom_call.1} parent=1 // pred_check_branch
      %39 = sbr.rel (0) target = $region13
    $region12: #{tpu_custom_call.1} parent=1 // pred_region
      %s41 = ssub.s32 2048, 2048
      %42 = vsyncadd [#allocation6], %s41
      %s43 = sshll.u32 [#allocation7], 4
      %s44 = int_to_ptr.vmem [resolvable:$true] %s43
      %49 = dma.hbm_to_vmem [thread:$0]  %s2, 2048, %s44, [#allocation6], 128, 128, 8
    $region13: #{tpu_custom_call.1} parent=1 // pred_fallthru
      _
    // Predicated region
    $region14: #{tpu_custom_call.1} parent=1 // pred_check
      _
    $region15: #{tpu_custom_call.1} parent=1 // pred_check_branch
      %51 = sbr.rel (0) target = $region17
    $region16: #{tpu_custom_call.1} parent=1 // pred_region
      %s53 = ssub.s32 2048, 2048
      %54 = vsyncadd [#allocation9], %s53
      %s55 = sshll.u32 [#allocation8], 4
      %s56 = int_to_ptr.vmem [resolvable:$true] %s55
      %61 = dma.hbm_to_vmem [thread:$0]  %s3, 2048, %s56, [#allocation9], 256, 256, 16
    $region17: #{tpu_custom_call.1} parent=1 // pred_fallthru
      _
    // Predicated region
    $region18: #{tpu_custom_call.1} parent=1 // pred_check
      _
    $region19: #{tpu_custom_call.1} parent=1 // pred_check_branch
      %63 = sbr.rel (0) target = $region21
    $region20: #{tpu_custom_call.1} parent=1 // pred_region
      %s65 = ssub.s32 384, 384
      %66 = vsyncadd [#allocation9], %s65
      %s67 = sshll.u32 [#allocation10], 4
      %s68 = int_to_ptr.vmem [resolvable:$true] %s67
      %73 = dma.hbm_to_vmem [thread:$0]  %s4, 384, %s68, [#allocation9], 128, 128, 8
    $region21: #{tpu_custom_call.1} parent=1 // pred_fallthru
      _
    // Predicated region
    $region22: #{tpu_custom_call.1} parent=1 // pred_check
      _
    $region23: #{tpu_custom_call.1} parent=1 // pred_check_branch
      %75 = sbr.rel (0) target = $region25
    $region24: #{tpu_custom_call.1} parent=1 // pred_region
      %76 = dma.done [#allocation3], 256
    $region25: #{tpu_custom_call.1} parent=1 // pred_fallthru
      _
    // Predicated region
    $region26: #{tpu_custom_call.1} parent=1 // pred_check
      _
    $region27: #{tpu_custom_call.1} parent=1 // pred_check_branch
      %78 = sbr.rel (0) target = $region29
    $region28: #{tpu_custom_call.1} parent=1 // pred_region
      %79 = dma.done [#allocation6], 256
    $region29: #{tpu_custom_call.1} parent=1 // pred_fallthru
      _
    // Predicated region
    $region30: #{tpu_custom_call.1} parent=1 // pred_check
      _
    $region31: #{tpu_custom_call.1} parent=1 // pred_check_branch
      %81 = sbr.rel (0) target = $region33
    $region32: #{tpu_custom_call.1} parent=1 // pred_region
      %82 = dma.done [#allocation6], 2048
    $region33: #{tpu_custom_call.1} parent=1 // pred_fallthru
      _
    // Predicated region
    $region34: #{tpu_custom_call.1} parent=1 // pred_check
      _
    $region35: #{tpu_custom_call.1} parent=1 // pred_check_branch
      %84 = sbr.rel (0) target = $region37
    $region36: #{tpu_custom_call.1} parent=1 // pred_region
      %85 = dma.done [#allocation9], 2048
    $region37: #{tpu_custom_call.1} parent=1 // pred_fallthru
      _
    // Predicated region
    $region38: #{tpu_custom_call.1} parent=1 // pred_check
      _
    $region39: #{tpu_custom_call.1} parent=1 // pred_check_branch
      %87 = sbr.rel (0) target = $region41
    $region40: #{tpu_custom_call.1} parent=1 // pred_region
      %88 = dma.done [#allocation9], 384
    $region41: #{tpu_custom_call.1} parent=1 // pred_fallthru
      _
    %v89 = vld [vmem:[#allocation2] sm:$0xff]
    %v90 = vld [vmem:[#allocation2 + $0x8] sm:$0xff]
    %v91 = vld [vmem:[#allocation5] sm:$0xff]
    %v92 = vld [vmem:[#allocation5 + $0x8] sm:$0xff]
    %v93 = vld [vmem:[#allocation10 + $0x8] sm:$0x1]
    %v94 = vld [vmem:[#allocation10 + $0x9] sm:$0x1]
    %vm95 = vcmask 261120
    %v96 = vsel %vm95, %v89, 0.0
    %97 = vadd.xlane.f32.xlu0 %v96
    %v98 = vpop.xlane.xlu0 %97
    %v99 = vsel %vm95, %v90, 0.0
    %100 = vadd.xlane.f32.xlu0 %v99
    %v101 = vpop.xlane.xlu0 %100
    %v102 = vrcp.pop 32.0
    %v103 = vmul.f32 %v98, %v102
    %v104 = vmul.f32 %v101, %v102
    %v105 = vsub.f32 %v89, %v103
    %v106 = vsub.f32 %v90, %v104
    %v107 = vmul.f32 %v105, %v105
    %v108 = vmul.f32 %v106, %v106
    %v109 = vsel %vm95, %v107, 0.0
    %110 = vadd.xlane.f32.xlu0 %v109
    %v111 = vpop.xlane.xlu0 %110
    %v112 = vsel %vm95, %v108, 0.0
    %113 = vadd.xlane.f32.xlu0 %v112
    %v114 = vpop.xlane.xlu0 %113
    %v115 = vmul.f32 %v111, 0.032258064
    %v116 = vmul.f32 %v114, 0.032258064
    %v117 = vrsqrt.pop %v115
    %v118 = vmul.f32 %v115, %v117
    %vm119 = vcmp.eq.f32.partialorder %v115, inf
    %v120 = vsel %vm119, %v115, %v118
    %vm121 = vcmp.eq.f32.partialorder %v115, 0.0
    %v122 = vand.u32 %v115, 2147483648
    %v123 = vsel %vm121, %v122, %v120
    %v124 = vrsqrt.pop %v116
    %v125 = vmul.f32 %v116, %v124
    %vm126 = vcmp.eq.f32.partialorder %v116, inf
    %v127 = vsel %vm126, %v116, %v125
    %vm128 = vcmp.eq.f32.partialorder %v116, 0.0
    %v129 = vand.u32 %v116, 2147483648
    %v130 = vsel %vm128, %v129, %v127
    %v131 = vadd.f32 %v123, 1000000.0
    %v132 = vadd.f32 %v130, 1000000.0
    %v133 = vrcp.pop %v131
    %v134 = vrcp.pop %v132
    %v135 = vlaneseq
    %v136 = vshrl.u32 %v135, 7
    %v137 = vsub.s32 0, %v136
    %v138 = vrot.slane %v93, %v137
    %v139 = vmul.f32 %v138, %v105
    %v140 = vmul.f32 %v138, %v106
    %v141 = vmul.f32 %v139, %v133
    %v142 = vmul.f32 %v140, %v134
    %v143 = vlaneseq
    %v144 = vshrl.u32 %v143, 7
    %v145 = vsub.s32 0, %v144
    %v146 = vrot.slane %v94, %v145
    %v147 = vadd.f32 %v141, %v146
    %v148 = vadd.f32 %v142, %v146
    %v149 = vld [vmem:[#allocation10] sm:$0x1]
    %v150 = vld [vmem:[#allocation8] sm:$0xff]
    %v151 = vld [vmem:[#allocation8 + $0x10] sm:$0xff]
    %v152 = vld [vmem:[#allocation8 + $0x20] sm:$0xff]
    %v153 = vld [vmem:[#allocation8 + $0x30] sm:$0xff]
    %v154 = vlaneseq
    %v155 = vshrl.u32 %v154, 7
    %v156 = vsub.s32 0, %v155
    %v157 = vrot.slane %v149, %v156
    %v159 = vsel %vm95, %v147, 0
    %v162 = vsel %vm95, %v148, 0
    %164 = vmatprep.subr.mxu0 0.0
    %165 = vmatpush1.msra.mxu0 0.0
    %166 = vmatprep.subr.mxu0 0.0
    %167 = vmatpush1.msra.mxu0 0.0
    %168 = vmatprep.subr.mxu0 0.0
    %169 = vmatpush1.msra.mxu0 0.0
    %170 = vmatprep.subr.mxu0 0.0
    %171 = vmatpush1.msra.mxu0 0.0
    %172 = vmatprep.subr.mxu0 0.0
    %173 = vmatpush1.msra.mxu0 0.0
    %174 = vmatprep.subr.mxu0 0.0
    %175 = vmatpush1.msra.mxu0 0.0
    %176 = vmatprep.subr.mxu0 0.0
    %177 = vmatpush1.msra.mxu0 0.0
    %178 = vmatprep.subr.mxu0 0.0
    %179 = vmatpush1.msra.mxu0 0.0
    %180 = vmatprep.subr.mxu0 0.0
    %181 = vmatpush1.msra.mxu0 0.0
    %182 = vmatprep.subr.mxu0 0.0
    %183 = vmatpush1.msra.mxu0 0.0
    %184 = vmatprep.subr.mxu0 0.0
    %185 = vmatpush1.msra.mxu0 0.0
    %186 = vmatprep.subr.mxu0 0.0
    %187 = vmatpush1.msra.mxu0 0.0
    %188 = vmatprep.subr.mxu0 0.0
    %189 = vmatpush1.msra.mxu0 %v153
    %190 = vmatprep.subr.mxu0 0.0
    %191 = vmatpush1.msra.mxu0 %v152
    %192 = vmatprep.subr.mxu0 0.0
    %193 = vmatpush1.msra.mxu0 %v151
    %194 = vmatprep.subr.mxu0 0.0
    %195 = vmatpush1.msra.mxu0 %v150
    %196 = vmatprep.subr.mxu0 0.0
    %197 = vmatpush2.msra.mxu0 0.0
    %198 = vmatprep.subr.mxu0 0.0
    %199 = vmatpush2.msra.mxu0 0.0
    %200 = vmatprep.subr.mxu0 0.0
    %201 = vmatpush2.msra.mxu0 0.0
    %202 = vmatprep.subr.mxu0 0.0
    %203 = vmatpush2.msra.mxu0 0.0
    %204 = vmatprep.subr.mxu0 0.0
    %205 = vmatpush2.msra.mxu0 0.0
    %206 = vmatprep.subr.mxu0 0.0
    %207 = vmatpush2.msra.mxu0 0.0
    %208 = vmatprep.subr.mxu0 0.0
    %209 = vmatpush2.msra.mxu0 0.0
    %210 = vmatprep.subr.mxu0 0.0
    %211 = vmatpush2.msra.mxu0 0.0
    %212 = vmatprep.subr.mxu0 0.0
    %213 = vmatpush2.msra.mxu0 0.0
    %214 = vmatprep.subr.mxu0 0.0
    %215 = vmatpush2.msra.mxu0 0.0
    %216 = vmatprep.subr.mxu0 0.0
    %217 = vmatpush2.msra.mxu0 0.0
    %218 = vmatprep.subr.mxu0 0.0
    %219 = vmatpush2.msra.mxu0 0.0
    %220 = vmatprep.subr.mxu0 0.0
    %221 = vmatpush2.msra.mxu0 0.0
    %222 = vmatprep.subr.mxu0 0.0
    %223 = vmatpush2.msra.mxu0 0.0
    %224 = vmatprep.subr.mxu0 0.0
    %225 = vmatpush2.msra.mxu0 0.0
    %226 = vmatprep.subr.mxu0 0.0
    %227 = vmatpush2.msra.mxu0 0.0
    %228 = vmatprep.mubr.f32.mxu0 0.0
    %229 = vmatmul.mubr.f32.gmra.mxu0 %v159
    %v230 = vpop.f32.mrf.mxu0
    %v231 = vadd.f32 %v157, %v230
    %v232 = vpop.f32.mrf.mxu0
    %233 = vmatprep.mubr.f32.mxu0 0.0
    %234 = vmatmul.mubr.f32.gmra.mxu0 %v162
    %v235 = vpop.f32.mrf.mxu0
    %v236 = vadd.f32 %v157, %v235
    %v237 = vpop.f32.mrf.mxu0
    %238 = vdwg.mxu0
    %241 = vrot.lane.b32.xlu0 %v231, 120
    %v242 = vpop.permute.xlu0 %241
    %243 = vrot.lane.b32.xlu0 %v236, 120
    %v244 = vpop.permute.xlu0 %243
    %245 = vrot.lane.b32.xlu0 %v231, 112
    %v246 = vpop.permute.xlu0 %245
    %247 = vrot.lane.b32.xlu0 %v236, 112
    %v248 = vpop.permute.xlu0 %247
    %249 = vrot.lane.b32.xlu0 %v231, 104
    %v250 = vpop.permute.xlu0 %249
    %251 = vrot.lane.b32.xlu0 %v236, 104
    %v252 = vpop.permute.xlu0 %251
    %v253 = vld [vmem:[#allocation7] sm:$0xff]
    %v254 = vld [vmem:[#allocation7 + $0x8] sm:$0xff]
    %v255 = vld [vmem:[#allocation7 + $0x10] sm:$0xff]
    %v256 = vld [vmem:[#allocation7 + $0x18] sm:$0xff]
    %v257 = vld [vmem:[#allocation7 + $0x20] sm:$0xff]
    %v258 = vld [vmem:[#allocation7 + $0x28] sm:$0xff]
    %v259 = vld [vmem:[#allocation7 + $0x30] sm:$0xff]
    %v260 = vld [vmem:[#allocation7 + $0x38] sm:$0xff]
    %261 = vrot.lane.b32.xlu0 %v231, 96
    %v262 = vpop.permute.xlu0 %261
    %263 = vrot.lane.b32.xlu0 %v236, 96
    %v264 = vpop.permute.xlu0 %263
    %265 = vrot.lane.b32.xlu0 %v242, 96
    %v266 = vpop.permute.xlu0 %265
    %267 = vrot.lane.b32.xlu0 %v244, 96
    %v268 = vpop.permute.xlu0 %267
    %269 = vrot.lane.b32.xlu0 %v246, 96
    %v270 = vpop.permute.xlu0 %269
    %271 = vrot.lane.b32.xlu0 %v248, 96
    %v272 = vpop.permute.xlu0 %271
    %273 = vrot.lane.b32.xlu0 %v250, 96
    %v274 = vpop.permute.xlu0 %273
    %275 = vrot.lane.b32.xlu0 %v252, 96
    %v276 = vpop.permute.xlu0 %275
    %vm277 = vcmask 64512
    %v278 = vsel %vm277, %v231, 0
    %v280 = vsel %vm277, %v236, 0
    %v282 = vsel %vm277, %v242, 0
    %v284 = vsel %vm277, %v244, 0
    %v286 = vsel %vm277, %v246, 0
    %v288 = vsel %vm277, %v248, 0
    %v290 = vsel %vm277, %v250, 0
    %v292 = vsel %vm277, %v252, 0
    %v294 = vsel %vm277, %v262, 0
    %v296 = vsel %vm277, %v264, 0
    %v298 = vsel %vm277, %v266, 0
    %v300 = vsel %vm277, %v268, 0
    %v302 = vsel %vm277, %v270, 0
    %v304 = vsel %vm277, %v272, 0
    %v306 = vsel %vm277, %v274, 0
    %v308 = vsel %vm277, %v276, 0
    %310 = vmatprep.subr.mxu0 0.0
    %311 = vmatpush1.xpose.msra.mxu0 0.0
    %312 = vmatprep.subr.mxu0 0.0
    %313 = vmatpush1.xpose.msra.mxu0 0.0
    %314 = vmatprep.subr.mxu0 0.0
    %315 = vmatpush1.xpose.msra.mxu0 0.0
    %316 = vmatprep.subr.mxu0 0.0
    %317 = vmatpush1.xpose.msra.mxu0 0.0
    %318 = vmatprep.subr.mxu0 0.0
    %319 = vmatpush1.xpose.msra.mxu0 0.0
    %320 = vmatprep.subr.mxu0 0.0
    %321 = vmatpush1.xpose.msra.mxu0 0.0
    %322 = vmatprep.subr.mxu0 0.0
    %323 = vmatpush1.xpose.msra.mxu0 0.0
    %324 = vmatprep.subr.mxu0 0.0
    %325 = vmatpush1.xpose.msra.mxu0 0.0
    %326 = vmatprep.subr.mxu0 0.0
    %327 = vmatpush1.xpose.msra.mxu0 %v308
    %328 = vmatprep.subr.mxu0 0.0
    %329 = vmatpush1.xpose.msra.mxu0 %v306
    %330 = vmatprep.subr.mxu0 0.0
    %331 = vmatpush1.xpose.msra.mxu0 %v304
    %332 = vmatprep.subr.mxu0 0.0
    %333 = vmatpush1.xpose.msra.mxu0 %v302
    %334 = vmatprep.subr.mxu0 0.0
    %335 = vmatpush1.xpose.msra.mxu0 %v300
    %336 = vmatprep.subr.mxu0 0.0
    %337 = vmatpush1.xpose.msra.mxu0 %v298
    %338 = vmatprep.subr.mxu0 0.0
    %339 = vmatpush1.xpose.msra.mxu0 %v296
    %340 = vmatprep.subr.mxu0 0.0
    %341 = vmatpush1.xpose.msra.mxu0 %v294
    %342 = vmatprep.subr.mxu0 0.0
    %343 = vmatpush2.xpose.msra.mxu0 0.0
    %344 = vmatprep.subr.mxu0 0.0
    %345 = vmatpush2.xpose.msra.mxu0 0.0
    %346 = vmatprep.subr.mxu0 0.0
    %347 = vmatpush2.xpose.msra.mxu0 0.0
    %348 = vmatprep.subr.mxu0 0.0
    %349 = vmatpush2.xpose.msra.mxu0 0.0
    %350 = vmatprep.subr.mxu0 0.0
    %351 = vmatpush2.xpose.msra.mxu0 0.0
    %352 = vmatprep.subr.mxu0 0.0
    %353 = vmatpush2.xpose.msra.mxu0 0.0
    %354 = vmatprep.subr.mxu0 0.0
    %355 = vmatpush2.xpose.msra.mxu0 0.0
    %356 = vmatprep.subr.mxu0 0.0
    %357 = vmatpush2.xpose.msra.mxu0 0.0
    %358 = vmatprep.subr.mxu0 0.0
    %359 = vmatpush2.xpose.msra.mxu0 0.0
    %360 = vmatprep.subr.mxu0 0.0
    %361 = vmatpush2.xpose.msra.mxu0 0.0
    %362 = vmatprep.subr.mxu0 0.0
    %363 = vmatpush2.xpose.msra.mxu0 0.0
    %364 = vmatprep.subr.mxu0 0.0
    %365 = vmatpush2.xpose.msra.mxu0 0.0
    %366 = vmatprep.subr.mxu0 0.0
    %367 = vmatpush2.xpose.msra.mxu0 0.0
    %368 = vmatprep.subr.mxu0 0.0
    %369 = vmatpush2.xpose.msra.mxu0 0.0
    %370 = vmatprep.subr.mxu0 0.0
    %371 = vmatpush2.xpose.msra.mxu0 0.0
    %372 = vmatprep.subr.mxu0 0.0
    %373 = vmatpush2.xpose.msra.mxu0 0.0
    %374 = vmatprep.mubr.f32.mxu0 0.0
    %375 = vmatmul.mubr.f32.gmra.mxu0 %v278
    %v376 = vpop.f32.mrf.mxu0
    %v377 = vadd.f32 %v253, %v376
    %v378 = vpop.f32.mrf.mxu0
    %379 = vmatprep.mubr.f32.mxu0 0.0
    %380 = vmatmul.mubr.f32.gmra.mxu0 %v280
    %v381 = vpop.f32.mrf.mxu0
    %v382 = vadd.f32 %v254, %v381
    %v383 = vpop.f32.mrf.mxu0
    %384 = vmatprep.mubr.f32.mxu0 0.0
    %385 = vmatmul.mubr.f32.gmra.mxu0 %v282
    %v386 = vpop.f32.mrf.mxu0
    %v387 = vadd.f32 %v255, %v386
    %v388 = vpop.f32.mrf.mxu0
    %389 = vmatprep.mubr.f32.mxu0 0.0
    %390 = vmatmul.mubr.f32.gmra.mxu0 %v284
    %v391 = vpop.f32.mrf.mxu0
    %v392 = vadd.f32 %v256, %v391
    %v393 = vpop.f32.mrf.mxu0
    %394 = vmatprep.mubr.f32.mxu0 0.0
    %395 = vmatmul.mubr.f32.gmra.mxu0 %v286
    %v396 = vpop.f32.mrf.mxu0
    %v397 = vadd.f32 %v257, %v396
    %v398 = vpop.f32.mrf.mxu0
    %399 = vmatprep.mubr.f32.mxu0 0.0
    %400 = vmatmul.mubr.f32.gmra.mxu0 %v288
    %v401 = vpop.f32.mrf.mxu0
    %v402 = vadd.f32 %v258, %v401
    %v403 = vpop.f32.mrf.mxu0
    %404 = vmatprep.mubr.f32.mxu0 0.0
    %405 = vmatmul.mubr.f32.gmra.mxu0 %v290
    %v406 = vpop.f32.mrf.mxu0
    %v407 = vadd.f32 %v259, %v406
    %v408 = vpop.f32.mrf.mxu0
    %409 = vmatprep.mubr.f32.mxu0 0.0
    %410 = vmatmul.mubr.f32.gmra.mxu0 %v292
    %v411 = vpop.f32.mrf.mxu0
    %v412 = vadd.f32 %v260, %v411
    %v413 = vpop.f32.mrf.mxu0
    %414 = vdwg.mxu0
    %vm415 = vcmask 523264
    %v416 = vsel %vm415, %v377, -inf
    %417 = vmax.xlane.f32.xlu0 %v416
    %v418 = vpop.xlane.xlu0 %417
    %v419 = vsel %vm415, %v382, -inf
    %420 = vmax.xlane.f32.xlu0 %v419
    %v421 = vpop.xlane.xlu0 %420
    %v422 = vsel %vm415, %v387, -inf
    %423 = vmax.xlane.f32.xlu0 %v422
    %v424 = vpop.xlane.xlu0 %423
    %v425 = vsel %vm415, %v392, -inf
    %426 = vmax.xlane.f32.xlu0 %v425
    %v427 = vpop.xlane.xlu0 %426
    %v428 = vsel %vm415, %v397, -inf
    %429 = vmax.xlane.f32.xlu0 %v428
    %v430 = vpop.xlane.xlu0 %429
    %v431 = vsel %vm415, %v402, -inf
    %432 = vmax.xlane.f32.xlu0 %v431
    %v433 = vpop.xlane.xlu0 %432
    %v434 = vsel %vm415, %v407, -inf
    %435 = vmax.xlane.f32.xlu0 %v434
    %v436 = vpop.xlane.xlu0 %435
    %v437 = vsel %vm415, %v412, -inf
    %438 = vmax.xlane.f32.xlu0 %v437
    %v439 = vpop.xlane.xlu0 %438
    %v440 = vsub.f32 %v377, %v418
    %v441 = vsub.f32 %v382, %v421
    %v442 = vsub.f32 %v387, %v424
    %v443 = vsub.f32 %v392, %v427
    %v444 = vsub.f32 %v397, %v430
    %v445 = vsub.f32 %v402, %v433
    %v446 = vsub.f32 %v407, %v436
    %v447 = vsub.f32 %v412, %v439
    %v448 = vmul.f32 %v440, 1.442695
    %v449 = vpow.pop %v448
    %v450 = vmul.f32 %v441, 1.442695
    %v451 = vpow.pop %v450
    %v452 = vmul.f32 %v442, 1.442695
    %v453 = vpow.pop %v452
    %v454 = vmul.f32 %v443, 1.442695
    %v455 = vpow.pop %v454
    %v456 = vmul.f32 %v444, 1.442695
    %v457 = vpow.pop %v456
    %v458 = vmul.f32 %v445, 1.442695
    %v459 = vpow.pop %v458
    %v460 = vmul.f32 %v446, 1.442695
    %v461 = vpow.pop %v460
    %v462 = vmul.f32 %v447, 1.442695
    %v463 = vpow.pop %v462
    %v464 = vsel %vm415, %v449, 0.0
    %465 = vadd.xlane.f32.xlu0 %v464
    %v466 = vpop.xlane.xlu0 %465
    %v467 = vsel %vm415, %v451, 0.0
    %468 = vadd.xlane.f32.xlu0 %v467
    %v469 = vpop.xlane.xlu0 %468
    %v470 = vsel %vm415, %v453, 0.0
    %471 = vadd.xlane.f32.xlu0 %v470
    %v472 = vpop.xlane.xlu0 %471
    %v473 = vsel %vm415, %v455, 0.0
    %474 = vadd.xlane.f32.xlu0 %v473
    %v475 = vpop.xlane.xlu0 %474
    %v476 = vsel %vm415, %v457, 0.0
    %477 = vadd.xlane.f32.xlu0 %v476
    %v478 = vpop.xlane.xlu0 %477
    %v479 = vsel %vm415, %v459, 0.0
    %480 = vadd.xlane.f32.xlu0 %v479
    %v481 = vpop.xlane.xlu0 %480
    %v482 = vsel %vm415, %v461, 0.0
    %483 = vadd.xlane.f32.xlu0 %v482
    %v484 = vpop.xlane.xlu0 %483
    %v485 = vsel %vm415, %v463, 0.0
    %486 = vadd.xlane.f32.xlu0 %v485
    %v487 = vpop.xlane.xlu0 %486
    %v488 = vrcp.pop %v466
    %v489 = vrcp.pop %v469
    %v490 = vrcp.pop %v472
    %v491 = vrcp.pop %v475
    %v492 = vrcp.pop %v478
    %v493 = vrcp.pop %v481
    %v494 = vrcp.pop %v484
    %v495 = vrcp.pop %v487
    %v496 = vmul.f32 %v449, %v488
    %v497 = vmul.f32 %v451, %v489
    %v498 = vmul.f32 %v453, %v490
    %v499 = vmul.f32 %v455, %v491
    %v500 = vmul.f32 %v457, %v492
    %v501 = vmul.f32 %v459, %v493
    %v502 = vmul.f32 %v461, %v494
    %v503 = vmul.f32 %v463, %v495
    %504 = vrot.lane.b32.xlu0 %v231, 64
    %v505 = vpop.permute.xlu0 %504
    %506 = vrot.lane.b32.xlu0 %v236, 64
    %v507 = vpop.permute.xlu0 %506
    %508 = vrot.lane.b32.xlu0 %v242, 64
    %v509 = vpop.permute.xlu0 %508
    %510 = vrot.lane.b32.xlu0 %v244, 64
    %v511 = vpop.permute.xlu0 %510
    %512 = vrot.lane.b32.xlu0 %v246, 64
    %v513 = vpop.permute.xlu0 %512
    %514 = vrot.lane.b32.xlu0 %v248, 64
    %v515 = vpop.permute.xlu0 %514
    %516 = vrot.lane.b32.xlu0 %v250, 64
    %v517 = vpop.permute.xlu0 %516
    %518 = vrot.lane.b32.xlu0 %v252, 64
    %v519 = vpop.permute.xlu0 %518
    %v529 = vsel %vm415, %v496, 0
    %v532 = vsel %vm415, %v497, 0
    %v535 = vsel %vm415, %v498, 0
    %v538 = vsel %vm415, %v499, 0
    %v541 = vsel %vm415, %v500, 0
    %v544 = vsel %vm415, %v501, 0
    %v547 = vsel %vm415, %v502, 0
    %v550 = vsel %vm415, %v503, 0
    %552 = vmatprep.subr.mxu0 0.0
    %553 = vmatpush1.msra.mxu0 0.0
    %554 = vmatprep.subr.mxu0 0.0
    %555 = vmatpush1.msra.mxu0 0.0
    %556 = vmatprep.subr.mxu0 0.0
    %557 = vmatpush1.msra.mxu0 0.0
    %558 = vmatprep.subr.mxu0 0.0
    %559 = vmatpush1.msra.mxu0 0.0
    %560 = vmatprep.subr.mxu0 0.0
    %561 = vmatpush1.msra.mxu0 0.0
    %562 = vmatprep.subr.mxu0 0.0
    %563 = vmatpush1.msra.mxu0 0.0
    %564 = vmatprep.subr.mxu0 0.0
    %565 = vmatpush1.msra.mxu0 0.0
    %566 = vmatprep.subr.mxu0 0.0
    %567 = vmatpush1.msra.mxu0 0.0
    %568 = vmatprep.subr.mxu0 0.0
    %569 = vmatpush1.msra.mxu0 %v519
    %570 = vmatprep.subr.mxu0 0.0
    %571 = vmatpush1.msra.mxu0 %v517
    %572 = vmatprep.subr.mxu0 0.0
    %573 = vmatpush1.msra.mxu0 %v515
    %574 = vmatprep.subr.mxu0 0.0
    %575 = vmatpush1.msra.mxu0 %v513
    %576 = vmatprep.subr.mxu0 0.0
    %577 = vmatpush1.msra.mxu0 %v511
    %578 = vmatprep.subr.mxu0 0.0
    %579 = vmatpush1.msra.mxu0 %v509
    %580 = vmatprep.subr.mxu0 0.0
    %581 = vmatpush1.msra.mxu0 %v507
    %582 = vmatprep.subr.mxu0 0.0
    %583 = vmatpush1.msra.mxu0 %v505
    %584 = vmatprep.subr.mxu0 0.0
    %585 = vmatpush2.msra.mxu0 0.0
    %586 = vmatprep.subr.mxu0 0.0
    %587 = vmatpush2.msra.mxu0 0.0
    %588 = vmatprep.subr.mxu0 0.0
    %589 = vmatpush2.msra.mxu0 0.0
    %590 = vmatprep.subr.mxu0 0.0
    %591 = vmatpush2.msra.mxu0 0.0
    %592 = vmatprep.subr.mxu0 0.0
    %593 = vmatpush2.msra.mxu0 0.0
    %594 = vmatprep.subr.mxu0 0.0
    %595 = vmatpush2.msra.mxu0 0.0
    %596 = vmatprep.subr.mxu0 0.0
    %597 = vmatpush2.msra.mxu0 0.0
    %598 = vmatprep.subr.mxu0 0.0
    %599 = vmatpush2.msra.mxu0 0.0
    %600 = vmatprep.subr.mxu0 0.0
    %601 = vmatpush2.msra.mxu0 0.0
    %602 = vmatprep.subr.mxu0 0.0
    %603 = vmatpush2.msra.mxu0 0.0
    %604 = vmatprep.subr.mxu0 0.0
    %605 = vmatpush2.msra.mxu0 0.0
    %606 = vmatprep.subr.mxu0 0.0
    %607 = vmatpush2.msra.mxu0 0.0
    %608 = vmatprep.subr.mxu0 0.0
    %609 = vmatpush2.msra.mxu0 0.0
    %610 = vmatprep.subr.mxu0 0.0
    %611 = vmatpush2.msra.mxu0 0.0
    %612 = vmatprep.subr.mxu0 0.0
    %613 = vmatpush2.msra.mxu0 0.0
    %614 = vmatprep.subr.mxu0 0.0
    %615 = vmatpush2.msra.mxu0 0.0
    %616 = vmatprep.mubr.f32.mxu0 0.0
    %617 = vmatmul.mubr.f32.gmra.mxu0 %v529
    %v618 = vpop.f32.mrf.mxu0
    %v619 = vadd.f32 0.0, %v618
    %v620 = vpop.f32.mrf.mxu0
    %621 = vmatprep.mubr.f32.mxu0 0.0
    %622 = vmatmul.mubr.f32.gmra.mxu0 %v532
    %v623 = vpop.f32.mrf.mxu0
    %v624 = vadd.f32 0.0, %v623
    %v625 = vpop.f32.mrf.mxu0
    %626 = vmatprep.mubr.f32.mxu0 0.0
    %627 = vmatmul.mubr.f32.gmra.mxu0 %v535
    %v628 = vpop.f32.mrf.mxu0
    %v629 = vadd.f32 0.0, %v628
    %v630 = vpop.f32.mrf.mxu0
    %631 = vmatprep.mubr.f32.mxu0 0.0
    %632 = vmatmul.mubr.f32.gmra.mxu0 %v538
    %v633 = vpop.f32.mrf.mxu0
    %v634 = vadd.f32 0.0, %v633
    %v635 = vpop.f32.mrf.mxu0
    %636 = vmatprep.mubr.f32.mxu0 0.0
    %637 = vmatmul.mubr.f32.gmra.mxu0 %v541
    %v638 = vpop.f32.mrf.mxu0
    %v639 = vadd.f32 0.0, %v638
    %v640 = vpop.f32.mrf.mxu0
    %641 = vmatprep.mubr.f32.mxu0 0.0
    %642 = vmatmul.mubr.f32.gmra.mxu0 %v544
    %v643 = vpop.f32.mrf.mxu0
    %v644 = vadd.f32 0.0, %v643
    %v645 = vpop.f32.mrf.mxu0
    %646 = vmatprep.mubr.f32.mxu0 0.0
    %647 = vmatmul.mubr.f32.gmra.mxu0 %v547
    %v648 = vpop.f32.mrf.mxu0
    %v649 = vadd.f32 0.0, %v648
    %v650 = vpop.f32.mrf.mxu0
    %651 = vmatprep.mubr.f32.mxu0 0.0
    %652 = vmatmul.mubr.f32.gmra.mxu0 %v550
    %v653 = vpop.f32.mrf.mxu0
    %v654 = vadd.f32 0.0, %v653
    %v655 = vpop.f32.mrf.mxu0
    %656 = vdwg.mxu0
    %659 = vrot.lane.b32.xlu0 %v629, 8
    %v660 = vpop.permute.xlu0 %659
    %661 = vrot.lane.b32.xlu0 %v634, 8
    %v662 = vpop.permute.xlu0 %661
    %667 = vrot.lane.b32.xlu0 %v639, 16
    %v668 = vpop.permute.xlu0 %667
    %669 = vrot.lane.b32.xlu0 %v644, 16
    %v670 = vpop.permute.xlu0 %669
    %675 = vrot.lane.b32.xlu0 %v649, 24
    %v676 = vpop.permute.xlu0 %675
    %677 = vrot.lane.b32.xlu0 %v654, 24
    %v678 = vpop.permute.xlu0 %677
    %v681 = vsel %vm277, %v619, %v660
    %v682 = vsel %vm277, %v624, %v662
    %vm683 = vcmask 130048
    %v684 = vsel %vm683, %v681, %v668
    %v685 = vsel %vm683, %v682, %v670
    %vm686 = vcmask 195584
    %v687 = vsel %vm686, %v684, %v676
    %v688 = vsel %vm686, %v685, %v678
    %v689 = vld [vmem:[#allocation10 + $0x2] sm:$0x1]
    %v690 = vlaneseq
    %v691 = vshrl.u32 %v690, 7
    %v692 = vsub.s32 0, %v691
    %v693 = vrot.slane %v689, %v692
    %698 = vrot.lane.b32.xlu0 %v150, 32
    %v699 = vpop.permute.xlu0 %698
    %700 = vrot.lane.b32.xlu0 %v151, 32
    %v701 = vpop.permute.xlu0 %700
    %702 = vrot.lane.b32.xlu0 %v152, 32
    %v703 = vpop.permute.xlu0 %702
    %704 = vrot.lane.b32.xlu0 %v153, 32
    %v705 = vpop.permute.xlu0 %704
    %v711 = vsel %vm95, %v687, 0
    %v714 = vsel %vm95, %v688, 0
    %716 = vmatprep.subr.mxu0 0.0
    %717 = vmatpush1.msra.mxu0 0.0
    %718 = vmatprep.subr.mxu0 0.0
    %719 = vmatpush1.msra.mxu0 0.0
    %720 = vmatprep.subr.mxu0 0.0
    %721 = vmatpush1.msra.mxu0 0.0
    %722 = vmatprep.subr.mxu0 0.0
    %723 = vmatpush1.msra.mxu0 0.0
    %724 = vmatprep.subr.mxu0 0.0
    %725 = vmatpush1.msra.mxu0 0.0
    %726 = vmatprep.subr.mxu0 0.0
    %727 = vmatpush1.msra.mxu0 0.0
    %728 = vmatprep.subr.mxu0 0.0
    %729 = vmatpush1.msra.mxu0 0.0
    %730 = vmatprep.subr.mxu0 0.0
    %731 = vmatpush1.msra.mxu0 0.0
    %732 = vmatprep.subr.mxu0 0.0
    %733 = vmatpush1.msra.mxu0 0.0
    %734 = vmatprep.subr.mxu0 0.0
    %735 = vmatpush1.msra.mxu0 0.0
    %736 = vmatprep.subr.mxu0 0.0
    %737 = vmatpush1.msra.mxu0 0.0
    %738 = vmatprep.subr.mxu0 0.0
    %739 = vmatpush1.msra.mxu0 0.0
    %740 = vmatprep.subr.mxu0 0.0
    %741 = vmatpush1.msra.mxu0 %v705
    %742 = vmatprep.subr.mxu0 0.0
    %743 = vmatpush1.msra.mxu0 %v703
    %744 = vmatprep.subr.mxu0 0.0
    %745 = vmatpush1.msra.mxu0 %v701
    %746 = vmatprep.subr.mxu0 0.0
    %747 = vmatpush1.msra.mxu0 %v699
    %748 = vmatprep.subr.mxu0 0.0
    %749 = vmatpush2.msra.mxu0 0.0
    %750 = vmatprep.subr.mxu0 0.0
    %751 = vmatpush2.msra.mxu0 0.0
    %752 = vmatprep.subr.mxu0 0.0
    %753 = vmatpush2.msra.mxu0 0.0
    %754 = vmatprep.subr.mxu0 0.0
    %755 = vmatpush2.msra.mxu0 0.0
    %756 = vmatprep.subr.mxu0 0.0
    %757 = vmatpush2.msra.mxu0 0.0
    %758 = vmatprep.subr.mxu0 0.0
    %759 = vmatpush2.msra.mxu0 0.0
    %760 = vmatprep.subr.mxu0 0.0
    %761 = vmatpush2.msra.mxu0 0.0
    %762 = vmatprep.subr.mxu0 0.0
    %763 = vmatpush2.msra.mxu0 0.0
    %764 = vmatprep.subr.mxu0 0.0
    %765 = vmatpush2.msra.mxu0 0.0
    %766 = vmatprep.subr.mxu0 0.0
    %767 = vmatpush2.msra.mxu0 0.0
    %768 = vmatprep.subr.mxu0 0.0
    %769 = vmatpush2.msra.mxu0 0.0
    %770 = vmatprep.subr.mxu0 0.0
    %771 = vmatpush2.msra.mxu0 0.0
    %772 = vmatprep.subr.mxu0 0.0
    %773 = vmatpush2.msra.mxu0 0.0
    %774 = vmatprep.subr.mxu0 0.0
    %775 = vmatpush2.msra.mxu0 0.0
    %776 = vmatprep.subr.mxu0 0.0
    %777 = vmatpush2.msra.mxu0 0.0
    %778 = vmatprep.subr.mxu0 0.0
    %779 = vmatpush2.msra.mxu0 0.0
    %780 = vmatprep.mubr.f32.mxu0 0.0
    %781 = vmatmul.mubr.f32.gmra.mxu0 %v711
    %v782 = vpop.f32.mrf.mxu0
    %v783 = vadd.f32 %v693, %v782
    %v784 = vpop.f32.mrf.mxu0
    %785 = vmatprep.mubr.f32.mxu0 0.0
    %786 = vmatmul.mubr.f32.gmra.mxu0 %v714
    %v787 = vpop.f32.mrf.mxu0
    %v788 = vadd.f32 %v693, %v787
    %v789 = vpop.f32.mrf.mxu0
    %790 = vdwg.mxu0
    %v791 = vadd.f32 %v89, %v783
    %v792 = vadd.f32 %v90, %v788
    %v793 = vld [vmem:[#allocation10 + $0xa] sm:$0x1]
    %v794 = vld [vmem:[#allocation10 + $0xb] sm:$0x1]
    %v795 = vsel %vm95, %v791, 0.0
    %796 = vadd.xlane.f32.xlu0 %v795
    %v797 = vpop.xlane.xlu0 %796
    %v798 = vsel %vm95, %v792, 0.0
    %799 = vadd.xlane.f32.xlu0 %v798
    %v800 = vpop.xlane.xlu0 %799
    %v801 = vmul.f32 %v797, %v102
    %v802 = vmul.f32 %v800, %v102
    %v803 = vsub.f32 %v791, %v801
    %v804 = vsub.f32 %v792, %v802
    %v805 = vmul.f32 %v803, %v803
    %v806 = vmul.f32 %v804, %v804
    %v807 = vsel %vm95, %v805, 0.0
    %808 = vadd.xlane.f32.xlu0 %v807
    %v809 = vpop.xlane.xlu0 %808
    %v810 = vsel %vm95, %v806, 0.0
    %811 = vadd.xlane.f32.xlu0 %v810
    %v812 = vpop.xlane.xlu0 %811
    %v813 = vmul.f32 %v809, 0.032258064
    %v814 = vmul.f32 %v812, 0.032258064
    %v815 = vrsqrt.pop %v813
    %v816 = vmul.f32 %v813, %v815
    %vm817 = vcmp.eq.f32.partialorder %v813, inf
    %v818 = vsel %vm817, %v813, %v816
    %vm819 = vcmp.eq.f32.partialorder %v813, 0.0
    %v820 = vand.u32 %v813, 2147483648
    %v821 = vsel %vm819, %v820, %v818
    %v822 = vrsqrt.pop %v814
    %v823 = vmul.f32 %v814, %v822
    %vm824 = vcmp.eq.f32.partialorder %v814, inf
    %v825 = vsel %vm824, %v814, %v823
    %vm826 = vcmp.eq.f32.partialorder %v814, 0.0
    %v827 = vand.u32 %v814, 2147483648
    %v828 = vsel %vm826, %v827, %v825
    %v829 = vadd.f32 %v821, 1000000.0
    %v830 = vadd.f32 %v828, 1000000.0
    %v831 = vrcp.pop %v829
    %v832 = vrcp.pop %v830
    %v833 = vlaneseq
    %v834 = vshrl.u32 %v833, 7
    %v835 = vsub.s32 0, %v834
    %v836 = vrot.slane %v793, %v835
    %v837 = vmul.f32 %v836, %v803
    %v838 = vmul.f32 %v836, %v804
    %v839 = vmul.f32 %v837, %v831
    %v840 = vmul.f32 %v838, %v832
    %v841 = vlaneseq
    %v842 = vshrl.u32 %v841, 7
    %v843 = vsub.s32 0, %v842
    %v844 = vrot.slane %v794, %v843
    %v845 = vadd.f32 %v839, %v844
    %v846 = vadd.f32 %v840, %v844
    %v848 = vsel %vm95, %v845, 0
    %v851 = vsel %vm95, %v846, 0
    %853 = vmatprep.subr.mxu0 0.0
    %854 = vmatpush1.msra.mxu0 0.0
    %855 = vmatprep.subr.mxu0 0.0
    %856 = vmatpush1.msra.mxu0 0.0
    %857 = vmatprep.subr.mxu0 0.0
    %858 = vmatpush1.msra.mxu0 0.0
    %859 = vmatprep.subr.mxu0 0.0
    %860 = vmatpush1.msra.mxu0 0.0
    %861 = vmatprep.subr.mxu0 0.0
    %862 = vmatpush1.msra.mxu0 0.0
    %863 = vmatprep.subr.mxu0 0.0
    %864 = vmatpush1.msra.mxu0 0.0
    %865 = vmatprep.subr.mxu0 0.0
    %866 = vmatpush1.msra.mxu0 0.0
    %867 = vmatprep.subr.mxu0 0.0
    %868 = vmatpush1.msra.mxu0 0.0
    %869 = vmatprep.subr.mxu0 0.0
    %870 = vmatpush1.msra.mxu0 0.0
    %871 = vmatprep.subr.mxu0 0.0
    %872 = vmatpush1.msra.mxu0 0.0
    %873 = vmatprep.subr.mxu0 0.0
    %874 = vmatpush1.msra.mxu0 0.0
    %875 = vmatprep.subr.mxu0 0.0
    %876 = vmatpush1.msra.mxu0 0.0
    %877 = vmatprep.subr.mxu0 0.0
    %878 = vmatpush1.msra.mxu0 %v153
    %879 = vmatprep.subr.mxu0 0.0
    %880 = vmatpush1.msra.mxu0 %v152
    %881 = vmatprep.subr.mxu0 0.0
    %882 = vmatpush1.msra.mxu0 %v151
    %883 = vmatprep.subr.mxu0 0.0
    %884 = vmatpush1.msra.mxu0 %v150
    %885 = vmatprep.subr.mxu0 0.0
    %886 = vmatpush2.msra.mxu0 0.0
    %887 = vmatprep.subr.mxu0 0.0
    %888 = vmatpush2.msra.mxu0 0.0
    %889 = vmatprep.subr.mxu0 0.0
    %890 = vmatpush2.msra.mxu0 0.0
    %891 = vmatprep.subr.mxu0 0.0
    %892 = vmatpush2.msra.mxu0 0.0
    %893 = vmatprep.subr.mxu0 0.0
    %894 = vmatpush2.msra.mxu0 0.0
    %895 = vmatprep.subr.mxu0 0.0
    %896 = vmatpush2.msra.mxu0 0.0
    %897 = vmatprep.subr.mxu0 0.0
    %898 = vmatpush2.msra.mxu0 0.0
    %899 = vmatprep.subr.mxu0 0.0
    %900 = vmatpush2.msra.mxu0 0.0
    %901 = vmatprep.subr.mxu0 0.0
    %902 = vmatpush2.msra.mxu0 0.0
    %903 = vmatprep.subr.mxu0 0.0
    %904 = vmatpush2.msra.mxu0 0.0
    %905 = vmatprep.subr.mxu0 0.0
    %906 = vmatpush2.msra.mxu0 0.0
    %907 = vmatprep.subr.mxu0 0.0
    %908 = vmatpush2.msra.mxu0 0.0
    %909 = vmatprep.subr.mxu0 0.0
    %910 = vmatpush2.msra.mxu0 0.0
    %911 = vmatprep.subr.mxu0 0.0
    %912 = vmatpush2.msra.mxu0 0.0
    %913 = vmatprep.subr.mxu0 0.0
    %914 = vmatpush2.msra.mxu0 0.0
    %915 = vmatprep.subr.mxu0 0.0
    %916 = vmatpush2.msra.mxu0 0.0
    %917 = vmatprep.mubr.f32.mxu0 0.0
    %918 = vmatmul.mubr.f32.gmra.mxu0 %v848
    %v919 = vpop.f32.mrf.mxu0
    %v920 = vadd.f32 %v157, %v919
    %v921 = vpop.f32.mrf.mxu0
    %922 = vmatprep.mubr.f32.mxu0 0.0
    %923 = vmatmul.mubr.f32.gmra.mxu0 %v851
    %v924 = vpop.f32.mrf.mxu0
    %v925 = vadd.f32 %v157, %v924
    %v926 = vpop.f32.mrf.mxu0
    %927 = vdwg.mxu0
    %928 = vrot.lane.b32.xlu0 %v150, 96
    %v929 = vpop.permute.xlu0 %928
    %930 = vrot.lane.b32.xlu0 %v151, 96
    %v931 = vpop.permute.xlu0 %930
    %932 = vrot.lane.b32.xlu0 %v152, 96
    %v933 = vpop.permute.xlu0 %932
    %934 = vrot.lane.b32.xlu0 %v153, 96
    %v935 = vpop.permute.xlu0 %934
    %941 = vrot.lane.b32.xlu0 %v157, 96
    %v942 = vpop.permute.xlu0 %941
    %v945 = vsel %vm95, %v91, 0
    %v948 = vsel %vm95, %v92, 0
    %950 = vmatprep.subr.mxu0 0.0
    %951 = vmatpush1.msra.mxu0 0.0
    %952 = vmatprep.subr.mxu0 0.0
    %953 = vmatpush1.msra.mxu0 0.0
    %954 = vmatprep.subr.mxu0 0.0
    %955 = vmatpush1.msra.mxu0 0.0
    %956 = vmatprep.subr.mxu0 0.0
    %957 = vmatpush1.msra.mxu0 0.0
    %958 = vmatprep.subr.mxu0 0.0
    %959 = vmatpush1.msra.mxu0 0.0
    %960 = vmatprep.subr.mxu0 0.0
    %961 = vmatpush1.msra.mxu0 0.0
    %962 = vmatprep.subr.mxu0 0.0
    %963 = vmatpush1.msra.mxu0 0.0
    %964 = vmatprep.subr.mxu0 0.0
    %965 = vmatpush1.msra.mxu0 0.0
    %966 = vmatprep.subr.mxu0 0.0
    %967 = vmatpush1.msra.mxu0 0.0
    %968 = vmatprep.subr.mxu0 0.0
    %969 = vmatpush1.msra.mxu0 0.0
    %970 = vmatprep.subr.mxu0 0.0
    %971 = vmatpush1.msra.mxu0 0.0
    %972 = vmatprep.subr.mxu0 0.0
    %973 = vmatpush1.msra.mxu0 0.0
    %974 = vmatprep.subr.mxu0 0.0
    %975 = vmatpush1.msra.mxu0 %v935
    %976 = vmatprep.subr.mxu0 0.0
    %977 = vmatpush1.msra.mxu0 %v933
    %978 = vmatprep.subr.mxu0 0.0
    %979 = vmatpush1.msra.mxu0 %v931
    %980 = vmatprep.subr.mxu0 0.0
    %981 = vmatpush1.msra.mxu0 %v929
    %982 = vmatprep.subr.mxu0 0.0
    %983 = vmatpush2.msra.mxu0 0.0
    %984 = vmatprep.subr.mxu0 0.0
    %985 = vmatpush2.msra.mxu0 0.0
    %986 = vmatprep.subr.mxu0 0.0
    %987 = vmatpush2.msra.mxu0 0.0
    %988 = vmatprep.subr.mxu0 0.0
    %989 = vmatpush2.msra.mxu0 0.0
    %990 = vmatprep.subr.mxu0 0.0
    %991 = vmatpush2.msra.mxu0 0.0
    %992 = vmatprep.subr.mxu0 0.0
    %993 = vmatpush2.msra.mxu0 0.0
    %994 = vmatprep.subr.mxu0 0.0
    %995 = vmatpush2.msra.mxu0 0.0
    %996 = vmatprep.subr.mxu0 0.0
    %997 = vmatpush2.msra.mxu0 0.0
    %998 = vmatprep.subr.mxu0 0.0
    %999 = vmatpush2.msra.mxu0 0.0
    %1000 = vmatprep.subr.mxu0 0.0
    %1001 = vmatpush2.msra.mxu0 0.0
    %1002 = vmatprep.subr.mxu0 0.0
    %1003 = vmatpush2.msra.mxu0 0.0
    %1004 = vmatprep.subr.mxu0 0.0
    %1005 = vmatpush2.msra.mxu0 0.0
    %1006 = vmatprep.subr.mxu0 0.0
    %1007 = vmatpush2.msra.mxu0 0.0
    %1008 = vmatprep.subr.mxu0 0.0
    %1009 = vmatpush2.msra.mxu0 0.0
    %1010 = vmatprep.subr.mxu0 0.0
    %1011 = vmatpush2.msra.mxu0 0.0
    %1012 = vmatprep.subr.mxu0 0.0
    %1013 = vmatpush2.msra.mxu0 0.0
    %1014 = vmatprep.mubr.f32.mxu0 0.0
    %1015 = vmatmul.mubr.f32.gmra.mxu0 %v945
    %v1016 = vpop.f32.mrf.mxu0
    %v1017 = vadd.f32 %v942, %v1016
    %v1018 = vpop.f32.mrf.mxu0
    %1019 = vmatprep.mubr.f32.mxu0 0.0
    %1020 = vmatmul.mubr.f32.gmra.mxu0 %v948
    %v1021 = vpop.f32.mrf.mxu0
    %v1022 = vadd.f32 %v942, %v1021
    %v1023 = vpop.f32.mrf.mxu0
    %1024 = vdwg.mxu0
    %1027 = vrot.lane.b32.xlu0 %v920, 120
    %v1028 = vpop.permute.xlu0 %1027
    %1029 = vrot.lane.b32.xlu0 %v925, 120
    %v1030 = vpop.permute.xlu0 %1029
    %1031 = vrot.lane.b32.xlu0 %v920, 112
    %v1032 = vpop.permute.xlu0 %1031
    %1033 = vrot.lane.b32.xlu0 %v925, 112
    %v1034 = vpop.permute.xlu0 %1033
    %1035 = vrot.lane.b32.xlu0 %v920, 104
    %v1036 = vpop.permute.xlu0 %1035
    %1037 = vrot.lane.b32.xlu0 %v925, 104
    %v1038 = vpop.permute.xlu0 %1037
    %1041 = vrot.lane.b32.xlu0 %v1017, 120
    %v1042 = vpop.permute.xlu0 %1041
    %1043 = vrot.lane.b32.xlu0 %v1022, 120
    %v1044 = vpop.permute.xlu0 %1043
    %1045 = vrot.lane.b32.xlu0 %v1017, 112
    %v1046 = vpop.permute.xlu0 %1045
    %1047 = vrot.lane.b32.xlu0 %v1022, 112
    %v1048 = vpop.permute.xlu0 %1047
    %1049 = vrot.lane.b32.xlu0 %v1017, 104
    %v1050 = vpop.permute.xlu0 %1049
    %1051 = vrot.lane.b32.xlu0 %v1022, 104
    %v1052 = vpop.permute.xlu0 %1051
    %s1053 = scalar_lea.vmem [#allocation7], 64
    %v1054 = vld [vmem:[%s1053] sm:$0xff]
    %v1055 = vld [vmem:[%s1053 + $0x8] sm:$0xff]
    %v1056 = vld [vmem:[%s1053 + $0x10] sm:$0xff]
    %v1057 = vld [vmem:[%s1053 + $0x18] sm:$0xff]
    %v1058 = vld [vmem:[%s1053 + $0x20] sm:$0xff]
    %v1059 = vld [vmem:[%s1053 + $0x28] sm:$0xff]
    %v1060 = vld [vmem:[%s1053 + $0x30] sm:$0xff]
    %v1061 = vld [vmem:[%s1053 + $0x38] sm:$0xff]
    %v1062 = vsel %vm277, %v920, 0
    %v1064 = vsel %vm277, %v925, 0
    %v1066 = vsel %vm277, %v1028, 0
    %v1068 = vsel %vm277, %v1030, 0
    %v1070 = vsel %vm277, %v1032, 0
    %v1072 = vsel %vm277, %v1034, 0
    %v1074 = vsel %vm277, %v1036, 0
    %v1076 = vsel %vm277, %v1038, 0
    %v1078 = vsel %vm277, %v1017, 0
    %v1080 = vsel %vm277, %v1022, 0
    %v1082 = vsel %vm277, %v1042, 0
    %v1084 = vsel %vm277, %v1044, 0
    %v1086 = vsel %vm277, %v1046, 0
    %v1088 = vsel %vm277, %v1048, 0
    %v1090 = vsel %vm277, %v1050, 0
    %v1092 = vsel %vm277, %v1052, 0
    %1094 = vmatprep.subr.mxu0 0.0
    %1095 = vmatpush1.xpose.msra.mxu0 0.0
    %1096 = vmatprep.subr.mxu0 0.0
    %1097 = vmatpush1.xpose.msra.mxu0 0.0
    %1098 = vmatprep.subr.mxu0 0.0
    %1099 = vmatpush1.xpose.msra.mxu0 0.0
    %1100 = vmatprep.subr.mxu0 0.0
    %1101 = vmatpush1.xpose.msra.mxu0 0.0
    %1102 = vmatprep.subr.mxu0 0.0
    %1103 = vmatpush1.xpose.msra.mxu0 0.0
    %1104 = vmatprep.subr.mxu0 0.0
    %1105 = vmatpush1.xpose.msra.mxu0 0.0
    %1106 = vmatprep.subr.mxu0 0.0
    %1107 = vmatpush1.xpose.msra.mxu0 0.0
    %1108 = vmatprep.subr.mxu0 0.0
    %1109 = vmatpush1.xpose.msra.mxu0 0.0
    %1110 = vmatprep.subr.mxu0 0.0
    %1111 = vmatpush1.xpose.msra.mxu0 %v1092
    %1112 = vmatprep.subr.mxu0 0.0
    %1113 = vmatpush1.xpose.msra.mxu0 %v1090
    %1114 = vmatprep.subr.mxu0 0.0
    %1115 = vmatpush1.xpose.msra.mxu0 %v1088
    %1116 = vmatprep.subr.mxu0 0.0
    %1117 = vmatpush1.xpose.msra.mxu0 %v1086
    %1118 = vmatprep.subr.mxu0 0.0
    %1119 = vmatpush1.xpose.msra.mxu0 %v1084
    %1120 = vmatprep.subr.mxu0 0.0
    %1121 = vmatpush1.xpose.msra.mxu0 %v1082
    %1122 = vmatprep.subr.mxu0 0.0
    %1123 = vmatpush1.xpose.msra.mxu0 %v1080
    %1124 = vmatprep.subr.mxu0 0.0
    %1125 = vmatpush1.xpose.msra.mxu0 %v1078
    %1126 = vmatprep.subr.mxu0 0.0
    %1127 = vmatpush2.xpose.msra.mxu0 0.0
    %1128 = vmatprep.subr.mxu0 0.0
    %1129 = vmatpush2.xpose.msra.mxu0 0.0
    %1130 = vmatprep.subr.mxu0 0.0
    %1131 = vmatpush2.xpose.msra.mxu0 0.0
    %1132 = vmatprep.subr.mxu0 0.0
    %1133 = vmatpush2.xpose.msra.mxu0 0.0
    %1134 = vmatprep.subr.mxu0 0.0
    %1135 = vmatpush2.xpose.msra.mxu0 0.0
    %1136 = vmatprep.subr.mxu0 0.0
    %1137 = vmatpush2.xpose.msra.mxu0 0.0
    %1138 = vmatprep.subr.mxu0 0.0
    %1139 = vmatpush2.xpose.msra.mxu0 0.0
    %1140 = vmatprep.subr.mxu0 0.0
    %1141 = vmatpush2.xpose.msra.mxu0 0.0
    %1142 = vmatprep.subr.mxu0 0.0
    %1143 = vmatpush2.xpose.msra.mxu0 0.0
    %1144 = vmatprep.subr.mxu0 0.0
    %1145 = vmatpush2.xpose.msra.mxu0 0.0
    %1146 = vmatprep.subr.mxu0 0.0
    %1147 = vmatpush2.xpose.msra.mxu0 0.0
    %1148 = vmatprep.subr.mxu0 0.0
    %1149 = vmatpush2.xpose.msra.mxu0 0.0
    %1150 = vmatprep.subr.mxu0 0.0
    %1151 = vmatpush2.xpose.msra.mxu0 0.0
    %1152 = vmatprep.subr.mxu0 0.0
    %1153 = vmatpush2.xpose.msra.mxu0 0.0
    %1154 = vmatprep.subr.mxu0 0.0
    %1155 = vmatpush2.xpose.msra.mxu0 0.0
    %1156 = vmatprep.subr.mxu0 0.0
    %1157 = vmatpush2.xpose.msra.mxu0 0.0
    %1158 = vmatprep.mubr.f32.mxu0 0.0
    %1159 = vmatmul.mubr.f32.gmra.mxu0 %v1062
    %v1160 = vpop.f32.mrf.mxu0
    %v1161 = vadd.f32 %v1054, %v1160
    %v1162 = vpop.f32.mrf.mxu0
    %1163 = vmatprep.mubr.f32.mxu0 0.0
    %1164 = vmatmul.mubr.f32.gmra.mxu0 %v1064
    %v1165 = vpop.f32.mrf.mxu0
    %v1166 = vadd.f32 %v1055, %v1165
    %v1167 = vpop.f32.mrf.mxu0
    %1168 = vmatprep.mubr.f32.mxu0 0.0
    %1169 = vmatmul.mubr.f32.gmra.mxu0 %v1066
    %v1170 = vpop.f32.mrf.mxu0
    %v1171 = vadd.f32 %v1056, %v1170
    %v1172 = vpop.f32.mrf.mxu0
    %1173 = vmatprep.mubr.f32.mxu0 0.0
    %1174 = vmatmul.mubr.f32.gmra.mxu0 %v1068
    %v1175 = vpop.f32.mrf.mxu0
    %v1176 = vadd.f32 %v1057, %v1175
    %v1177 = vpop.f32.mrf.mxu0
    %1178 = vmatprep.mubr.f32.mxu0 0.0
    %1179 = vmatmul.mubr.f32.gmra.mxu0 %v1070
    %v1180 = vpop.f32.mrf.mxu0
    %v1181 = vadd.f32 %v1058, %v1180
    %v1182 = vpop.f32.mrf.mxu0
    %1183 = vmatprep.mubr.f32.mxu0 0.0
    %1184 = vmatmul.mubr.f32.gmra.mxu0 %v1072
    %v1185 = vpop.f32.mrf.mxu0
    %v1186 = vadd.f32 %v1059, %v1185
    %v1187 = vpop.f32.mrf.mxu0
    %1188 = vmatprep.mubr.f32.mxu0 0.0
    %1189 = vmatmul.mubr.f32.gmra.mxu0 %v1074
    %v1190 = vpop.f32.mrf.mxu0
    %v1191 = vadd.f32 %v1060, %v1190
    %v1192 = vpop.f32.mrf.mxu0
    %1193 = vmatprep.mubr.f32.mxu0 0.0
    %1194 = vmatmul.mubr.f32.gmra.mxu0 %v1076
    %v1195 = vpop.f32.mrf.mxu0
    %v1196 = vadd.f32 %v1061, %v1195
    %v1197 = vpop.f32.mrf.mxu0
    %1198 = vdwg.mxu0
    %v1199 = vsel %vm415, %v1161, -inf
    %1200 = vmax.xlane.f32.xlu0 %v1199
    %v1201 = vpop.xlane.xlu0 %1200
    %v1202 = vsel %vm415, %v1166, -inf
    %1203 = vmax.xlane.f32.xlu0 %v1202
    %v1204 = vpop.xlane.xlu0 %1203
    %v1205 = vsel %vm415, %v1171, -inf
    %1206 = vmax.xlane.f32.xlu0 %v1205
    %v1207 = vpop.xlane.xlu0 %1206
    %v1208 = vsel %vm415, %v1176, -inf
    %1209 = vmax.xlane.f32.xlu0 %v1208
    %v1210 = vpop.xlane.xlu0 %1209
    %v1211 = vsel %vm415, %v1181, -inf
    %1212 = vmax.xlane.f32.xlu0 %v1211
    %v1213 = vpop.xlane.xlu0 %1212
    %v1214 = vsel %vm415, %v1186, -inf
    %1215 = vmax.xlane.f32.xlu0 %v1214
    %v1216 = vpop.xlane.xlu0 %1215
    %v1217 = vsel %vm415, %v1191, -inf
    %1218 = vmax.xlane.f32.xlu0 %v1217
    %v1219 = vpop.xlane.xlu0 %1218
    %v1220 = vsel %vm415, %v1196, -inf
    %1221 = vmax.xlane.f32.xlu0 %v1220
    %v1222 = vpop.xlane.xlu0 %1221
    %v1223 = vsub.f32 %v1161, %v1201
    %v1224 = vsub.f32 %v1166, %v1204
    %v1225 = vsub.f32 %v1171, %v1207
    %v1226 = vsub.f32 %v1176, %v1210
    %v1227 = vsub.f32 %v1181, %v1213
    %v1228 = vsub.f32 %v1186, %v1216
    %v1229 = vsub.f32 %v1191, %v1219
    %v1230 = vsub.f32 %v1196, %v1222
    %v1231 = vmul.f32 %v1223, 1.442695
    %v1232 = vpow.pop %v1231
    %v1233 = vmul.f32 %v1224, 1.442695
    %v1234 = vpow.pop %v1233
    %v1235 = vmul.f32 %v1225, 1.442695
    %v1236 = vpow.pop %v1235
    %v1237 = vmul.f32 %v1226, 1.442695
    %v1238 = vpow.pop %v1237
    %v1239 = vmul.f32 %v1227, 1.442695
    %v1240 = vpow.pop %v1239
    %v1241 = vmul.f32 %v1228, 1.442695
    %v1242 = vpow.pop %v1241
    %v1243 = vmul.f32 %v1229, 1.442695
    %v1244 = vpow.pop %v1243
    %v1245 = vmul.f32 %v1230, 1.442695
    %v1246 = vpow.pop %v1245
    %v1247 = vsel %vm415, %v1232, 0.0
    %1248 = vadd.xlane.f32.xlu0 %v1247
    %v1249 = vpop.xlane.xlu0 %1248
    %v1250 = vsel %vm415, %v1234, 0.0
    %1251 = vadd.xlane.f32.xlu0 %v1250
    %v1252 = vpop.xlane.xlu0 %1251
    %v1253 = vsel %vm415, %v1236, 0.0
    %1254 = vadd.xlane.f32.xlu0 %v1253
    %v1255 = vpop.xlane.xlu0 %1254
    %v1256 = vsel %vm415, %v1238, 0.0
    %1257 = vadd.xlane.f32.xlu0 %v1256
    %v1258 = vpop.xlane.xlu0 %1257
    %v1259 = vsel %vm415, %v1240, 0.0
    %1260 = vadd.xlane.f32.xlu0 %v1259
    %v1261 = vpop.xlane.xlu0 %1260
    %v1262 = vsel %vm415, %v1242, 0.0
    %1263 = vadd.xlane.f32.xlu0 %v1262
    %v1264 = vpop.xlane.xlu0 %1263
    %v1265 = vsel %vm415, %v1244, 0.0
    %1266 = vadd.xlane.f32.xlu0 %v1265
    %v1267 = vpop.xlane.xlu0 %1266
    %v1268 = vsel %vm415, %v1246, 0.0
    %1269 = vadd.xlane.f32.xlu0 %v1268
    %v1270 = vpop.xlane.xlu0 %1269
    %v1271 = vrcp.pop %v1249
    %v1272 = vrcp.pop %v1252
    %v1273 = vrcp.pop %v1255
    %v1274 = vrcp.pop %v1258
    %v1275 = vrcp.pop %v1261
    %v1276 = vrcp.pop %v1264
    %v1277 = vrcp.pop %v1267
    %v1278 = vrcp.pop %v1270
    %v1279 = vmul.f32 %v1232, %v1271
    %v1280 = vmul.f32 %v1234, %v1272
    %v1281 = vmul.f32 %v1236, %v1273
    %v1282 = vmul.f32 %v1238, %v1274
    %v1283 = vmul.f32 %v1240, %v1275
    %v1284 = vmul.f32 %v1242, %v1276
    %v1285 = vmul.f32 %v1244, %v1277
    %v1286 = vmul.f32 %v1246, %v1278
    %1287 = vrot.lane.b32.xlu0 %v1017, 96
    %v1288 = vpop.permute.xlu0 %1287
    %1289 = vrot.lane.b32.xlu0 %v1022, 96
    %v1290 = vpop.permute.xlu0 %1289
    %1291 = vrot.lane.b32.xlu0 %v1042, 96
    %v1292 = vpop.permute.xlu0 %1291
    %1293 = vrot.lane.b32.xlu0 %v1044, 96
    %v1294 = vpop.permute.xlu0 %1293
    %1295 = vrot.lane.b32.xlu0 %v1046, 96
    %v1296 = vpop.permute.xlu0 %1295
    %1297 = vrot.lane.b32.xlu0 %v1048, 96
    %v1298 = vpop.permute.xlu0 %1297
    %1299 = vrot.lane.b32.xlu0 %v1050, 96
    %v1300 = vpop.permute.xlu0 %1299
    %1301 = vrot.lane.b32.xlu0 %v1052, 96
    %v1302 = vpop.permute.xlu0 %1301
    %v1312 = vsel %vm415, %v1279, 0
    %v1315 = vsel %vm415, %v1280, 0
    %v1318 = vsel %vm415, %v1281, 0
    %v1321 = vsel %vm415, %v1282, 0
    %v1324 = vsel %vm415, %v1283, 0
    %v1327 = vsel %vm415, %v1284, 0
    %v1330 = vsel %vm415, %v1285, 0
    %v1333 = vsel %vm415, %v1286, 0
    %1335 = vmatprep.subr.mxu0 0.0
    %1336 = vmatpush1.msra.mxu0 0.0
    %1337 = vmatprep.subr.mxu0 0.0
    %1338 = vmatpush1.msra.mxu0 0.0
    %1339 = vmatprep.subr.mxu0 0.0
    %1340 = vmatpush1.msra.mxu0 0.0
    %1341 = vmatprep.subr.mxu0 0.0
    %1342 = vmatpush1.msra.mxu0 0.0
    %1343 = vmatprep.subr.mxu0 0.0
    %1344 = vmatpush1.msra.mxu0 0.0
    %1345 = vmatprep.subr.mxu0 0.0
    %1346 = vmatpush1.msra.mxu0 0.0
    %1347 = vmatprep.subr.mxu0 0.0
    %1348 = vmatpush1.msra.mxu0 0.0
    %1349 = vmatprep.subr.mxu0 0.0
    %1350 = vmatpush1.msra.mxu0 0.0
    %1351 = vmatprep.subr.mxu0 0.0
    %1352 = vmatpush1.msra.mxu0 %v1302
    %1353 = vmatprep.subr.mxu0 0.0
    %1354 = vmatpush1.msra.mxu0 %v1300
    %1355 = vmatprep.subr.mxu0 0.0
    %1356 = vmatpush1.msra.mxu0 %v1298
    %1357 = vmatprep.subr.mxu0 0.0
    %1358 = vmatpush1.msra.mxu0 %v1296
    %1359 = vmatprep.subr.mxu0 0.0
    %1360 = vmatpush1.msra.mxu0 %v1294
    %1361 = vmatprep.subr.mxu0 0.0
    %1362 = vmatpush1.msra.mxu0 %v1292
    %1363 = vmatprep.subr.mxu0 0.0
    %1364 = vmatpush1.msra.mxu0 %v1290
    %1365 = vmatprep.subr.mxu0 0.0
    %1366 = vmatpush1.msra.mxu0 %v1288
    %1367 = vmatprep.subr.mxu0 0.0
    %1368 = vmatpush2.msra.mxu0 0.0
    %1369 = vmatprep.subr.mxu0 0.0
    %1370 = vmatpush2.msra.mxu0 0.0
    %1371 = vmatprep.subr.mxu0 0.0
    %1372 = vmatpush2.msra.mxu0 0.0
    %1373 = vmatprep.subr.mxu0 0.0
    %1374 = vmatpush2.msra.mxu0 0.0
    %1375 = vmatprep.subr.mxu0 0.0
    %1376 = vmatpush2.msra.mxu0 0.0
    %1377 = vmatprep.subr.mxu0 0.0
    %1378 = vmatpush2.msra.mxu0 0.0
    %1379 = vmatprep.subr.mxu0 0.0
    %1380 = vmatpush2.msra.mxu0 0.0
    %1381 = vmatprep.subr.mxu0 0.0
    %1382 = vmatpush2.msra.mxu0 0.0
    %1383 = vmatprep.subr.mxu0 0.0
    %1384 = vmatpush2.msra.mxu0 0.0
    %1385 = vmatprep.subr.mxu0 0.0
    %1386 = vmatpush2.msra.mxu0 0.0
    %1387 = vmatprep.subr.mxu0 0.0
    %1388 = vmatpush2.msra.mxu0 0.0
    %1389 = vmatprep.subr.mxu0 0.0
    %1390 = vmatpush2.msra.mxu0 0.0
    %1391 = vmatprep.subr.mxu0 0.0
    %1392 = vmatpush2.msra.mxu0 0.0
    %1393 = vmatprep.subr.mxu0 0.0
    %1394 = vmatpush2.msra.mxu0 0.0
    %1395 = vmatprep.subr.mxu0 0.0
    %1396 = vmatpush2.msra.mxu0 0.0
    %1397 = vmatprep.subr.mxu0 0.0
    %1398 = vmatpush2.msra.mxu0 0.0
    %1399 = vmatprep.mubr.f32.mxu0 0.0
    %1400 = vmatmul.mubr.f32.gmra.mxu0 %v1312
    %v1401 = vpop.f32.mrf.mxu0
    %v1402 = vadd.f32 0.0, %v1401
    %v1403 = vpop.f32.mrf.mxu0
    %1404 = vmatprep.mubr.f32.mxu0 0.0
    %1405 = vmatmul.mubr.f32.gmra.mxu0 %v1315
    %v1406 = vpop.f32.mrf.mxu0
    %v1407 = vadd.f32 0.0, %v1406
    %v1408 = vpop.f32.mrf.mxu0
    %1409 = vmatprep.mubr.f32.mxu0 0.0
    %1410 = vmatmul.mubr.f32.gmra.mxu0 %v1318
    %v1411 = vpop.f32.mrf.mxu0
    %v1412 = vadd.f32 0.0, %v1411
    %v1413 = vpop.f32.mrf.mxu0
    %1414 = vmatprep.mubr.f32.mxu0 0.0
    %1415 = vmatmul.mubr.f32.gmra.mxu0 %v1321
    %v1416 = vpop.f32.mrf.mxu0
    %v1417 = vadd.f32 0.0, %v1416
    %v1418 = vpop.f32.mrf.mxu0
    %1419 = vmatprep.mubr.f32.mxu0 0.0
    %1420 = vmatmul.mubr.f32.gmra.mxu0 %v1324
    %v1421 = vpop.f32.mrf.mxu0
    %v1422 = vadd.f32 0.0, %v1421
    %v1423 = vpop.f32.mrf.mxu0
    %1424 = vmatprep.mubr.f32.mxu0 0.0
    %1425 = vmatmul.mubr.f32.gmra.mxu0 %v1327
    %v1426 = vpop.f32.mrf.mxu0
    %v1427 = vadd.f32 0.0, %v1426
    %v1428 = vpop.f32.mrf.mxu0
    %1429 = vmatprep.mubr.f32.mxu0 0.0
    %1430 = vmatmul.mubr.f32.gmra.mxu0 %v1330
    %v1431 = vpop.f32.mrf.mxu0
    %v1432 = vadd.f32 0.0, %v1431
    %v1433 = vpop.f32.mrf.mxu0
    %1434 = vmatprep.mubr.f32.mxu0 0.0
    %1435 = vmatmul.mubr.f32.gmra.mxu0 %v1333
    %v1436 = vpop.f32.mrf.mxu0
    %v1437 = vadd.f32 0.0, %v1436
    %v1438 = vpop.f32.mrf.mxu0
    %1439 = vdwg.mxu0
    %1442 = vrot.lane.b32.xlu0 %v1412, 8
    %v1443 = vpop.permute.xlu0 %1442
    %1444 = vrot.lane.b32.xlu0 %v1417, 8
    %v1445 = vpop.permute.xlu0 %1444
    %1450 = vrot.lane.b32.xlu0 %v1422, 16
    %v1451 = vpop.permute.xlu0 %1450
    %1452 = vrot.lane.b32.xlu0 %v1427, 16
    %v1453 = vpop.permute.xlu0 %1452
    %1458 = vrot.lane.b32.xlu0 %v1432, 24
    %v1459 = vpop.permute.xlu0 %1458
    %1460 = vrot.lane.b32.xlu0 %v1437, 24
    %v1461 = vpop.permute.xlu0 %1460
    %v1464 = vsel %vm277, %v1402, %v1443
    %v1465 = vsel %vm277, %v1407, %v1445
    %v1466 = vsel %vm683, %v1464, %v1451
    %v1467 = vsel %vm683, %v1465, %v1453
    %v1468 = vsel %vm686, %v1466, %v1459
    %v1469 = vsel %vm686, %v1467, %v1461
    %v1471 = vsel %vm95, %v1468, 0
    %v1474 = vsel %vm95, %v1469, 0
    %1476 = vmatprep.subr.mxu0 0.0
    %1477 = vmatpush1.msra.mxu0 0.0
    %1478 = vmatprep.subr.mxu0 0.0
    %1479 = vmatpush1.msra.mxu0 0.0
    %1480 = vmatprep.subr.mxu0 0.0
    %1481 = vmatpush1.msra.mxu0 0.0
    %1482 = vmatprep.subr.mxu0 0.0
    %1483 = vmatpush1.msra.mxu0 0.0
    %1484 = vmatprep.subr.mxu0 0.0
    %1485 = vmatpush1.msra.mxu0 0.0
    %1486 = vmatprep.subr.mxu0 0.0
    %1487 = vmatpush1.msra.mxu0 0.0
    %1488 = vmatprep.subr.mxu0 0.0
    %1489 = vmatpush1.msra.mxu0 0.0
    %1490 = vmatprep.subr.mxu0 0.0
    %1491 = vmatpush1.msra.mxu0 0.0
    %1492 = vmatprep.subr.mxu0 0.0
    %1493 = vmatpush1.msra.mxu0 0.0
    %1494 = vmatprep.subr.mxu0 0.0
    %1495 = vmatpush1.msra.mxu0 0.0
    %1496 = vmatprep.subr.mxu0 0.0
    %1497 = vmatpush1.msra.mxu0 0.0
    %1498 = vmatprep.subr.mxu0 0.0
    %1499 = vmatpush1.msra.mxu0 0.0
    %1500 = vmatprep.subr.mxu0 0.0
    %1501 = vmatpush1.msra.mxu0 %v705
    %1502 = vmatprep.subr.mxu0 0.0
    %1503 = vmatpush1.msra.mxu0 %v703
    %1504 = vmatprep.subr.mxu0 0.0
    %1505 = vmatpush1.msra.mxu0 %v701
    %1506 = vmatprep.subr.mxu0 0.0
    %1507 = vmatpush1.msra.mxu0 %v699
    %1508 = vmatprep.subr.mxu0 0.0
    %1509 = vmatpush2.msra.mxu0 0.0
    %1510 = vmatprep.subr.mxu0 0.0
    %1511 = vmatpush2.msra.mxu0 0.0
    %1512 = vmatprep.subr.mxu0 0.0
    %1513 = vmatpush2.msra.mxu0 0.0
    %1514 = vmatprep.subr.mxu0 0.0
    %1515 = vmatpush2.msra.mxu0 0.0
    %1516 = vmatprep.subr.mxu0 0.0
    %1517 = vmatpush2.msra.mxu0 0.0
    %1518 = vmatprep.subr.mxu0 0.0
    %1519 = vmatpush2.msra.mxu0 0.0
    %1520 = vmatprep.subr.mxu0 0.0
    %1521 = vmatpush2.msra.mxu0 0.0
    %1522 = vmatprep.subr.mxu0 0.0
    %1523 = vmatpush2.msra.mxu0 0.0
    %1524 = vmatprep.subr.mxu0 0.0
    %1525 = vmatpush2.msra.mxu0 0.0
    %1526 = vmatprep.subr.mxu0 0.0
    %1527 = vmatpush2.msra.mxu0 0.0
    %1528 = vmatprep.subr.mxu0 0.0
    %1529 = vmatpush2.msra.mxu0 0.0
    %1530 = vmatprep.subr.mxu0 0.0
    %1531 = vmatpush2.msra.mxu0 0.0
    %1532 = vmatprep.subr.mxu0 0.0
    %1533 = vmatpush2.msra.mxu0 0.0
    %1534 = vmatprep.subr.mxu0 0.0
    %1535 = vmatpush2.msra.mxu0 0.0
    %1536 = vmatprep.subr.mxu0 0.0
    %1537 = vmatpush2.msra.mxu0 0.0
    %1538 = vmatprep.subr.mxu0 0.0
    %1539 = vmatpush2.msra.mxu0 0.0
    %1540 = vmatprep.mubr.f32.mxu0 0.0
    %1541 = vmatmul.mubr.f32.gmra.mxu0 %v1471
    %v1542 = vpop.f32.mrf.mxu0
    %v1543 = vadd.f32 %v693, %v1542
    %v1544 = vpop.f32.mrf.mxu0
    %1545 = vmatprep.mubr.f32.mxu0 0.0
    %1546 = vmatmul.mubr.f32.gmra.mxu0 %v1474
    %v1547 = vpop.f32.mrf.mxu0
    %v1548 = vadd.f32 %v693, %v1547
    %v1549 = vpop.f32.mrf.mxu0
    %1550 = vdwg.mxu0
    %v1551 = vadd.f32 %v791, %v1543
    %v1552 = vadd.f32 %v792, %v1548
    %v1553 = vld [vmem:[#allocation10 + $0xc] sm:$0x1]
    %v1554 = vld [vmem:[#allocation10 + $0xd] sm:$0x1]
    %v1555 = vsel %vm95, %v1551, 0.0
    %1556 = vadd.xlane.f32.xlu0 %v1555
    %v1557 = vpop.xlane.xlu0 %1556
    %v1558 = vsel %vm95, %v1552, 0.0
    %1559 = vadd.xlane.f32.xlu0 %v1558
    %v1560 = vpop.xlane.xlu0 %1559
    %v1561 = vmul.f32 %v1557, %v102
    %v1562 = vmul.f32 %v1560, %v102
    %v1563 = vsub.f32 %v1551, %v1561
    %v1564 = vsub.f32 %v1552, %v1562
    %v1565 = vmul.f32 %v1563, %v1563
    %v1566 = vmul.f32 %v1564, %v1564
    %v1567 = vsel %vm95, %v1565, 0.0
    %1568 = vadd.xlane.f32.xlu0 %v1567
    %v1569 = vpop.xlane.xlu0 %1568
    %v1570 = vsel %vm95, %v1566, 0.0
    %1571 = vadd.xlane.f32.xlu0 %v1570
    %v1572 = vpop.xlane.xlu0 %1571
    %v1573 = vmul.f32 %v1569, 0.032258064
    %v1574 = vmul.f32 %v1572, 0.032258064
    %v1575 = vrsqrt.pop %v1573
    %v1576 = vmul.f32 %v1573, %v1575
    %vm1577 = vcmp.eq.f32.partialorder %v1573, inf
    %v1578 = vsel %vm1577, %v1573, %v1576
    %vm1579 = vcmp.eq.f32.partialorder %v1573, 0.0
    %v1580 = vand.u32 %v1573, 2147483648
    %v1581 = vsel %vm1579, %v1580, %v1578
    %v1582 = vrsqrt.pop %v1574
    %v1583 = vmul.f32 %v1574, %v1582
    %vm1584 = vcmp.eq.f32.partialorder %v1574, inf
    %v1585 = vsel %vm1584, %v1574, %v1583
    %vm1586 = vcmp.eq.f32.partialorder %v1574, 0.0
    %v1587 = vand.u32 %v1574, 2147483648
    %v1588 = vsel %vm1586, %v1587, %v1585
    %v1589 = vadd.f32 %v1581, 1000000.0
    %v1590 = vadd.f32 %v1588, 1000000.0
    %v1591 = vrcp.pop %v1589
    %v1592 = vrcp.pop %v1590
    %v1593 = vlaneseq
    %v1594 = vshrl.u32 %v1593, 7
    %v1595 = vsub.s32 0, %v1594
    %v1596 = vrot.slane %v1553, %v1595
    %v1597 = vmul.f32 %v1596, %v1563
    %v1598 = vmul.f32 %v1596, %v1564
    %v1599 = vmul.f32 %v1597, %v1591
    %v1600 = vmul.f32 %v1598, %v1592
    %v1601 = vlaneseq
    %v1602 = vshrl.u32 %v1601, 7
    %v1603 = vsub.s32 0, %v1602
    %v1604 = vrot.slane %v1554, %v1603
    %v1605 = vadd.f32 %v1599, %v1604
    %v1606 = vadd.f32 %v1600, %v1604
    %v1607 = vld [vmem:[#allocation8 + $0x8] sm:$0xff]
    %v1608 = vld [vmem:[#allocation8 + $0x18] sm:$0xff]
    %v1609 = vld [vmem:[#allocation8 + $0x28] sm:$0xff]
    %v1610 = vld [vmem:[#allocation8 + $0x38] sm:$0xff]
    %v1611 = vld [vmem:[#allocation10 + $0x1] sm:$0x1]
    %v1612 = vlaneseq
    %v1613 = vshrl.u32 %v1612, 7
    %v1614 = vsub.s32 0, %v1613
    %v1615 = vrot.slane %v1611, %v1614
    %v1617 = vsel %vm95, %v1605, 0
    %v1620 = vsel %vm95, %v1606, 0
    %1622 = vmatprep.subr.mxu0 0.0
    %1623 = vmatpush1.msra.mxu0 0.0
    %1624 = vmatprep.subr.mxu0 0.0
    %1625 = vmatpush1.msra.mxu0 0.0
    %1626 = vmatprep.subr.mxu0 0.0
    %1627 = vmatpush1.msra.mxu0 0.0
    %1628 = vmatprep.subr.mxu0 0.0
    %1629 = vmatpush1.msra.mxu0 0.0
    %1630 = vmatprep.subr.mxu0 0.0
    %1631 = vmatpush1.msra.mxu0 0.0
    %1632 = vmatprep.subr.mxu0 0.0
    %1633 = vmatpush1.msra.mxu0 0.0
    %1634 = vmatprep.subr.mxu0 0.0
    %1635 = vmatpush1.msra.mxu0 0.0
    %1636 = vmatprep.subr.mxu0 0.0
    %1637 = vmatpush1.msra.mxu0 0.0
    %1638 = vmatprep.subr.mxu0 0.0
    %1639 = vmatpush1.msra.mxu0 0.0
    %1640 = vmatprep.subr.mxu0 0.0
    %1641 = vmatpush1.msra.mxu0 0.0
    %1642 = vmatprep.subr.mxu0 0.0
    %1643 = vmatpush1.msra.mxu0 0.0
    %1644 = vmatprep.subr.mxu0 0.0
    %1645 = vmatpush1.msra.mxu0 0.0
    %1646 = vmatprep.subr.mxu0 0.0
    %1647 = vmatpush1.msra.mxu0 %v1610
    %1648 = vmatprep.subr.mxu0 0.0
    %1649 = vmatpush1.msra.mxu0 %v1609
    %1650 = vmatprep.subr.mxu0 0.0
    %1651 = vmatpush1.msra.mxu0 %v1608
    %1652 = vmatprep.subr.mxu0 0.0
    %1653 = vmatpush1.msra.mxu0 %v1607
    %1654 = vmatprep.subr.mxu0 0.0
    %1655 = vmatpush2.msra.mxu0 0.0
    %1656 = vmatprep.subr.mxu0 0.0
    %1657 = vmatpush2.msra.mxu0 0.0
    %1658 = vmatprep.subr.mxu0 0.0
    %1659 = vmatpush2.msra.mxu0 0.0
    %1660 = vmatprep.subr.mxu0 0.0
    %1661 = vmatpush2.msra.mxu0 0.0
    %1662 = vmatprep.subr.mxu0 0.0
    %1663 = vmatpush2.msra.mxu0 0.0
    %1664 = vmatprep.subr.mxu0 0.0
    %1665 = vmatpush2.msra.mxu0 0.0
    %1666 = vmatprep.subr.mxu0 0.0
    %1667 = vmatpush2.msra.mxu0 0.0
    %1668 = vmatprep.subr.mxu0 0.0
    %1669 = vmatpush2.msra.mxu0 0.0
    %1670 = vmatprep.subr.mxu0 0.0
    %1671 = vmatpush2.msra.mxu0 0.0
    %1672 = vmatprep.subr.mxu0 0.0
    %1673 = vmatpush2.msra.mxu0 0.0
    %1674 = vmatprep.subr.mxu0 0.0
    %1675 = vmatpush2.msra.mxu0 0.0
    %1676 = vmatprep.subr.mxu0 0.0
    %1677 = vmatpush2.msra.mxu0 0.0
    %1678 = vmatprep.subr.mxu0 0.0
    %1679 = vmatpush2.msra.mxu0 0.0
    %1680 = vmatprep.subr.mxu0 0.0
    %1681 = vmatpush2.msra.mxu0 0.0
    %1682 = vmatprep.subr.mxu0 0.0
    %1683 = vmatpush2.msra.mxu0 0.0
    %1684 = vmatprep.subr.mxu0 0.0
    %1685 = vmatpush2.msra.mxu0 0.0
    %1686 = vmatprep.mubr.f32.mxu0 0.0
    %1687 = vmatmul.mubr.f32.gmra.mxu0 %v1617
    %v1688 = vpop.f32.mrf.mxu0
    %v1689 = vadd.f32 %v1615, %v1688
    %v1690 = vpop.f32.mrf.mxu0
    %1691 = vmatprep.mubr.f32.mxu0 0.0
    %1692 = vmatmul.mubr.f32.gmra.mxu0 %v1620
    %v1693 = vpop.f32.mrf.mxu0
    %v1694 = vadd.f32 %v1615, %v1693
    %v1695 = vpop.f32.mrf.mxu0
    %1696 = vdwg.mxu0
    %v1697 = vmax.f32 %v1689, 0.0
    %v1698 = vmax.f32 %v1694, 0.0
    %v1699 = vld [vmem:[#allocation10 + $0x3] sm:$0x1]
    %v1700 = vlaneseq
    %v1701 = vshrl.u32 %v1700, 7
    %v1702 = vsub.s32 0, %v1701
    %v1703 = vrot.slane %v1699, %v1702
    %1708 = vrot.lane.b32.xlu0 %v1607, 64
    %v1709 = vpop.permute.xlu0 %1708
    %1710 = vrot.lane.b32.xlu0 %v1608, 64
    %v1711 = vpop.permute.xlu0 %1710
    %1712 = vrot.lane.b32.xlu0 %v1609, 64
    %v1713 = vpop.permute.xlu0 %1712
    %1714 = vrot.lane.b32.xlu0 %v1610, 64
    %v1715 = vpop.permute.xlu0 %1714
    %v1717 = vsel %vm415, %v1697, 0
    %v1720 = vsel %vm415, %v1698, 0
    %v1722 = vsel %vm415, %v1709, 0
    %v1724 = vsel %vm415, %v1711, 0
    %v1726 = vsel %vm415, %v1713, 0
    %v1728 = vsel %vm415, %v1715, 0
    %1730 = vmatprep.subr.mxu0 0.0
    %1731 = vmatpush1.xpose.msra.mxu0 0.0
    %1732 = vmatprep.subr.mxu0 0.0
    %1733 = vmatpush1.xpose.msra.mxu0 0.0
    %1734 = vmatprep.subr.mxu0 0.0
    %1735 = vmatpush1.xpose.msra.mxu0 0.0
    %1736 = vmatprep.subr.mxu0 0.0
    %1737 = vmatpush1.xpose.msra.mxu0 0.0
    %1738 = vmatprep.subr.mxu0 0.0
    %1739 = vmatpush1.xpose.msra.mxu0 0.0
    %1740 = vmatprep.subr.mxu0 0.0
    %1741 = vmatpush1.xpose.msra.mxu0 0.0
    %1742 = vmatprep.subr.mxu0 0.0
    %1743 = vmatpush1.xpose.msra.mxu0 0.0
    %1744 = vmatprep.subr.mxu0 0.0
    %1745 = vmatpush1.xpose.msra.mxu0 0.0
    %1746 = vmatprep.subr.mxu0 0.0
    %1747 = vmatpush1.xpose.msra.mxu0 0.0
    %1748 = vmatprep.subr.mxu0 0.0
    %1749 = vmatpush1.xpose.msra.mxu0 0.0
    %1750 = vmatprep.subr.mxu0 0.0
    %1751 = vmatpush1.xpose.msra.mxu0 0.0
    %1752 = vmatprep.subr.mxu0 0.0
    %1753 = vmatpush1.xpose.msra.mxu0 0.0
    %1754 = vmatprep.subr.mxu0 0.0
    %1755 = vmatpush1.xpose.msra.mxu0 %v1728
    %1756 = vmatprep.subr.mxu0 0.0
    %1757 = vmatpush1.xpose.msra.mxu0 %v1726
    %1758 = vmatprep.subr.mxu0 0.0
    %1759 = vmatpush1.xpose.msra.mxu0 %v1724
    %1760 = vmatprep.subr.mxu0 0.0
    %1761 = vmatpush1.xpose.msra.mxu0 %v1722
    %1762 = vmatprep.subr.mxu0 0.0
    %1763 = vmatpush2.xpose.msra.mxu0 0.0
    %1764 = vmatprep.subr.mxu0 0.0
    %1765 = vmatpush2.xpose.msra.mxu0 0.0
    %1766 = vmatprep.subr.mxu0 0.0
    %1767 = vmatpush2.xpose.msra.mxu0 0.0
    %1768 = vmatprep.subr.mxu0 0.0
    %1769 = vmatpush2.xpose.msra.mxu0 0.0
    %1770 = vmatprep.subr.mxu0 0.0
    %1771 = vmatpush2.xpose.msra.mxu0 0.0
    %1772 = vmatprep.subr.mxu0 0.0
    %1773 = vmatpush2.xpose.msra.mxu0 0.0
    %1774 = vmatprep.subr.mxu0 0.0
    %1775 = vmatpush2.xpose.msra.mxu0 0.0
    %1776 = vmatprep.subr.mxu0 0.0
    %1777 = vmatpush2.xpose.msra.mxu0 0.0
    %1778 = vmatprep.subr.mxu0 0.0
    %1779 = vmatpush2.xpose.msra.mxu0 0.0
    %1780 = vmatprep.subr.mxu0 0.0
    %1781 = vmatpush2.xpose.msra.mxu0 0.0
    %1782 = vmatprep.subr.mxu0 0.0
    %1783 = vmatpush2.xpose.msra.mxu0 0.0
    %1784 = vmatprep.subr.mxu0 0.0
    %1785 = vmatpush2.xpose.msra.mxu0 0.0
    %1786 = vmatprep.subr.mxu0 0.0
    %1787 = vmatpush2.xpose.msra.mxu0 0.0
    %1788 = vmatprep.subr.mxu0 0.0
    %1789 = vmatpush2.xpose.msra.mxu0 0.0
    %1790 = vmatprep.subr.mxu0 0.0
    %1791 = vmatpush2.xpose.msra.mxu0 0.0
    %1792 = vmatprep.subr.mxu0 0.0
    %1793 = vmatpush2.xpose.msra.mxu0 0.0
    %1794 = vmatprep.mubr.f32.mxu0 0.0
    %1795 = vmatmul.mubr.f32.gmra.mxu0 %v1717
    %v1796 = vpop.f32.mrf.mxu0
    %v1797 = vadd.f32 %v1703, %v1796
    %v1798 = vpop.f32.mrf.mxu0
    %1799 = vmatprep.mubr.f32.mxu0 0.0
    %1800 = vmatmul.mubr.f32.gmra.mxu0 %v1720
    %v1801 = vpop.f32.mrf.mxu0
    %v1802 = vadd.f32 %v1703, %v1801
    %v1803 = vpop.f32.mrf.mxu0
    %1804 = vdwg.mxu0
    %v1805 = vadd.f32 %v1551, %v1797
    %v1806 = vadd.f32 %v1552, %v1802
    %v1807 = vld [vmem:[#allocation10 + $0xe] sm:$0x1]
    %v1808 = vld [vmem:[#allocation10 + $0xf] sm:$0x1]
    %v1809 = vsel %vm95, %v1805, 0.0
    %1810 = vadd.xlane.f32.xlu0 %v1809
    %v1811 = vpop.xlane.xlu0 %1810
    %v1812 = vsel %vm95, %v1806, 0.0
    %1813 = vadd.xlane.f32.xlu0 %v1812
    %v1814 = vpop.xlane.xlu0 %1813
    %v1815 = vmul.f32 %v1811, %v102
    %v1816 = vmul.f32 %v1814, %v102
    %v1817 = vsub.f32 %v1805, %v1815
    %v1818 = vsub.f32 %v1806, %v1816
    %v1819 = vmul.f32 %v1817, %v1817
    %v1820 = vmul.f32 %v1818, %v1818
    %v1821 = vsel %vm95, %v1819, 0.0
    %1822 = vadd.xlane.f32.xlu0 %v1821
    %v1823 = vpop.xlane.xlu0 %1822
    %v1824 = vsel %vm95, %v1820, 0.0
    %1825 = vadd.xlane.f32.xlu0 %v1824
    %v1826 = vpop.xlane.xlu0 %1825
    %v1827 = vmul.f32 %v1823, 0.032258064
    %v1828 = vmul.f32 %v1826, 0.032258064
    %v1829 = vrsqrt.pop %v1827
    %v1830 = vmul.f32 %v1827, %v1829
    %vm1831 = vcmp.eq.f32.partialorder %v1827, inf
    %v1832 = vsel %vm1831, %v1827, %v1830
    %vm1833 = vcmp.eq.f32.partialorder %v1827, 0.0
    %v1834 = vand.u32 %v1827, 2147483648
    %v1835 = vsel %vm1833, %v1834, %v1832
    %v1836 = vrsqrt.pop %v1828
    %v1837 = vmul.f32 %v1828, %v1836
    %vm1838 = vcmp.eq.f32.partialorder %v1828, inf
    %v1839 = vsel %vm1838, %v1828, %v1837
    %vm1840 = vcmp.eq.f32.partialorder %v1828, 0.0
    %v1841 = vand.u32 %v1828, 2147483648
    %v1842 = vsel %vm1840, %v1841, %v1839
    %v1843 = vadd.f32 %v1835, 1000000.0
    %v1844 = vadd.f32 %v1842, 1000000.0
    %v1845 = vrcp.pop %v1843
    %v1846 = vrcp.pop %v1844
    %v1847 = vlaneseq
    %v1848 = vshrl.u32 %v1847, 7
    %v1849 = vsub.s32 0, %v1848
    %v1850 = vrot.slane %v1807, %v1849
    %v1851 = vmul.f32 %v1850, %v1817
    %v1852 = vmul.f32 %v1850, %v1818
    %v1853 = vmul.f32 %v1851, %v1845
    %v1854 = vmul.f32 %v1852, %v1846
    %v1855 = vlaneseq
    %v1856 = vshrl.u32 %v1855, 7
    %v1857 = vsub.s32 0, %v1856
    %v1858 = vrot.slane %v1808, %v1857
    %v1859 = vadd.f32 %v1853, %v1858
    %v1860 = vadd.f32 %v1854, %v1858
    %v1861 = vld [vmem:[#allocation10 + $0x4] sm:$0x1]
    %s1862 = scalar_lea.vmem [#allocation8], 64
    %v1863 = vld [vmem:[%s1862] sm:$0xff]
    %v1864 = vld [vmem:[%s1862 + $0x10] sm:$0xff]
    %v1865 = vld [vmem:[%s1862 + $0x20] sm:$0xff]
    %v1866 = vld [vmem:[%s1862 + $0x30] sm:$0xff]
    %v1867 = vlaneseq
    %v1868 = vshrl.u32 %v1867, 7
    %v1869 = vsub.s32 0, %v1868
    %v1870 = vrot.slane %v1861, %v1869
    %v1872 = vsel %vm95, %v1859, 0
    %v1875 = vsel %vm95, %v1860, 0
    %1877 = vmatprep.subr.mxu0 0.0
    %1878 = vmatpush1.msra.mxu0 0.0
    %1879 = vmatprep.subr.mxu0 0.0
    %1880 = vmatpush1.msra.mxu0 0.0
    %1881 = vmatprep.subr.mxu0 0.0
    %1882 = vmatpush1.msra.mxu0 0.0
    %1883 = vmatprep.subr.mxu0 0.0
    %1884 = vmatpush1.msra.mxu0 0.0
    %1885 = vmatprep.subr.mxu0 0.0
    %1886 = vmatpush1.msra.mxu0 0.0
    %1887 = vmatprep.subr.mxu0 0.0
    %1888 = vmatpush1.msra.mxu0 0.0
    %1889 = vmatprep.subr.mxu0 0.0
    %1890 = vmatpush1.msra.mxu0 0.0
    %1891 = vmatprep.subr.mxu0 0.0
    %1892 = vmatpush1.msra.mxu0 0.0
    %1893 = vmatprep.subr.mxu0 0.0
    %1894 = vmatpush1.msra.mxu0 0.0
    %1895 = vmatprep.subr.mxu0 0.0
    %1896 = vmatpush1.msra.mxu0 0.0
    %1897 = vmatprep.subr.mxu0 0.0
    %1898 = vmatpush1.msra.mxu0 0.0
    %1899 = vmatprep.subr.mxu0 0.0
    %1900 = vmatpush1.msra.mxu0 0.0
    %1901 = vmatprep.subr.mxu0 0.0
    %1902 = vmatpush1.msra.mxu0 %v1866
    %1903 = vmatprep.subr.mxu0 0.0
    %1904 = vmatpush1.msra.mxu0 %v1865
    %1905 = vmatprep.subr.mxu0 0.0
    %1906 = vmatpush1.msra.mxu0 %v1864
    %1907 = vmatprep.subr.mxu0 0.0
    %1908 = vmatpush1.msra.mxu0 %v1863
    %1909 = vmatprep.subr.mxu0 0.0
    %1910 = vmatpush2.msra.mxu0 0.0
    %1911 = vmatprep.subr.mxu0 0.0
    %1912 = vmatpush2.msra.mxu0 0.0
    %1913 = vmatprep.subr.mxu0 0.0
    %1914 = vmatpush2.msra.mxu0 0.0
    %1915 = vmatprep.subr.mxu0 0.0
    %1916 = vmatpush2.msra.mxu0 0.0
    %1917 = vmatprep.subr.mxu0 0.0
    %1918 = vmatpush2.msra.mxu0 0.0
    %1919 = vmatprep.subr.mxu0 0.0
    %1920 = vmatpush2.msra.mxu0 0.0
    %1921 = vmatprep.subr.mxu0 0.0
    %1922 = vmatpush2.msra.mxu0 0.0
    %1923 = vmatprep.subr.mxu0 0.0
    %1924 = vmatpush2.msra.mxu0 0.0
    %1925 = vmatprep.subr.mxu0 0.0
    %1926 = vmatpush2.msra.mxu0 0.0
    %1927 = vmatprep.subr.mxu0 0.0
    %1928 = vmatpush2.msra.mxu0 0.0
    %1929 = vmatprep.subr.mxu0 0.0
    %1930 = vmatpush2.msra.mxu0 0.0
    %1931 = vmatprep.subr.mxu0 0.0
    %1932 = vmatpush2.msra.mxu0 0.0
    %1933 = vmatprep.subr.mxu0 0.0
    %1934 = vmatpush2.msra.mxu0 0.0
    %1935 = vmatprep.subr.mxu0 0.0
    %1936 = vmatpush2.msra.mxu0 0.0
    %1937 = vmatprep.subr.mxu0 0.0
    %1938 = vmatpush2.msra.mxu0 0.0
    %1939 = vmatprep.subr.mxu0 0.0
    %1940 = vmatpush2.msra.mxu0 0.0
    %1941 = vmatprep.mubr.f32.mxu0 0.0
    %1942 = vmatmul.mubr.f32.gmra.mxu0 %v1872
    %v1943 = vpop.f32.mrf.mxu0
    %v1944 = vadd.f32 %v1870, %v1943
    %v1945 = vpop.f32.mrf.mxu0
    %1946 = vmatprep.mubr.f32.mxu0 0.0
    %1947 = vmatmul.mubr.f32.gmra.mxu0 %v1875
    %v1948 = vpop.f32.mrf.mxu0
    %v1949 = vadd.f32 %v1870, %v1948
    %v1950 = vpop.f32.mrf.mxu0
    %1951 = vdwg.mxu0
    %1954 = vrot.lane.b32.xlu0 %v1944, 120
    %v1955 = vpop.permute.xlu0 %1954
    %1956 = vrot.lane.b32.xlu0 %v1949, 120
    %v1957 = vpop.permute.xlu0 %1956
    %1958 = vrot.lane.b32.xlu0 %v1944, 112
    %v1959 = vpop.permute.xlu0 %1958
    %1960 = vrot.lane.b32.xlu0 %v1949, 112
    %v1961 = vpop.permute.xlu0 %1960
    %1962 = vrot.lane.b32.xlu0 %v1944, 104
    %v1963 = vpop.permute.xlu0 %1962
    %1964 = vrot.lane.b32.xlu0 %v1949, 104
    %v1965 = vpop.permute.xlu0 %1964
    %1966 = vrot.lane.b32.xlu0 %v1944, 96
    %v1967 = vpop.permute.xlu0 %1966
    %1968 = vrot.lane.b32.xlu0 %v1949, 96
    %v1969 = vpop.permute.xlu0 %1968
    %1970 = vrot.lane.b32.xlu0 %v1955, 96
    %v1971 = vpop.permute.xlu0 %1970
    %1972 = vrot.lane.b32.xlu0 %v1957, 96
    %v1973 = vpop.permute.xlu0 %1972
    %1974 = vrot.lane.b32.xlu0 %v1959, 96
    %v1975 = vpop.permute.xlu0 %1974
    %1976 = vrot.lane.b32.xlu0 %v1961, 96
    %v1977 = vpop.permute.xlu0 %1976
    %1978 = vrot.lane.b32.xlu0 %v1963, 96
    %v1979 = vpop.permute.xlu0 %1978
    %1980 = vrot.lane.b32.xlu0 %v1965, 96
    %v1981 = vpop.permute.xlu0 %1980
    %v1982 = vsel %vm277, %v1944, 0
    %v1984 = vsel %vm277, %v1949, 0
    %v1986 = vsel %vm277, %v1955, 0
    %v1988 = vsel %vm277, %v1957, 0
    %v1990 = vsel %vm277, %v1959, 0
    %v1992 = vsel %vm277, %v1961, 0
    %v1994 = vsel %vm277, %v1963, 0
    %v1996 = vsel %vm277, %v1965, 0
    %v1998 = vsel %vm277, %v1967, 0
    %v2000 = vsel %vm277, %v1969, 0
    %v2002 = vsel %vm277, %v1971, 0
    %v2004 = vsel %vm277, %v1973, 0
    %v2006 = vsel %vm277, %v1975, 0
    %v2008 = vsel %vm277, %v1977, 0
    %v2010 = vsel %vm277, %v1979, 0
    %v2012 = vsel %vm277, %v1981, 0
    %2014 = vmatprep.subr.mxu0 0.0
    %2015 = vmatpush1.xpose.msra.mxu0 0.0
    %2016 = vmatprep.subr.mxu0 0.0
    %2017 = vmatpush1.xpose.msra.mxu0 0.0
    %2018 = vmatprep.subr.mxu0 0.0
    %2019 = vmatpush1.xpose.msra.mxu0 0.0
    %2020 = vmatprep.subr.mxu0 0.0
    %2021 = vmatpush1.xpose.msra.mxu0 0.0
    %2022 = vmatprep.subr.mxu0 0.0
    %2023 = vmatpush1.xpose.msra.mxu0 0.0
    %2024 = vmatprep.subr.mxu0 0.0
    %2025 = vmatpush1.xpose.msra.mxu0 0.0
    %2026 = vmatprep.subr.mxu0 0.0
    %2027 = vmatpush1.xpose.msra.mxu0 0.0
    %2028 = vmatprep.subr.mxu0 0.0
    %2029 = vmatpush1.xpose.msra.mxu0 0.0
    %2030 = vmatprep.subr.mxu0 0.0
    %2031 = vmatpush1.xpose.msra.mxu0 %v2012
    %2032 = vmatprep.subr.mxu0 0.0
    %2033 = vmatpush1.xpose.msra.mxu0 %v2010
    %2034 = vmatprep.subr.mxu0 0.0
    %2035 = vmatpush1.xpose.msra.mxu0 %v2008
    %2036 = vmatprep.subr.mxu0 0.0
    %2037 = vmatpush1.xpose.msra.mxu0 %v2006
    %2038 = vmatprep.subr.mxu0 0.0
    %2039 = vmatpush1.xpose.msra.mxu0 %v2004
    %2040 = vmatprep.subr.mxu0 0.0
    %2041 = vmatpush1.xpose.msra.mxu0 %v2002
    %2042 = vmatprep.subr.mxu0 0.0
    %2043 = vmatpush1.xpose.msra.mxu0 %v2000
    %2044 = vmatprep.subr.mxu0 0.0
    %2045 = vmatpush1.xpose.msra.mxu0 %v1998
    %2046 = vmatprep.subr.mxu0 0.0
    %2047 = vmatpush2.xpose.msra.mxu0 0.0
    %2048 = vmatprep.subr.mxu0 0.0
    %2049 = vmatpush2.xpose.msra.mxu0 0.0
    %2050 = vmatprep.subr.mxu0 0.0
    %2051 = vmatpush2.xpose.msra.mxu0 0.0
    %2052 = vmatprep.subr.mxu0 0.0
    %2053 = vmatpush2.xpose.msra.mxu0 0.0
    %2054 = vmatprep.subr.mxu0 0.0
    %2055 = vmatpush2.xpose.msra.mxu0 0.0
    %2056 = vmatprep.subr.mxu0 0.0
    %2057 = vmatpush2.xpose.msra.mxu0 0.0
    %2058 = vmatprep.subr.mxu0 0.0
    %2059 = vmatpush2.xpose.msra.mxu0 0.0
    %2060 = vmatprep.subr.mxu0 0.0
    %2061 = vmatpush2.xpose.msra.mxu0 0.0
    %2062 = vmatprep.subr.mxu0 0.0
    %2063 = vmatpush2.xpose.msra.mxu0 0.0
    %2064 = vmatprep.subr.mxu0 0.0
    %2065 = vmatpush2.xpose.msra.mxu0 0.0
    %2066 = vmatprep.subr.mxu0 0.0
    %2067 = vmatpush2.xpose.msra.mxu0 0.0
    %2068 = vmatprep.subr.mxu0 0.0
    %2069 = vmatpush2.xpose.msra.mxu0 0.0
    %2070 = vmatprep.subr.mxu0 0.0
    %2071 = vmatpush2.xpose.msra.mxu0 0.0
    %2072 = vmatprep.subr.mxu0 0.0
    %2073 = vmatpush2.xpose.msra.mxu0 0.0
    %2074 = vmatprep.subr.mxu0 0.0
    %2075 = vmatpush2.xpose.msra.mxu0 0.0
    %2076 = vmatprep.subr.mxu0 0.0
    %2077 = vmatpush2.xpose.msra.mxu0 0.0
    %2078 = vmatprep.mubr.f32.mxu0 0.0
    %2079 = vmatmul.mubr.f32.gmra.mxu0 %v1982
    %v2080 = vpop.f32.mrf.mxu0
    %v2081 = vadd.f32 %v253, %v2080
    %v2082 = vpop.f32.mrf.mxu0
    %2083 = vmatprep.mubr.f32.mxu0 0.0
    %2084 = vmatmul.mubr.f32.gmra.mxu0 %v1984
    %v2085 = vpop.f32.mrf.mxu0
    %v2086 = vadd.f32 %v254, %v2085
    %v2087 = vpop.f32.mrf.mxu0
    %2088 = vmatprep.mubr.f32.mxu0 0.0
    %2089 = vmatmul.mubr.f32.gmra.mxu0 %v1986
    %v2090 = vpop.f32.mrf.mxu0
    %v2091 = vadd.f32 %v255, %v2090
    %v2092 = vpop.f32.mrf.mxu0
    %2093 = vmatprep.mubr.f32.mxu0 0.0
    %2094 = vmatmul.mubr.f32.gmra.mxu0 %v1988
    %v2095 = vpop.f32.mrf.mxu0
    %v2096 = vadd.f32 %v256, %v2095
    %v2097 = vpop.f32.mrf.mxu0
    %2098 = vmatprep.mubr.f32.mxu0 0.0
    %2099 = vmatmul.mubr.f32.gmra.mxu0 %v1990
    %v2100 = vpop.f32.mrf.mxu0
    %v2101 = vadd.f32 %v257, %v2100
    %v2102 = vpop.f32.mrf.mxu0
    %2103 = vmatprep.mubr.f32.mxu0 0.0
    %2104 = vmatmul.mubr.f32.gmra.mxu0 %v1992
    %v2105 = vpop.f32.mrf.mxu0
    %v2106 = vadd.f32 %v258, %v2105
    %v2107 = vpop.f32.mrf.mxu0
    %2108 = vmatprep.mubr.f32.mxu0 0.0
    %2109 = vmatmul.mubr.f32.gmra.mxu0 %v1994
    %v2110 = vpop.f32.mrf.mxu0
    %v2111 = vadd.f32 %v259, %v2110
    %v2112 = vpop.f32.mrf.mxu0
    %2113 = vmatprep.mubr.f32.mxu0 0.0
    %2114 = vmatmul.mubr.f32.gmra.mxu0 %v1996
    %v2115 = vpop.f32.mrf.mxu0
    %v2116 = vadd.f32 %v260, %v2115
    %v2117 = vpop.f32.mrf.mxu0
    %2118 = vdwg.mxu0
    %v2119 = vsel %vm415, %v2081, -inf
    %2120 = vmax.xlane.f32.xlu0 %v2119
    %v2121 = vpop.xlane.xlu0 %2120
    %v2122 = vsel %vm415, %v2086, -inf
    %2123 = vmax.xlane.f32.xlu0 %v2122
    %v2124 = vpop.xlane.xlu0 %2123
    %v2125 = vsel %vm415, %v2091, -inf
    %2126 = vmax.xlane.f32.xlu0 %v2125
    %v2127 = vpop.xlane.xlu0 %2126
    %v2128 = vsel %vm415, %v2096, -inf
    %2129 = vmax.xlane.f32.xlu0 %v2128
    %v2130 = vpop.xlane.xlu0 %2129
    %v2131 = vsel %vm415, %v2101, -inf
    %2132 = vmax.xlane.f32.xlu0 %v2131
    %v2133 = vpop.xlane.xlu0 %2132
    %v2134 = vsel %vm415, %v2106, -inf
    %2135 = vmax.xlane.f32.xlu0 %v2134
    %v2136 = vpop.xlane.xlu0 %2135
    %v2137 = vsel %vm415, %v2111, -inf
    %2138 = vmax.xlane.f32.xlu0 %v2137
    %v2139 = vpop.xlane.xlu0 %2138
    %v2140 = vsel %vm415, %v2116, -inf
    %2141 = vmax.xlane.f32.xlu0 %v2140
    %v2142 = vpop.xlane.xlu0 %2141
    %v2143 = vsub.f32 %v2081, %v2121
    %v2144 = vsub.f32 %v2086, %v2124
    %v2145 = vsub.f32 %v2091, %v2127
    %v2146 = vsub.f32 %v2096, %v2130
    %v2147 = vsub.f32 %v2101, %v2133
    %v2148 = vsub.f32 %v2106, %v2136
    %v2149 = vsub.f32 %v2111, %v2139
    %v2150 = vsub.f32 %v2116, %v2142
    %v2151 = vmul.f32 %v2143, 1.442695
    %v2152 = vpow.pop %v2151
    %v2153 = vmul.f32 %v2144, 1.442695
    %v2154 = vpow.pop %v2153
    %v2155 = vmul.f32 %v2145, 1.442695
    %v2156 = vpow.pop %v2155
    %v2157 = vmul.f32 %v2146, 1.442695
    %v2158 = vpow.pop %v2157
    %v2159 = vmul.f32 %v2147, 1.442695
    %v2160 = vpow.pop %v2159
    %v2161 = vmul.f32 %v2148, 1.442695
    %v2162 = vpow.pop %v2161
    %v2163 = vmul.f32 %v2149, 1.442695
    %v2164 = vpow.pop %v2163
    %v2165 = vmul.f32 %v2150, 1.442695
    %v2166 = vpow.pop %v2165
    %v2167 = vsel %vm415, %v2152, 0.0
    %2168 = vadd.xlane.f32.xlu0 %v2167
    %v2169 = vpop.xlane.xlu0 %2168
    %v2170 = vsel %vm415, %v2154, 0.0
    %2171 = vadd.xlane.f32.xlu0 %v2170
    %v2172 = vpop.xlane.xlu0 %2171
    %v2173 = vsel %vm415, %v2156, 0.0
    %2174 = vadd.xlane.f32.xlu0 %v2173
    %v2175 = vpop.xlane.xlu0 %2174
    %v2176 = vsel %vm415, %v2158, 0.0
    %2177 = vadd.xlane.f32.xlu0 %v2176
    %v2178 = vpop.xlane.xlu0 %2177
    %v2179 = vsel %vm415, %v2160, 0.0
    %2180 = vadd.xlane.f32.xlu0 %v2179
    %v2181 = vpop.xlane.xlu0 %2180
    %v2182 = vsel %vm415, %v2162, 0.0
    %2183 = vadd.xlane.f32.xlu0 %v2182
    %v2184 = vpop.xlane.xlu0 %2183
    %v2185 = vsel %vm415, %v2164, 0.0
    %2186 = vadd.xlane.f32.xlu0 %v2185
    %v2187 = vpop.xlane.xlu0 %2186
    %v2188 = vsel %vm415, %v2166, 0.0
    %2189 = vadd.xlane.f32.xlu0 %v2188
    %v2190 = vpop.xlane.xlu0 %2189
    %v2191 = vrcp.pop %v2169
    %v2192 = vrcp.pop %v2172
    %v2193 = vrcp.pop %v2175
    %v2194 = vrcp.pop %v2178
    %v2195 = vrcp.pop %v2181
    %v2196 = vrcp.pop %v2184
    %v2197 = vrcp.pop %v2187
    %v2198 = vrcp.pop %v2190
    %v2199 = vmul.f32 %v2152, %v2191
    %v2200 = vmul.f32 %v2154, %v2192
    %v2201 = vmul.f32 %v2156, %v2193
    %v2202 = vmul.f32 %v2158, %v2194
    %v2203 = vmul.f32 %v2160, %v2195
    %v2204 = vmul.f32 %v2162, %v2196
    %v2205 = vmul.f32 %v2164, %v2197
    %v2206 = vmul.f32 %v2166, %v2198
    %2207 = vrot.lane.b32.xlu0 %v1944, 64
    %v2208 = vpop.permute.xlu0 %2207
    %2209 = vrot.lane.b32.xlu0 %v1949, 64
    %v2210 = vpop.permute.xlu0 %2209
    %2211 = vrot.lane.b32.xlu0 %v1955, 64
    %v2212 = vpop.permute.xlu0 %2211
    %2213 = vrot.lane.b32.xlu0 %v1957, 64
    %v2214 = vpop.permute.xlu0 %2213
    %2215 = vrot.lane.b32.xlu0 %v1959, 64
    %v2216 = vpop.permute.xlu0 %2215
    %2217 = vrot.lane.b32.xlu0 %v1961, 64
    %v2218 = vpop.permute.xlu0 %2217
    %2219 = vrot.lane.b32.xlu0 %v1963, 64
    %v2220 = vpop.permute.xlu0 %2219
    %2221 = vrot.lane.b32.xlu0 %v1965, 64
    %v2222 = vpop.permute.xlu0 %2221
    %v2232 = vsel %vm415, %v2199, 0
    %v2235 = vsel %vm415, %v2200, 0
    %v2238 = vsel %vm415, %v2201, 0
    %v2241 = vsel %vm415, %v2202, 0
    %v2244 = vsel %vm415, %v2203, 0
    %v2247 = vsel %vm415, %v2204, 0
    %v2250 = vsel %vm415, %v2205, 0
    %v2253 = vsel %vm415, %v2206, 0
    %2255 = vmatprep.subr.mxu0 0.0
    %2256 = vmatpush1.msra.mxu0 0.0
    %2257 = vmatprep.subr.mxu0 0.0
    %2258 = vmatpush1.msra.mxu0 0.0
    %2259 = vmatprep.subr.mxu0 0.0
    %2260 = vmatpush1.msra.mxu0 0.0
    %2261 = vmatprep.subr.mxu0 0.0
    %2262 = vmatpush1.msra.mxu0 0.0
    %2263 = vmatprep.subr.mxu0 0.0
    %2264 = vmatpush1.msra.mxu0 0.0
    %2265 = vmatprep.subr.mxu0 0.0
    %2266 = vmatpush1.msra.mxu0 0.0
    %2267 = vmatprep.subr.mxu0 0.0
    %2268 = vmatpush1.msra.mxu0 0.0
    %2269 = vmatprep.subr.mxu0 0.0
    %2270 = vmatpush1.msra.mxu0 0.0
    %2271 = vmatprep.subr.mxu0 0.0
    %2272 = vmatpush1.msra.mxu0 %v2222
    %2273 = vmatprep.subr.mxu0 0.0
    %2274 = vmatpush1.msra.mxu0 %v2220
    %2275 = vmatprep.subr.mxu0 0.0
    %2276 = vmatpush1.msra.mxu0 %v2218
    %2277 = vmatprep.subr.mxu0 0.0
    %2278 = vmatpush1.msra.mxu0 %v2216
    %2279 = vmatprep.subr.mxu0 0.0
    %2280 = vmatpush1.msra.mxu0 %v2214
    %2281 = vmatprep.subr.mxu0 0.0
    %2282 = vmatpush1.msra.mxu0 %v2212
    %2283 = vmatprep.subr.mxu0 0.0
    %2284 = vmatpush1.msra.mxu0 %v2210
    %2285 = vmatprep.subr.mxu0 0.0
    %2286 = vmatpush1.msra.mxu0 %v2208
    %2287 = vmatprep.subr.mxu0 0.0
    %2288 = vmatpush2.msra.mxu0 0.0
    %2289 = vmatprep.subr.mxu0 0.0
    %2290 = vmatpush2.msra.mxu0 0.0
    %2291 = vmatprep.subr.mxu0 0.0
    %2292 = vmatpush2.msra.mxu0 0.0
    %2293 = vmatprep.subr.mxu0 0.0
    %2294 = vmatpush2.msra.mxu0 0.0
    %2295 = vmatprep.subr.mxu0 0.0
    %2296 = vmatpush2.msra.mxu0 0.0
    %2297 = vmatprep.subr.mxu0 0.0
    %2298 = vmatpush2.msra.mxu0 0.0
    %2299 = vmatprep.subr.mxu0 0.0
    %2300 = vmatpush2.msra.mxu0 0.0
    %2301 = vmatprep.subr.mxu0 0.0
    %2302 = vmatpush2.msra.mxu0 0.0
    %2303 = vmatprep.subr.mxu0 0.0
    %2304 = vmatpush2.msra.mxu0 0.0
    %2305 = vmatprep.subr.mxu0 0.0
    %2306 = vmatpush2.msra.mxu0 0.0
    %2307 = vmatprep.subr.mxu0 0.0
    %2308 = vmatpush2.msra.mxu0 0.0
    %2309 = vmatprep.subr.mxu0 0.0
    %2310 = vmatpush2.msra.mxu0 0.0
    %2311 = vmatprep.subr.mxu0 0.0
    %2312 = vmatpush2.msra.mxu0 0.0
    %2313 = vmatprep.subr.mxu0 0.0
    %2314 = vmatpush2.msra.mxu0 0.0
    %2315 = vmatprep.subr.mxu0 0.0
    %2316 = vmatpush2.msra.mxu0 0.0
    %2317 = vmatprep.subr.mxu0 0.0
    %2318 = vmatpush2.msra.mxu0 0.0
    %2319 = vmatprep.mubr.f32.mxu0 0.0
    %2320 = vmatmul.mubr.f32.gmra.mxu0 %v2232
    %v2321 = vpop.f32.mrf.mxu0
    %v2322 = vadd.f32 0.0, %v2321
    %v2323 = vpop.f32.mrf.mxu0
    %2324 = vmatprep.mubr.f32.mxu0 0.0
    %2325 = vmatmul.mubr.f32.gmra.mxu0 %v2235
    %v2326 = vpop.f32.mrf.mxu0
    %v2327 = vadd.f32 0.0, %v2326
    %v2328 = vpop.f32.mrf.mxu0
    %2329 = vmatprep.mubr.f32.mxu0 0.0
    %2330 = vmatmul.mubr.f32.gmra.mxu0 %v2238
    %v2331 = vpop.f32.mrf.mxu0
    %v2332 = vadd.f32 0.0, %v2331
    %v2333 = vpop.f32.mrf.mxu0
    %2334 = vmatprep.mubr.f32.mxu0 0.0
    %2335 = vmatmul.mubr.f32.gmra.mxu0 %v2241
    %v2336 = vpop.f32.mrf.mxu0
    %v2337 = vadd.f32 0.0, %v2336
    %v2338 = vpop.f32.mrf.mxu0
    %2339 = vmatprep.mubr.f32.mxu0 0.0
    %2340 = vmatmul.mubr.f32.gmra.mxu0 %v2244
    %v2341 = vpop.f32.mrf.mxu0
    %v2342 = vadd.f32 0.0, %v2341
    %v2343 = vpop.f32.mrf.mxu0
    %2344 = vmatprep.mubr.f32.mxu0 0.0
    %2345 = vmatmul.mubr.f32.gmra.mxu0 %v2247
    %v2346 = vpop.f32.mrf.mxu0
    %v2347 = vadd.f32 0.0, %v2346
    %v2348 = vpop.f32.mrf.mxu0
    %2349 = vmatprep.mubr.f32.mxu0 0.0
    %2350 = vmatmul.mubr.f32.gmra.mxu0 %v2250
    %v2351 = vpop.f32.mrf.mxu0
    %v2352 = vadd.f32 0.0, %v2351
    %v2353 = vpop.f32.mrf.mxu0
    %2354 = vmatprep.mubr.f32.mxu0 0.0
    %2355 = vmatmul.mubr.f32.gmra.mxu0 %v2253
    %v2356 = vpop.f32.mrf.mxu0
    %v2357 = vadd.f32 0.0, %v2356
    %v2358 = vpop.f32.mrf.mxu0
    %2359 = vdwg.mxu0
    %2362 = vrot.lane.b32.xlu0 %v2332, 8
    %v2363 = vpop.permute.xlu0 %2362
    %2364 = vrot.lane.b32.xlu0 %v2337, 8
    %v2365 = vpop.permute.xlu0 %2364
    %2370 = vrot.lane.b32.xlu0 %v2342, 16
    %v2371 = vpop.permute.xlu0 %2370
    %2372 = vrot.lane.b32.xlu0 %v2347, 16
    %v2373 = vpop.permute.xlu0 %2372
    %2378 = vrot.lane.b32.xlu0 %v2352, 24
    %v2379 = vpop.permute.xlu0 %2378
    %2380 = vrot.lane.b32.xlu0 %v2357, 24
    %v2381 = vpop.permute.xlu0 %2380
    %v2384 = vsel %vm277, %v2322, %v2363
    %v2385 = vsel %vm277, %v2327, %v2365
    %v2386 = vsel %vm683, %v2384, %v2371
    %v2387 = vsel %vm683, %v2385, %v2373
    %v2388 = vsel %vm686, %v2386, %v2379
    %v2389 = vsel %vm686, %v2387, %v2381
    %v2390 = vld [vmem:[#allocation10 + $0x6] sm:$0x1]
    %v2391 = vlaneseq
    %v2392 = vshrl.u32 %v2391, 7
    %v2393 = vsub.s32 0, %v2392
    %v2394 = vrot.slane %v2390, %v2393
    %2399 = vrot.lane.b32.xlu0 %v1863, 32
    %v2400 = vpop.permute.xlu0 %2399
    %2401 = vrot.lane.b32.xlu0 %v1864, 32
    %v2402 = vpop.permute.xlu0 %2401
    %2403 = vrot.lane.b32.xlu0 %v1865, 32
    %v2404 = vpop.permute.xlu0 %2403
    %2405 = vrot.lane.b32.xlu0 %v1866, 32
    %v2406 = vpop.permute.xlu0 %2405
    %v2412 = vsel %vm95, %v2388, 0
    %v2415 = vsel %vm95, %v2389, 0
    %2417 = vmatprep.subr.mxu0 0.0
    %2418 = vmatpush1.msra.mxu0 0.0
    %2419 = vmatprep.subr.mxu0 0.0
    %2420 = vmatpush1.msra.mxu0 0.0
    %2421 = vmatprep.subr.mxu0 0.0
    %2422 = vmatpush1.msra.mxu0 0.0
    %2423 = vmatprep.subr.mxu0 0.0
    %2424 = vmatpush1.msra.mxu0 0.0
    %2425 = vmatprep.subr.mxu0 0.0
    %2426 = vmatpush1.msra.mxu0 0.0
    %2427 = vmatprep.subr.mxu0 0.0
    %2428 = vmatpush1.msra.mxu0 0.0
    %2429 = vmatprep.subr.mxu0 0.0
    %2430 = vmatpush1.msra.mxu0 0.0
    %2431 = vmatprep.subr.mxu0 0.0
    %2432 = vmatpush1.msra.mxu0 0.0
    %2433 = vmatprep.subr.mxu0 0.0
    %2434 = vmatpush1.msra.mxu0 0.0
    %2435 = vmatprep.subr.mxu0 0.0
    %2436 = vmatpush1.msra.mxu0 0.0
    %2437 = vmatprep.subr.mxu0 0.0
    %2438 = vmatpush1.msra.mxu0 0.0
    %2439 = vmatprep.subr.mxu0 0.0
    %2440 = vmatpush1.msra.mxu0 0.0
    %2441 = vmatprep.subr.mxu0 0.0
    %2442 = vmatpush1.msra.mxu0 %v2406
    %2443 = vmatprep.subr.mxu0 0.0
    %2444 = vmatpush1.msra.mxu0 %v2404
    %2445 = vmatprep.subr.mxu0 0.0
    %2446 = vmatpush1.msra.mxu0 %v2402
    %2447 = vmatprep.subr.mxu0 0.0
    %2448 = vmatpush1.msra.mxu0 %v2400
    %2449 = vmatprep.subr.mxu0 0.0
    %2450 = vmatpush2.msra.mxu0 0.0
    %2451 = vmatprep.subr.mxu0 0.0
    %2452 = vmatpush2.msra.mxu0 0.0
    %2453 = vmatprep.subr.mxu0 0.0
    %2454 = vmatpush2.msra.mxu0 0.0
    %2455 = vmatprep.subr.mxu0 0.0
    %2456 = vmatpush2.msra.mxu0 0.0
    %2457 = vmatprep.subr.mxu0 0.0
    %2458 = vmatpush2.msra.mxu0 0.0
    %2459 = vmatprep.subr.mxu0 0.0
    %2460 = vmatpush2.msra.mxu0 0.0
    %2461 = vmatprep.subr.mxu0 0.0
    %2462 = vmatpush2.msra.mxu0 0.0
    %2463 = vmatprep.subr.mxu0 0.0
    %2464 = vmatpush2.msra.mxu0 0.0
    %2465 = vmatprep.subr.mxu0 0.0
    %2466 = vmatpush2.msra.mxu0 0.0
    %2467 = vmatprep.subr.mxu0 0.0
    %2468 = vmatpush2.msra.mxu0 0.0
    %2469 = vmatprep.subr.mxu0 0.0
    %2470 = vmatpush2.msra.mxu0 0.0
    %2471 = vmatprep.subr.mxu0 0.0
    %2472 = vmatpush2.msra.mxu0 0.0
    %2473 = vmatprep.subr.mxu0 0.0
    %2474 = vmatpush2.msra.mxu0 0.0
    %2475 = vmatprep.subr.mxu0 0.0
    %2476 = vmatpush2.msra.mxu0 0.0
    %2477 = vmatprep.subr.mxu0 0.0
    %2478 = vmatpush2.msra.mxu0 0.0
    %2479 = vmatprep.subr.mxu0 0.0
    %2480 = vmatpush2.msra.mxu0 0.0
    %2481 = vmatprep.mubr.f32.mxu0 0.0
    %2482 = vmatmul.mubr.f32.gmra.mxu0 %v2412
    %v2483 = vpop.f32.mrf.mxu0
    %v2484 = vadd.f32 %v2394, %v2483
    %v2485 = vpop.f32.mrf.mxu0
    %2486 = vmatprep.mubr.f32.mxu0 0.0
    %2487 = vmatmul.mubr.f32.gmra.mxu0 %v2415
    %v2488 = vpop.f32.mrf.mxu0
    %v2489 = vadd.f32 %v2394, %v2488
    %v2490 = vpop.f32.mrf.mxu0
    %2491 = vdwg.mxu0
    %v2492 = vadd.f32 %v1805, %v2484
    %v2493 = vadd.f32 %v1806, %v2489
    %v2494 = vld [vmem:[#allocation10 + $0x10] sm:$0x1]
    %v2495 = vld [vmem:[#allocation10 + $0x11] sm:$0x1]
    %v2496 = vsel %vm95, %v2492, 0.0
    %2497 = vadd.xlane.f32.xlu0 %v2496
    %v2498 = vpop.xlane.xlu0 %2497
    %v2499 = vsel %vm95, %v2493, 0.0
    %2500 = vadd.xlane.f32.xlu0 %v2499
    %v2501 = vpop.xlane.xlu0 %2500
    %v2502 = vmul.f32 %v2498, %v102
    %v2503 = vmul.f32 %v2501, %v102
    %v2504 = vsub.f32 %v2492, %v2502
    %v2505 = vsub.f32 %v2493, %v2503
    %v2506 = vmul.f32 %v2504, %v2504
    %v2507 = vmul.f32 %v2505, %v2505
    %v2508 = vsel %vm95, %v2506, 0.0
    %2509 = vadd.xlane.f32.xlu0 %v2508
    %v2510 = vpop.xlane.xlu0 %2509
    %v2511 = vsel %vm95, %v2507, 0.0
    %2512 = vadd.xlane.f32.xlu0 %v2511
    %v2513 = vpop.xlane.xlu0 %2512
    %v2514 = vmul.f32 %v2510, 0.032258064
    %v2515 = vmul.f32 %v2513, 0.032258064
    %v2516 = vrsqrt.pop %v2514
    %v2517 = vmul.f32 %v2514, %v2516
    %vm2518 = vcmp.eq.f32.partialorder %v2514, inf
    %v2519 = vsel %vm2518, %v2514, %v2517
    %vm2520 = vcmp.eq.f32.partialorder %v2514, 0.0
    %v2521 = vand.u32 %v2514, 2147483648
    %v2522 = vsel %vm2520, %v2521, %v2519
    %v2523 = vrsqrt.pop %v2515
    %v2524 = vmul.f32 %v2515, %v2523
    %vm2525 = vcmp.eq.f32.partialorder %v2515, inf
    %v2526 = vsel %vm2525, %v2515, %v2524
    %vm2527 = vcmp.eq.f32.partialorder %v2515, 0.0
    %v2528 = vand.u32 %v2515, 2147483648
    %v2529 = vsel %vm2527, %v2528, %v2526
    %v2530 = vadd.f32 %v2522, 1000000.0
    %v2531 = vadd.f32 %v2529, 1000000.0
    %v2532 = vrcp.pop %v2530
    %v2533 = vrcp.pop %v2531
    %v2534 = vlaneseq
    %v2535 = vshrl.u32 %v2534, 7
    %v2536 = vsub.s32 0, %v2535
    %v2537 = vrot.slane %v2494, %v2536
    %v2538 = vmul.f32 %v2537, %v2504
    %v2539 = vmul.f32 %v2537, %v2505
    %v2540 = vmul.f32 %v2538, %v2532
    %v2541 = vmul.f32 %v2539, %v2533
    %v2542 = vlaneseq
    %v2543 = vshrl.u32 %v2542, 7
    %v2544 = vsub.s32 0, %v2543
    %v2545 = vrot.slane %v2495, %v2544
    %v2546 = vadd.f32 %v2540, %v2545
    %v2547 = vadd.f32 %v2541, %v2545
    %v2549 = vsel %vm95, %v2546, 0
    %v2552 = vsel %vm95, %v2547, 0
    %2554 = vmatprep.subr.mxu0 0.0
    %2555 = vmatpush1.msra.mxu0 0.0
    %2556 = vmatprep.subr.mxu0 0.0
    %2557 = vmatpush1.msra.mxu0 0.0
    %2558 = vmatprep.subr.mxu0 0.0
    %2559 = vmatpush1.msra.mxu0 0.0
    %2560 = vmatprep.subr.mxu0 0.0
    %2561 = vmatpush1.msra.mxu0 0.0
    %2562 = vmatprep.subr.mxu0 0.0
    %2563 = vmatpush1.msra.mxu0 0.0
    %2564 = vmatprep.subr.mxu0 0.0
    %2565 = vmatpush1.msra.mxu0 0.0
    %2566 = vmatprep.subr.mxu0 0.0
    %2567 = vmatpush1.msra.mxu0 0.0
    %2568 = vmatprep.subr.mxu0 0.0
    %2569 = vmatpush1.msra.mxu0 0.0
    %2570 = vmatprep.subr.mxu0 0.0
    %2571 = vmatpush1.msra.mxu0 0.0
    %2572 = vmatprep.subr.mxu0 0.0
    %2573 = vmatpush1.msra.mxu0 0.0
    %2574 = vmatprep.subr.mxu0 0.0
    %2575 = vmatpush1.msra.mxu0 0.0
    %2576 = vmatprep.subr.mxu0 0.0
    %2577 = vmatpush1.msra.mxu0 0.0
    %2578 = vmatprep.subr.mxu0 0.0
    %2579 = vmatpush1.msra.mxu0 %v1866
    %2580 = vmatprep.subr.mxu0 0.0
    %2581 = vmatpush1.msra.mxu0 %v1865
    %2582 = vmatprep.subr.mxu0 0.0
    %2583 = vmatpush1.msra.mxu0 %v1864
    %2584 = vmatprep.subr.mxu0 0.0
    %2585 = vmatpush1.msra.mxu0 %v1863
    %2586 = vmatprep.subr.mxu0 0.0
    %2587 = vmatpush2.msra.mxu0 0.0
    %2588 = vmatprep.subr.mxu0 0.0
    %2589 = vmatpush2.msra.mxu0 0.0
    %2590 = vmatprep.subr.mxu0 0.0
    %2591 = vmatpush2.msra.mxu0 0.0
    %2592 = vmatprep.subr.mxu0 0.0
    %2593 = vmatpush2.msra.mxu0 0.0
    %2594 = vmatprep.subr.mxu0 0.0
    %2595 = vmatpush2.msra.mxu0 0.0
    %2596 = vmatprep.subr.mxu0 0.0
    %2597 = vmatpush2.msra.mxu0 0.0
    %2598 = vmatprep.subr.mxu0 0.0
    %2599 = vmatpush2.msra.mxu0 0.0
    %2600 = vmatprep.subr.mxu0 0.0
    %2601 = vmatpush2.msra.mxu0 0.0
    %2602 = vmatprep.subr.mxu0 0.0
    %2603 = vmatpush2.msra.mxu0 0.0
    %2604 = vmatprep.subr.mxu0 0.0
    %2605 = vmatpush2.msra.mxu0 0.0
    %2606 = vmatprep.subr.mxu0 0.0
    %2607 = vmatpush2.msra.mxu0 0.0
    %2608 = vmatprep.subr.mxu0 0.0
    %2609 = vmatpush2.msra.mxu0 0.0
    %2610 = vmatprep.subr.mxu0 0.0
    %2611 = vmatpush2.msra.mxu0 0.0
    %2612 = vmatprep.subr.mxu0 0.0
    %2613 = vmatpush2.msra.mxu0 0.0
    %2614 = vmatprep.subr.mxu0 0.0
    %2615 = vmatpush2.msra.mxu0 0.0
    %2616 = vmatprep.subr.mxu0 0.0
    %2617 = vmatpush2.msra.mxu0 0.0
    %2618 = vmatprep.mubr.f32.mxu0 0.0
    %2619 = vmatmul.mubr.f32.gmra.mxu0 %v2549
    %v2620 = vpop.f32.mrf.mxu0
    %v2621 = vadd.f32 %v1870, %v2620
    %v2622 = vpop.f32.mrf.mxu0
    %2623 = vmatprep.mubr.f32.mxu0 0.0
    %2624 = vmatmul.mubr.f32.gmra.mxu0 %v2552
    %v2625 = vpop.f32.mrf.mxu0
    %v2626 = vadd.f32 %v1870, %v2625
    %v2627 = vpop.f32.mrf.mxu0
    %2628 = vdwg.mxu0
    %2629 = vrot.lane.b32.xlu0 %v1863, 96
    %v2630 = vpop.permute.xlu0 %2629
    %2631 = vrot.lane.b32.xlu0 %v1864, 96
    %v2632 = vpop.permute.xlu0 %2631
    %2633 = vrot.lane.b32.xlu0 %v1865, 96
    %v2634 = vpop.permute.xlu0 %2633
    %2635 = vrot.lane.b32.xlu0 %v1866, 96
    %v2636 = vpop.permute.xlu0 %2635
    %2642 = vrot.lane.b32.xlu0 %v1870, 96
    %v2643 = vpop.permute.xlu0 %2642
    %2645 = vmatprep.subr.mxu0 0.0
    %2646 = vmatpush1.msra.mxu0 0.0
    %2647 = vmatprep.subr.mxu0 0.0
    %2648 = vmatpush1.msra.mxu0 0.0
    %2649 = vmatprep.subr.mxu0 0.0
    %2650 = vmatpush1.msra.mxu0 0.0
    %2651 = vmatprep.subr.mxu0 0.0
    %2652 = vmatpush1.msra.mxu0 0.0
    %2653 = vmatprep.subr.mxu0 0.0
    %2654 = vmatpush1.msra.mxu0 0.0
    %2655 = vmatprep.subr.mxu0 0.0
    %2656 = vmatpush1.msra.mxu0 0.0
    %2657 = vmatprep.subr.mxu0 0.0
    %2658 = vmatpush1.msra.mxu0 0.0
    %2659 = vmatprep.subr.mxu0 0.0
    %2660 = vmatpush1.msra.mxu0 0.0
    %2661 = vmatprep.subr.mxu0 0.0
    %2662 = vmatpush1.msra.mxu0 0.0
    %2663 = vmatprep.subr.mxu0 0.0
    %2664 = vmatpush1.msra.mxu0 0.0
    %2665 = vmatprep.subr.mxu0 0.0
    %2666 = vmatpush1.msra.mxu0 0.0
    %2667 = vmatprep.subr.mxu0 0.0
    %2668 = vmatpush1.msra.mxu0 0.0
    %2669 = vmatprep.subr.mxu0 0.0
    %2670 = vmatpush1.msra.mxu0 %v2636
    %2671 = vmatprep.subr.mxu0 0.0
    %2672 = vmatpush1.msra.mxu0 %v2634
    %2673 = vmatprep.subr.mxu0 0.0
    %2674 = vmatpush1.msra.mxu0 %v2632
    %2675 = vmatprep.subr.mxu0 0.0
    %2676 = vmatpush1.msra.mxu0 %v2630
    %2677 = vmatprep.subr.mxu0 0.0
    %2678 = vmatpush2.msra.mxu0 0.0
    %2679 = vmatprep.subr.mxu0 0.0
    %2680 = vmatpush2.msra.mxu0 0.0
    %2681 = vmatprep.subr.mxu0 0.0
    %2682 = vmatpush2.msra.mxu0 0.0
    %2683 = vmatprep.subr.mxu0 0.0
    %2684 = vmatpush2.msra.mxu0 0.0
    %2685 = vmatprep.subr.mxu0 0.0
    %2686 = vmatpush2.msra.mxu0 0.0
    %2687 = vmatprep.subr.mxu0 0.0
    %2688 = vmatpush2.msra.mxu0 0.0
    %2689 = vmatprep.subr.mxu0 0.0
    %2690 = vmatpush2.msra.mxu0 0.0
    %2691 = vmatprep.subr.mxu0 0.0
    %2692 = vmatpush2.msra.mxu0 0.0
    %2693 = vmatprep.subr.mxu0 0.0
    %2694 = vmatpush2.msra.mxu0 0.0
    %2695 = vmatprep.subr.mxu0 0.0
    %2696 = vmatpush2.msra.mxu0 0.0
    %2697 = vmatprep.subr.mxu0 0.0
    %2698 = vmatpush2.msra.mxu0 0.0
    %2699 = vmatprep.subr.mxu0 0.0
    %2700 = vmatpush2.msra.mxu0 0.0
    %2701 = vmatprep.subr.mxu0 0.0
    %2702 = vmatpush2.msra.mxu0 0.0
    %2703 = vmatprep.subr.mxu0 0.0
    %2704 = vmatpush2.msra.mxu0 0.0
    %2705 = vmatprep.subr.mxu0 0.0
    %2706 = vmatpush2.msra.mxu0 0.0
    %2707 = vmatprep.subr.mxu0 0.0
    %2708 = vmatpush2.msra.mxu0 0.0
    %2709 = vmatprep.mubr.f32.mxu0 0.0
    %2710 = vmatmul.mubr.f32.gmra.mxu0 %v945
    %v2711 = vpop.f32.mrf.mxu0
    %v2712 = vadd.f32 %v2643, %v2711
    %v2713 = vpop.f32.mrf.mxu0
    %2714 = vmatprep.mubr.f32.mxu0 0.0
    %2715 = vmatmul.mubr.f32.gmra.mxu0 %v948
    %v2716 = vpop.f32.mrf.mxu0
    %v2717 = vadd.f32 %v2643, %v2716
    %v2718 = vpop.f32.mrf.mxu0
    %2719 = vdwg.mxu0
    %2722 = vrot.lane.b32.xlu0 %v2621, 120
    %v2723 = vpop.permute.xlu0 %2722
    %2724 = vrot.lane.b32.xlu0 %v2626, 120
    %v2725 = vpop.permute.xlu0 %2724
    %2726 = vrot.lane.b32.xlu0 %v2621, 112
    %v2727 = vpop.permute.xlu0 %2726
    %2728 = vrot.lane.b32.xlu0 %v2626, 112
    %v2729 = vpop.permute.xlu0 %2728
    %2730 = vrot.lane.b32.xlu0 %v2621, 104
    %v2731 = vpop.permute.xlu0 %2730
    %2732 = vrot.lane.b32.xlu0 %v2626, 104
    %v2733 = vpop.permute.xlu0 %2732
    %2736 = vrot.lane.b32.xlu0 %v2712, 120
    %v2737 = vpop.permute.xlu0 %2736
    %2738 = vrot.lane.b32.xlu0 %v2717, 120
    %v2739 = vpop.permute.xlu0 %2738
    %2740 = vrot.lane.b32.xlu0 %v2712, 112
    %v2741 = vpop.permute.xlu0 %2740
    %2742 = vrot.lane.b32.xlu0 %v2717, 112
    %v2743 = vpop.permute.xlu0 %2742
    %2744 = vrot.lane.b32.xlu0 %v2712, 104
    %v2745 = vpop.permute.xlu0 %2744
    %2746 = vrot.lane.b32.xlu0 %v2717, 104
    %v2747 = vpop.permute.xlu0 %2746
    %v2748 = vsel %vm277, %v2621, 0
    %v2750 = vsel %vm277, %v2626, 0
    %v2752 = vsel %vm277, %v2723, 0
    %v2754 = vsel %vm277, %v2725, 0
    %v2756 = vsel %vm277, %v2727, 0
    %v2758 = vsel %vm277, %v2729, 0
    %v2760 = vsel %vm277, %v2731, 0
    %v2762 = vsel %vm277, %v2733, 0
    %v2764 = vsel %vm277, %v2712, 0
    %v2766 = vsel %vm277, %v2717, 0
    %v2768 = vsel %vm277, %v2737, 0
    %v2770 = vsel %vm277, %v2739, 0
    %v2772 = vsel %vm277, %v2741, 0
    %v2774 = vsel %vm277, %v2743, 0
    %v2776 = vsel %vm277, %v2745, 0
    %v2778 = vsel %vm277, %v2747, 0
    %2780 = vmatprep.subr.mxu0 0.0
    %2781 = vmatpush1.xpose.msra.mxu0 0.0
    %2782 = vmatprep.subr.mxu0 0.0
    %2783 = vmatpush1.xpose.msra.mxu0 0.0
    %2784 = vmatprep.subr.mxu0 0.0
    %2785 = vmatpush1.xpose.msra.mxu0 0.0
    %2786 = vmatprep.subr.mxu0 0.0
    %2787 = vmatpush1.xpose.msra.mxu0 0.0
    %2788 = vmatprep.subr.mxu0 0.0
    %2789 = vmatpush1.xpose.msra.mxu0 0.0
    %2790 = vmatprep.subr.mxu0 0.0
    %2791 = vmatpush1.xpose.msra.mxu0 0.0
    %2792 = vmatprep.subr.mxu0 0.0
    %2793 = vmatpush1.xpose.msra.mxu0 0.0
    %2794 = vmatprep.subr.mxu0 0.0
    %2795 = vmatpush1.xpose.msra.mxu0 0.0
    %2796 = vmatprep.subr.mxu0 0.0
    %2797 = vmatpush1.xpose.msra.mxu0 %v2778
    %2798 = vmatprep.subr.mxu0 0.0
    %2799 = vmatpush1.xpose.msra.mxu0 %v2776
    %2800 = vmatprep.subr.mxu0 0.0
    %2801 = vmatpush1.xpose.msra.mxu0 %v2774
    %2802 = vmatprep.subr.mxu0 0.0
    %2803 = vmatpush1.xpose.msra.mxu0 %v2772
    %2804 = vmatprep.subr.mxu0 0.0
    %2805 = vmatpush1.xpose.msra.mxu0 %v2770
    %2806 = vmatprep.subr.mxu0 0.0
    %2807 = vmatpush1.xpose.msra.mxu0 %v2768
    %2808 = vmatprep.subr.mxu0 0.0
    %2809 = vmatpush1.xpose.msra.mxu0 %v2766
    %2810 = vmatprep.subr.mxu0 0.0
    %2811 = vmatpush1.xpose.msra.mxu0 %v2764
    %2812 = vmatprep.subr.mxu0 0.0
    %2813 = vmatpush2.xpose.msra.mxu0 0.0
    %2814 = vmatprep.subr.mxu0 0.0
    %2815 = vmatpush2.xpose.msra.mxu0 0.0
    %2816 = vmatprep.subr.mxu0 0.0
    %2817 = vmatpush2.xpose.msra.mxu0 0.0
    %2818 = vmatprep.subr.mxu0 0.0
    %2819 = vmatpush2.xpose.msra.mxu0 0.0
    %2820 = vmatprep.subr.mxu0 0.0
    %2821 = vmatpush2.xpose.msra.mxu0 0.0
    %2822 = vmatprep.subr.mxu0 0.0
    %2823 = vmatpush2.xpose.msra.mxu0 0.0
    %2824 = vmatprep.subr.mxu0 0.0
    %2825 = vmatpush2.xpose.msra.mxu0 0.0
    %2826 = vmatprep.subr.mxu0 0.0
    %2827 = vmatpush2.xpose.msra.mxu0 0.0
    %2828 = vmatprep.subr.mxu0 0.0
    %2829 = vmatpush2.xpose.msra.mxu0 0.0
    %2830 = vmatprep.subr.mxu0 0.0
    %2831 = vmatpush2.xpose.msra.mxu0 0.0
    %2832 = vmatprep.subr.mxu0 0.0
    %2833 = vmatpush2.xpose.msra.mxu0 0.0
    %2834 = vmatprep.subr.mxu0 0.0
    %2835 = vmatpush2.xpose.msra.mxu0 0.0
    %2836 = vmatprep.subr.mxu0 0.0
    %2837 = vmatpush2.xpose.msra.mxu0 0.0
    %2838 = vmatprep.subr.mxu0 0.0
    %2839 = vmatpush2.xpose.msra.mxu0 0.0
    %2840 = vmatprep.subr.mxu0 0.0
    %2841 = vmatpush2.xpose.msra.mxu0 0.0
    %2842 = vmatprep.subr.mxu0 0.0
    %2843 = vmatpush2.xpose.msra.mxu0 0.0
    %2844 = vmatprep.mubr.f32.mxu0 0.0
    %2845 = vmatmul.mubr.f32.gmra.mxu0 %v2748
    %v2846 = vpop.f32.mrf.mxu0
    %v2847 = vadd.f32 %v1054, %v2846
    %v2848 = vpop.f32.mrf.mxu0
    %2849 = vmatprep.mubr.f32.mxu0 0.0
    %2850 = vmatmul.mubr.f32.gmra.mxu0 %v2750
    %v2851 = vpop.f32.mrf.mxu0
    %v2852 = vadd.f32 %v1055, %v2851
    %v2853 = vpop.f32.mrf.mxu0
    %2854 = vmatprep.mubr.f32.mxu0 0.0
    %2855 = vmatmul.mubr.f32.gmra.mxu0 %v2752
    %v2856 = vpop.f32.mrf.mxu0
    %v2857 = vadd.f32 %v1056, %v2856
    %v2858 = vpop.f32.mrf.mxu0
    %2859 = vmatprep.mubr.f32.mxu0 0.0
    %2860 = vmatmul.mubr.f32.gmra.mxu0 %v2754
    %v2861 = vpop.f32.mrf.mxu0
    %v2862 = vadd.f32 %v1057, %v2861
    %v2863 = vpop.f32.mrf.mxu0
    %2864 = vmatprep.mubr.f32.mxu0 0.0
    %2865 = vmatmul.mubr.f32.gmra.mxu0 %v2756
    %v2866 = vpop.f32.mrf.mxu0
    %v2867 = vadd.f32 %v1058, %v2866
    %v2868 = vpop.f32.mrf.mxu0
    %2869 = vmatprep.mubr.f32.mxu0 0.0
    %2870 = vmatmul.mubr.f32.gmra.mxu0 %v2758
    %v2871 = vpop.f32.mrf.mxu0
    %v2872 = vadd.f32 %v1059, %v2871
    %v2873 = vpop.f32.mrf.mxu0
    %2874 = vmatprep.mubr.f32.mxu0 0.0
    %2875 = vmatmul.mubr.f32.gmra.mxu0 %v2760
    %v2876 = vpop.f32.mrf.mxu0
    %v2877 = vadd.f32 %v1060, %v2876
    %v2878 = vpop.f32.mrf.mxu0
    %2879 = vmatprep.mubr.f32.mxu0 0.0
    %2880 = vmatmul.mubr.f32.gmra.mxu0 %v2762
    %v2881 = vpop.f32.mrf.mxu0
    %v2882 = vadd.f32 %v1061, %v2881
    %v2883 = vpop.f32.mrf.mxu0
    %2884 = vdwg.mxu0
    %v2885 = vsel %vm415, %v2847, -inf
    %2886 = vmax.xlane.f32.xlu0 %v2885
    %v2887 = vpop.xlane.xlu0 %2886
    %v2888 = vsel %vm415, %v2852, -inf
    %2889 = vmax.xlane.f32.xlu0 %v2888
    %v2890 = vpop.xlane.xlu0 %2889
    %v2891 = vsel %vm415, %v2857, -inf
    %2892 = vmax.xlane.f32.xlu0 %v2891
    %v2893 = vpop.xlane.xlu0 %2892
    %v2894 = vsel %vm415, %v2862, -inf
    %2895 = vmax.xlane.f32.xlu0 %v2894
    %v2896 = vpop.xlane.xlu0 %2895
    %v2897 = vsel %vm415, %v2867, -inf
    %2898 = vmax.xlane.f32.xlu0 %v2897
    %v2899 = vpop.xlane.xlu0 %2898
    %v2900 = vsel %vm415, %v2872, -inf
    %2901 = vmax.xlane.f32.xlu0 %v2900
    %v2902 = vpop.xlane.xlu0 %2901
    %v2903 = vsel %vm415, %v2877, -inf
    %2904 = vmax.xlane.f32.xlu0 %v2903
    %v2905 = vpop.xlane.xlu0 %2904
    %v2906 = vsel %vm415, %v2882, -inf
    %2907 = vmax.xlane.f32.xlu0 %v2906
    %v2908 = vpop.xlane.xlu0 %2907
    %v2909 = vsub.f32 %v2847, %v2887
    %v2910 = vsub.f32 %v2852, %v2890
    %v2911 = vsub.f32 %v2857, %v2893
    %v2912 = vsub.f32 %v2862, %v2896
    %v2913 = vsub.f32 %v2867, %v2899
    %v2914 = vsub.f32 %v2872, %v2902
    %v2915 = vsub.f32 %v2877, %v2905
    %v2916 = vsub.f32 %v2882, %v2908
    %v2917 = vmul.f32 %v2909, 1.442695
    %v2918 = vpow.pop %v2917
    %v2919 = vmul.f32 %v2910, 1.442695
    %v2920 = vpow.pop %v2919
    %v2921 = vmul.f32 %v2911, 1.442695
    %v2922 = vpow.pop %v2921
    %v2923 = vmul.f32 %v2912, 1.442695
    %v2924 = vpow.pop %v2923
    %v2925 = vmul.f32 %v2913, 1.442695
    %v2926 = vpow.pop %v2925
    %v2927 = vmul.f32 %v2914, 1.442695
    %v2928 = vpow.pop %v2927
    %v2929 = vmul.f32 %v2915, 1.442695
    %v2930 = vpow.pop %v2929
    %v2931 = vmul.f32 %v2916, 1.442695
    %v2932 = vpow.pop %v2931
    %v2933 = vsel %vm415, %v2918, 0.0
    %2934 = vadd.xlane.f32.xlu0 %v2933
    %v2935 = vpop.xlane.xlu0 %2934
    %v2936 = vsel %vm415, %v2920, 0.0
    %2937 = vadd.xlane.f32.xlu0 %v2936
    %v2938 = vpop.xlane.xlu0 %2937
    %v2939 = vsel %vm415, %v2922, 0.0
    %2940 = vadd.xlane.f32.xlu0 %v2939
    %v2941 = vpop.xlane.xlu0 %2940
    %v2942 = vsel %vm415, %v2924, 0.0
    %2943 = vadd.xlane.f32.xlu0 %v2942
    %v2944 = vpop.xlane.xlu0 %2943
    %v2945 = vsel %vm415, %v2926, 0.0
    %2946 = vadd.xlane.f32.xlu0 %v2945
    %v2947 = vpop.xlane.xlu0 %2946
    %v2948 = vsel %vm415, %v2928, 0.0
    %2949 = vadd.xlane.f32.xlu0 %v2948
    %v2950 = vpop.xlane.xlu0 %2949
    %v2951 = vsel %vm415, %v2930, 0.0
    %2952 = vadd.xlane.f32.xlu0 %v2951
    %v2953 = vpop.xlane.xlu0 %2952
    %v2954 = vsel %vm415, %v2932, 0.0
    %2955 = vadd.xlane.f32.xlu0 %v2954
    %v2956 = vpop.xlane.xlu0 %2955
    %v2957 = vrcp.pop %v2935
    %v2958 = vrcp.pop %v2938
    %v2959 = vrcp.pop %v2941
    %v2960 = vrcp.pop %v2944
    %v2961 = vrcp.pop %v2947
    %v2962 = vrcp.pop %v2950
    %v2963 = vrcp.pop %v2953
    %v2964 = vrcp.pop %v2956
    %v2965 = vmul.f32 %v2918, %v2957
    %v2966 = vmul.f32 %v2920, %v2958
    %v2967 = vmul.f32 %v2922, %v2959
    %v2968 = vmul.f32 %v2924, %v2960
    %v2969 = vmul.f32 %v2926, %v2961
    %v2970 = vmul.f32 %v2928, %v2962
    %v2971 = vmul.f32 %v2930, %v2963
    %v2972 = vmul.f32 %v2932, %v2964
    %2973 = vrot.lane.b32.xlu0 %v2712, 96
    %v2974 = vpop.permute.xlu0 %2973
    %2975 = vrot.lane.b32.xlu0 %v2717, 96
    %v2976 = vpop.permute.xlu0 %2975
    %2977 = vrot.lane.b32.xlu0 %v2737, 96
    %v2978 = vpop.permute.xlu0 %2977
    %2979 = vrot.lane.b32.xlu0 %v2739, 96
    %v2980 = vpop.permute.xlu0 %2979
    %2981 = vrot.lane.b32.xlu0 %v2741, 96
    %v2982 = vpop.permute.xlu0 %2981
    %2983 = vrot.lane.b32.xlu0 %v2743, 96
    %v2984 = vpop.permute.xlu0 %2983
    %2985 = vrot.lane.b32.xlu0 %v2745, 96
    %v2986 = vpop.permute.xlu0 %2985
    %2987 = vrot.lane.b32.xlu0 %v2747, 96
    %v2988 = vpop.permute.xlu0 %2987
    %v2998 = vsel %vm415, %v2965, 0
    %v3001 = vsel %vm415, %v2966, 0
    %v3004 = vsel %vm415, %v2967, 0
    %v3007 = vsel %vm415, %v2968, 0
    %v3010 = vsel %vm415, %v2969, 0
    %v3013 = vsel %vm415, %v2970, 0
    %v3016 = vsel %vm415, %v2971, 0
    %v3019 = vsel %vm415, %v2972, 0
    %3021 = vmatprep.subr.mxu0 0.0
    %3022 = vmatpush1.msra.mxu0 0.0
    %3023 = vmatprep.subr.mxu0 0.0
    %3024 = vmatpush1.msra.mxu0 0.0
    %3025 = vmatprep.subr.mxu0 0.0
    %3026 = vmatpush1.msra.mxu0 0.0
    %3027 = vmatprep.subr.mxu0 0.0
    %3028 = vmatpush1.msra.mxu0 0.0
    %3029 = vmatprep.subr.mxu0 0.0
    %3030 = vmatpush1.msra.mxu0 0.0
    %3031 = vmatprep.subr.mxu0 0.0
    %3032 = vmatpush1.msra.mxu0 0.0
    %3033 = vmatprep.subr.mxu0 0.0
    %3034 = vmatpush1.msra.mxu0 0.0
    %3035 = vmatprep.subr.mxu0 0.0
    %3036 = vmatpush1.msra.mxu0 0.0
    %3037 = vmatprep.subr.mxu0 0.0
    %3038 = vmatpush1.msra.mxu0 %v2988
    %3039 = vmatprep.subr.mxu0 0.0
    %3040 = vmatpush1.msra.mxu0 %v2986
    %3041 = vmatprep.subr.mxu0 0.0
    %3042 = vmatpush1.msra.mxu0 %v2984
    %3043 = vmatprep.subr.mxu0 0.0
    %3044 = vmatpush1.msra.mxu0 %v2982
    %3045 = vmatprep.subr.mxu0 0.0
    %3046 = vmatpush1.msra.mxu0 %v2980
    %3047 = vmatprep.subr.mxu0 0.0
    %3048 = vmatpush1.msra.mxu0 %v2978
    %3049 = vmatprep.subr.mxu0 0.0
    %3050 = vmatpush1.msra.mxu0 %v2976
    %3051 = vmatprep.subr.mxu0 0.0
    %3052 = vmatpush1.msra.mxu0 %v2974
    %3053 = vmatprep.subr.mxu0 0.0
    %3054 = vmatpush2.msra.mxu0 0.0
    %3055 = vmatprep.subr.mxu0 0.0
    %3056 = vmatpush2.msra.mxu0 0.0
    %3057 = vmatprep.subr.mxu0 0.0
    %3058 = vmatpush2.msra.mxu0 0.0
    %3059 = vmatprep.subr.mxu0 0.0
    %3060 = vmatpush2.msra.mxu0 0.0
    %3061 = vmatprep.subr.mxu0 0.0
    %3062 = vmatpush2.msra.mxu0 0.0
    %3063 = vmatprep.subr.mxu0 0.0
    %3064 = vmatpush2.msra.mxu0 0.0
    %3065 = vmatprep.subr.mxu0 0.0
    %3066 = vmatpush2.msra.mxu0 0.0
    %3067 = vmatprep.subr.mxu0 0.0
    %3068 = vmatpush2.msra.mxu0 0.0
    %3069 = vmatprep.subr.mxu0 0.0
    %3070 = vmatpush2.msra.mxu0 0.0
    %3071 = vmatprep.subr.mxu0 0.0
    %3072 = vmatpush2.msra.mxu0 0.0
    %3073 = vmatprep.subr.mxu0 0.0
    %3074 = vmatpush2.msra.mxu0 0.0
    %3075 = vmatprep.subr.mxu0 0.0
    %3076 = vmatpush2.msra.mxu0 0.0
    %3077 = vmatprep.subr.mxu0 0.0
    %3078 = vmatpush2.msra.mxu0 0.0
    %3079 = vmatprep.subr.mxu0 0.0
    %3080 = vmatpush2.msra.mxu0 0.0
    %3081 = vmatprep.subr.mxu0 0.0
    %3082 = vmatpush2.msra.mxu0 0.0
    %3083 = vmatprep.subr.mxu0 0.0
    %3084 = vmatpush2.msra.mxu0 0.0
    %3085 = vmatprep.mubr.f32.mxu0 0.0
    %3086 = vmatmul.mubr.f32.gmra.mxu0 %v2998
    %v3087 = vpop.f32.mrf.mxu0
    %v3088 = vadd.f32 0.0, %v3087
    %v3089 = vpop.f32.mrf.mxu0
    %3090 = vmatprep.mubr.f32.mxu0 0.0
    %3091 = vmatmul.mubr.f32.gmra.mxu0 %v3001
    %v3092 = vpop.f32.mrf.mxu0
    %v3093 = vadd.f32 0.0, %v3092
    %v3094 = vpop.f32.mrf.mxu0
    %3095 = vmatprep.mubr.f32.mxu0 0.0
    %3096 = vmatmul.mubr.f32.gmra.mxu0 %v3004
    %v3097 = vpop.f32.mrf.mxu0
    %v3098 = vadd.f32 0.0, %v3097
    %v3099 = vpop.f32.mrf.mxu0
    %3100 = vmatprep.mubr.f32.mxu0 0.0
    %3101 = vmatmul.mubr.f32.gmra.mxu0 %v3007
    %v3102 = vpop.f32.mrf.mxu0
    %v3103 = vadd.f32 0.0, %v3102
    %v3104 = vpop.f32.mrf.mxu0
    %3105 = vmatprep.mubr.f32.mxu0 0.0
    %3106 = vmatmul.mubr.f32.gmra.mxu0 %v3010
    %v3107 = vpop.f32.mrf.mxu0
    %v3108 = vadd.f32 0.0, %v3107
    %v3109 = vpop.f32.mrf.mxu0
    %3110 = vmatprep.mubr.f32.mxu0 0.0
    %3111 = vmatmul.mubr.f32.gmra.mxu0 %v3013
    %v3112 = vpop.f32.mrf.mxu0
    %v3113 = vadd.f32 0.0, %v3112
    %v3114 = vpop.f32.mrf.mxu0
    %3115 = vmatprep.mubr.f32.mxu0 0.0
    %3116 = vmatmul.mubr.f32.gmra.mxu0 %v3016
    %v3117 = vpop.f32.mrf.mxu0
    %v3118 = vadd.f32 0.0, %v3117
    %v3119 = vpop.f32.mrf.mxu0
    %3120 = vmatprep.mubr.f32.mxu0 0.0
    %3121 = vmatmul.mubr.f32.gmra.mxu0 %v3019
    %v3122 = vpop.f32.mrf.mxu0
    %v3123 = vadd.f32 0.0, %v3122
    %v3124 = vpop.f32.mrf.mxu0
    %3125 = vdwg.mxu0
    %3128 = vrot.lane.b32.xlu0 %v3098, 8
    %v3129 = vpop.permute.xlu0 %3128
    %3130 = vrot.lane.b32.xlu0 %v3103, 8
    %v3131 = vpop.permute.xlu0 %3130
    %3136 = vrot.lane.b32.xlu0 %v3108, 16
    %v3137 = vpop.permute.xlu0 %3136
    %3138 = vrot.lane.b32.xlu0 %v3113, 16
    %v3139 = vpop.permute.xlu0 %3138
    %3144 = vrot.lane.b32.xlu0 %v3118, 24
    %v3145 = vpop.permute.xlu0 %3144
    %3146 = vrot.lane.b32.xlu0 %v3123, 24
    %v3147 = vpop.permute.xlu0 %3146
    %v3150 = vsel %vm277, %v3088, %v3129
    %v3151 = vsel %vm277, %v3093, %v3131
    %v3152 = vsel %vm683, %v3150, %v3137
    %v3153 = vsel %vm683, %v3151, %v3139
    %v3154 = vsel %vm686, %v3152, %v3145
    %v3155 = vsel %vm686, %v3153, %v3147
    %v3157 = vsel %vm95, %v3154, 0
    %v3160 = vsel %vm95, %v3155, 0
    %3162 = vmatprep.subr.mxu0 0.0
    %3163 = vmatpush1.msra.mxu0 0.0
    %3164 = vmatprep.subr.mxu0 0.0
    %3165 = vmatpush1.msra.mxu0 0.0
    %3166 = vmatprep.subr.mxu0 0.0
    %3167 = vmatpush1.msra.mxu0 0.0
    %3168 = vmatprep.subr.mxu0 0.0
    %3169 = vmatpush1.msra.mxu0 0.0
    %3170 = vmatprep.subr.mxu0 0.0
    %3171 = vmatpush1.msra.mxu0 0.0
    %3172 = vmatprep.subr.mxu0 0.0
    %3173 = vmatpush1.msra.mxu0 0.0
    %3174 = vmatprep.subr.mxu0 0.0
    %3175 = vmatpush1.msra.mxu0 0.0
    %3176 = vmatprep.subr.mxu0 0.0
    %3177 = vmatpush1.msra.mxu0 0.0
    %3178 = vmatprep.subr.mxu0 0.0
    %3179 = vmatpush1.msra.mxu0 0.0
    %3180 = vmatprep.subr.mxu0 0.0
    %3181 = vmatpush1.msra.mxu0 0.0
    %3182 = vmatprep.subr.mxu0 0.0
    %3183 = vmatpush1.msra.mxu0 0.0
    %3184 = vmatprep.subr.mxu0 0.0
    %3185 = vmatpush1.msra.mxu0 0.0
    %3186 = vmatprep.subr.mxu0 0.0
    %3187 = vmatpush1.msra.mxu0 %v2406
    %3188 = vmatprep.subr.mxu0 0.0
    %3189 = vmatpush1.msra.mxu0 %v2404
    %3190 = vmatprep.subr.mxu0 0.0
    %3191 = vmatpush1.msra.mxu0 %v2402
    %3192 = vmatprep.subr.mxu0 0.0
    %3193 = vmatpush1.msra.mxu0 %v2400
    %3194 = vmatprep.subr.mxu0 0.0
    %3195 = vmatpush2.msra.mxu0 0.0
    %3196 = vmatprep.subr.mxu0 0.0
    %3197 = vmatpush2.msra.mxu0 0.0
    %3198 = vmatprep.subr.mxu0 0.0
    %3199 = vmatpush2.msra.mxu0 0.0
    %3200 = vmatprep.subr.mxu0 0.0
    %3201 = vmatpush2.msra.mxu0 0.0
    %3202 = vmatprep.subr.mxu0 0.0
    %3203 = vmatpush2.msra.mxu0 0.0
    %3204 = vmatprep.subr.mxu0 0.0
    %3205 = vmatpush2.msra.mxu0 0.0
    %3206 = vmatprep.subr.mxu0 0.0
    %3207 = vmatpush2.msra.mxu0 0.0
    %3208 = vmatprep.subr.mxu0 0.0
    %3209 = vmatpush2.msra.mxu0 0.0
    %3210 = vmatprep.subr.mxu0 0.0
    %3211 = vmatpush2.msra.mxu0 0.0
    %3212 = vmatprep.subr.mxu0 0.0
    %3213 = vmatpush2.msra.mxu0 0.0
    %3214 = vmatprep.subr.mxu0 0.0
    %3215 = vmatpush2.msra.mxu0 0.0
    %3216 = vmatprep.subr.mxu0 0.0
    %3217 = vmatpush2.msra.mxu0 0.0
    %3218 = vmatprep.subr.mxu0 0.0
    %3219 = vmatpush2.msra.mxu0 0.0
    %3220 = vmatprep.subr.mxu0 0.0
    %3221 = vmatpush2.msra.mxu0 0.0
    %3222 = vmatprep.subr.mxu0 0.0
    %3223 = vmatpush2.msra.mxu0 0.0
    %3224 = vmatprep.subr.mxu0 0.0
    %3225 = vmatpush2.msra.mxu0 0.0
    %3226 = vmatprep.mubr.f32.mxu0 0.0
    %3227 = vmatmul.mubr.f32.gmra.mxu0 %v3157
    %v3228 = vpop.f32.mrf.mxu0
    %v3229 = vadd.f32 %v2394, %v3228
    %v3230 = vpop.f32.mrf.mxu0
    %3231 = vmatprep.mubr.f32.mxu0 0.0
    %3232 = vmatmul.mubr.f32.gmra.mxu0 %v3160
    %v3233 = vpop.f32.mrf.mxu0
    %v3234 = vadd.f32 %v2394, %v3233
    %v3235 = vpop.f32.mrf.mxu0
    %3236 = vdwg.mxu0
    %v3237 = vadd.f32 %v2492, %v3229
    %v3238 = vadd.f32 %v2493, %v3234
    %v3239 = vld [vmem:[#allocation10 + $0x12] sm:$0x1]
    %v3240 = vld [vmem:[#allocation10 + $0x13] sm:$0x1]
    %v3241 = vsel %vm95, %v3237, 0.0
    %3242 = vadd.xlane.f32.xlu0 %v3241
    %v3243 = vpop.xlane.xlu0 %3242
    %v3244 = vsel %vm95, %v3238, 0.0
    %3245 = vadd.xlane.f32.xlu0 %v3244
    %v3246 = vpop.xlane.xlu0 %3245
    %v3247 = vmul.f32 %v3243, %v102
    %v3248 = vmul.f32 %v3246, %v102
    %v3249 = vsub.f32 %v3237, %v3247
    %v3250 = vsub.f32 %v3238, %v3248
    %v3251 = vmul.f32 %v3249, %v3249
    %v3252 = vmul.f32 %v3250, %v3250
    %v3253 = vsel %vm95, %v3251, 0.0
    %3254 = vadd.xlane.f32.xlu0 %v3253
    %v3255 = vpop.xlane.xlu0 %3254
    %v3256 = vsel %vm95, %v3252, 0.0
    %3257 = vadd.xlane.f32.xlu0 %v3256
    %v3258 = vpop.xlane.xlu0 %3257
    %v3259 = vmul.f32 %v3255, 0.032258064
    %v3260 = vmul.f32 %v3258, 0.032258064
    %v3261 = vrsqrt.pop %v3259
    %v3262 = vmul.f32 %v3259, %v3261
    %vm3263 = vcmp.eq.f32.partialorder %v3259, inf
    %v3264 = vsel %vm3263, %v3259, %v3262
    %vm3265 = vcmp.eq.f32.partialorder %v3259, 0.0
    %v3266 = vand.u32 %v3259, 2147483648
    %v3267 = vsel %vm3265, %v3266, %v3264
    %v3268 = vrsqrt.pop %v3260
    %v3269 = vmul.f32 %v3260, %v3268
    %vm3270 = vcmp.eq.f32.partialorder %v3260, inf
    %v3271 = vsel %vm3270, %v3260, %v3269
    %vm3272 = vcmp.eq.f32.partialorder %v3260, 0.0
    %v3273 = vand.u32 %v3260, 2147483648
    %v3274 = vsel %vm3272, %v3273, %v3271
    %v3275 = vadd.f32 %v3267, 1000000.0
    %v3276 = vadd.f32 %v3274, 1000000.0
    %v3277 = vrcp.pop %v3275
    %v3278 = vrcp.pop %v3276
    %v3279 = vlaneseq
    %v3280 = vshrl.u32 %v3279, 7
    %v3281 = vsub.s32 0, %v3280
    %v3282 = vrot.slane %v3239, %v3281
    %v3283 = vmul.f32 %v3282, %v3249
    %v3284 = vmul.f32 %v3282, %v3250
    %v3285 = vmul.f32 %v3283, %v3277
    %v3286 = vmul.f32 %v3284, %v3278
    %v3287 = vlaneseq
    %v3288 = vshrl.u32 %v3287, 7
    %v3289 = vsub.s32 0, %v3288
    %v3290 = vrot.slane %v3240, %v3289
    %v3291 = vadd.f32 %v3285, %v3290
    %v3292 = vadd.f32 %v3286, %v3290
    %v3293 = vld [vmem:[%s1862 + $0x8] sm:$0xff]
    %v3294 = vld [vmem:[%s1862 + $0x18] sm:$0xff]
    %v3295 = vld [vmem:[%s1862 + $0x28] sm:$0xff]
    %v3296 = vld [vmem:[%s1862 + $0x38] sm:$0xff]
    %v3297 = vld [vmem:[#allocation10 + $0x5] sm:$0x1]
    %v3298 = vlaneseq
    %v3299 = vshrl.u32 %v3298, 7
    %v3300 = vsub.s32 0, %v3299
    %v3301 = vrot.slane %v3297, %v3300
    %v3303 = vsel %vm95, %v3291, 0
    %v3306 = vsel %vm95, %v3292, 0
    %3308 = vmatprep.subr.mxu0 0.0
    %3309 = vmatpush1.msra.mxu0 0.0
    %3310 = vmatprep.subr.mxu0 0.0
    %3311 = vmatpush1.msra.mxu0 0.0
    %3312 = vmatprep.subr.mxu0 0.0
    %3313 = vmatpush1.msra.mxu0 0.0
    %3314 = vmatprep.subr.mxu0 0.0
    %3315 = vmatpush1.msra.mxu0 0.0
    %3316 = vmatprep.subr.mxu0 0.0
    %3317 = vmatpush1.msra.mxu0 0.0
    %3318 = vmatprep.subr.mxu0 0.0
    %3319 = vmatpush1.msra.mxu0 0.0
    %3320 = vmatprep.subr.mxu0 0.0
    %3321 = vmatpush1.msra.mxu0 0.0
    %3322 = vmatprep.subr.mxu0 0.0
    %3323 = vmatpush1.msra.mxu0 0.0
    %3324 = vmatprep.subr.mxu0 0.0
    %3325 = vmatpush1.msra.mxu0 0.0
    %3326 = vmatprep.subr.mxu0 0.0
    %3327 = vmatpush1.msra.mxu0 0.0
    %3328 = vmatprep.subr.mxu0 0.0
    %3329 = vmatpush1.msra.mxu0 0.0
    %3330 = vmatprep.subr.mxu0 0.0
    %3331 = vmatpush1.msra.mxu0 0.0
    %3332 = vmatprep.subr.mxu0 0.0
    %3333 = vmatpush1.msra.mxu0 %v3296
    %3334 = vmatprep.subr.mxu0 0.0
    %3335 = vmatpush1.msra.mxu0 %v3295
    %3336 = vmatprep.subr.mxu0 0.0
    %3337 = vmatpush1.msra.mxu0 %v3294
    %3338 = vmatprep.subr.mxu0 0.0
    %3339 = vmatpush1.msra.mxu0 %v3293
    %3340 = vmatprep.subr.mxu0 0.0
    %3341 = vmatpush2.msra.mxu0 0.0
    %3342 = vmatprep.subr.mxu0 0.0
    %3343 = vmatpush2.msra.mxu0 0.0
    %3344 = vmatprep.subr.mxu0 0.0
    %3345 = vmatpush2.msra.mxu0 0.0
    %3346 = vmatprep.subr.mxu0 0.0
    %3347 = vmatpush2.msra.mxu0 0.0
    %3348 = vmatprep.subr.mxu0 0.0
    %3349 = vmatpush2.msra.mxu0 0.0
    %3350 = vmatprep.subr.mxu0 0.0
    %3351 = vmatpush2.msra.mxu0 0.0
    %3352 = vmatprep.subr.mxu0 0.0
    %3353 = vmatpush2.msra.mxu0 0.0
    %3354 = vmatprep.subr.mxu0 0.0
    %3355 = vmatpush2.msra.mxu0 0.0
    %3356 = vmatprep.subr.mxu0 0.0
    %3357 = vmatpush2.msra.mxu0 0.0
    %3358 = vmatprep.subr.mxu0 0.0
    %3359 = vmatpush2.msra.mxu0 0.0
    %3360 = vmatprep.subr.mxu0 0.0
    %3361 = vmatpush2.msra.mxu0 0.0
    %3362 = vmatprep.subr.mxu0 0.0
    %3363 = vmatpush2.msra.mxu0 0.0
    %3364 = vmatprep.subr.mxu0 0.0
    %3365 = vmatpush2.msra.mxu0 0.0
    %3366 = vmatprep.subr.mxu0 0.0
    %3367 = vmatpush2.msra.mxu0 0.0
    %3368 = vmatprep.subr.mxu0 0.0
    %3369 = vmatpush2.msra.mxu0 0.0
    %3370 = vmatprep.subr.mxu0 0.0
    %3371 = vmatpush2.msra.mxu0 0.0
    %3372 = vmatprep.mubr.f32.mxu0 0.0
    %3373 = vmatmul.mubr.f32.gmra.mxu0 %v3303
    %v3374 = vpop.f32.mrf.mxu0
    %v3375 = vadd.f32 %v3301, %v3374
    %v3376 = vpop.f32.mrf.mxu0
    %3377 = vmatprep.mubr.f32.mxu0 0.0
    %3378 = vmatmul.mubr.f32.gmra.mxu0 %v3306
    %v3379 = vpop.f32.mrf.mxu0
    %v3380 = vadd.f32 %v3301, %v3379
    %v3381 = vpop.f32.mrf.mxu0
    %3382 = vdwg.mxu0
    %v3383 = vmax.f32 %v3375, 0.0
    %v3384 = vmax.f32 %v3380, 0.0
    %v3385 = vld [vmem:[#allocation10 + $0x7] sm:$0x1]
    %v3386 = vlaneseq
    %v3387 = vshrl.u32 %v3386, 7
    %v3388 = vsub.s32 0, %v3387
    %v3389 = vrot.slane %v3385, %v3388
    %3394 = vrot.lane.b32.xlu0 %v3293, 64
    %v3395 = vpop.permute.xlu0 %3394
    %3396 = vrot.lane.b32.xlu0 %v3294, 64
    %v3397 = vpop.permute.xlu0 %3396
    %3398 = vrot.lane.b32.xlu0 %v3295, 64
    %v3399 = vpop.permute.xlu0 %3398
    %3400 = vrot.lane.b32.xlu0 %v3296, 64
    %v3401 = vpop.permute.xlu0 %3400
    %v3403 = vsel %vm415, %v3383, 0
    %v3406 = vsel %vm415, %v3384, 0
    %v3408 = vsel %vm415, %v3395, 0
    %v3410 = vsel %vm415, %v3397, 0
    %v3412 = vsel %vm415, %v3399, 0
    %v3414 = vsel %vm415, %v3401, 0
    %3416 = vmatprep.subr.mxu0 0.0
    %3417 = vmatpush1.xpose.msra.mxu0 0.0
    %3418 = vmatprep.subr.mxu0 0.0
    %3419 = vmatpush1.xpose.msra.mxu0 0.0
    %3420 = vmatprep.subr.mxu0 0.0
    %3421 = vmatpush1.xpose.msra.mxu0 0.0
    %3422 = vmatprep.subr.mxu0 0.0
    %3423 = vmatpush1.xpose.msra.mxu0 0.0
    %3424 = vmatprep.subr.mxu0 0.0
    %3425 = vmatpush1.xpose.msra.mxu0 0.0
    %3426 = vmatprep.subr.mxu0 0.0
    %3427 = vmatpush1.xpose.msra.mxu0 0.0
    %3428 = vmatprep.subr.mxu0 0.0
    %3429 = vmatpush1.xpose.msra.mxu0 0.0
    %3430 = vmatprep.subr.mxu0 0.0
    %3431 = vmatpush1.xpose.msra.mxu0 0.0
    %3432 = vmatprep.subr.mxu0 0.0
    %3433 = vmatpush1.xpose.msra.mxu0 0.0
    %3434 = vmatprep.subr.mxu0 0.0
    %3435 = vmatpush1.xpose.msra.mxu0 0.0
    %3436 = vmatprep.subr.mxu0 0.0
    %3437 = vmatpush1.xpose.msra.mxu0 0.0
    %3438 = vmatprep.subr.mxu0 0.0
    %3439 = vmatpush1.xpose.msra.mxu0 0.0
    %3440 = vmatprep.subr.mxu0 0.0
    %3441 = vmatpush1.xpose.msra.mxu0 %v3414
    %3442 = vmatprep.subr.mxu0 0.0
    %3443 = vmatpush1.xpose.msra.mxu0 %v3412
    %3444 = vmatprep.subr.mxu0 0.0
    %3445 = vmatpush1.xpose.msra.mxu0 %v3410
    %3446 = vmatprep.subr.mxu0 0.0
    %3447 = vmatpush1.xpose.msra.mxu0 %v3408
    %3448 = vmatprep.subr.mxu0 0.0
    %3449 = vmatpush2.xpose.msra.mxu0 0.0
    %3450 = vmatprep.subr.mxu0 0.0
    %3451 = vmatpush2.xpose.msra.mxu0 0.0
    %3452 = vmatprep.subr.mxu0 0.0
    %3453 = vmatpush2.xpose.msra.mxu0 0.0
    %3454 = vmatprep.subr.mxu0 0.0
    %3455 = vmatpush2.xpose.msra.mxu0 0.0
    %3456 = vmatprep.subr.mxu0 0.0
    %3457 = vmatpush2.xpose.msra.mxu0 0.0
    %3458 = vmatprep.subr.mxu0 0.0
    %3459 = vmatpush2.xpose.msra.mxu0 0.0
    %3460 = vmatprep.subr.mxu0 0.0
    %3461 = vmatpush2.xpose.msra.mxu0 0.0
    %3462 = vmatprep.subr.mxu0 0.0
    %3463 = vmatpush2.xpose.msra.mxu0 0.0
    %3464 = vmatprep.subr.mxu0 0.0
    %3465 = vmatpush2.xpose.msra.mxu0 0.0
    %3466 = vmatprep.subr.mxu0 0.0
    %3467 = vmatpush2.xpose.msra.mxu0 0.0
    %3468 = vmatprep.subr.mxu0 0.0
    %3469 = vmatpush2.xpose.msra.mxu0 0.0
    %3470 = vmatprep.subr.mxu0 0.0
    %3471 = vmatpush2.xpose.msra.mxu0 0.0
    %3472 = vmatprep.subr.mxu0 0.0
    %3473 = vmatpush2.xpose.msra.mxu0 0.0
    %3474 = vmatprep.subr.mxu0 0.0
    %3475 = vmatpush2.xpose.msra.mxu0 0.0
    %3476 = vmatprep.subr.mxu0 0.0
    %3477 = vmatpush2.xpose.msra.mxu0 0.0
    %3478 = vmatprep.subr.mxu0 0.0
    %3479 = vmatpush2.xpose.msra.mxu0 0.0
    %3480 = vmatprep.mubr.f32.mxu0 0.0
    %3481 = vmatmul.mubr.f32.gmra.mxu0 %v3403
    %v3482 = vpop.f32.mrf.mxu0
    %v3483 = vadd.f32 %v3389, %v3482
    %v3484 = vpop.f32.mrf.mxu0
    %3485 = vmatprep.mubr.f32.mxu0 0.0
    %3486 = vmatmul.mubr.f32.gmra.mxu0 %v3406
    %v3487 = vpop.f32.mrf.mxu0
    %v3488 = vadd.f32 %v3389, %v3487
    %v3489 = vpop.f32.mrf.mxu0
    %3490 = vdwg.mxu0
    %v3491 = vadd.f32 %v3237, %v3483
    %v3492 = vadd.f32 %v3238, %v3488
    %v3493 = vld [vmem:[#allocation10 + $0x14] sm:$0x1]
    %v3494 = vld [vmem:[#allocation10 + $0x15] sm:$0x1]
    %v3495 = vsel %vm95, %v3491, 0.0
    %3496 = vadd.xlane.f32.xlu0 %v3495
    %v3497 = vpop.xlane.xlu0 %3496
    %v3498 = vsel %vm95, %v3492, 0.0
    %3499 = vadd.xlane.f32.xlu0 %v3498
    %v3500 = vpop.xlane.xlu0 %3499
    %v3501 = vmul.f32 %v3497, %v102
    %v3502 = vmul.f32 %v3500, %v102
    %v3503 = vsub.f32 %v3491, %v3501
    %v3504 = vsub.f32 %v3492, %v3502
    %v3505 = vmul.f32 %v3503, %v3503
    %v3506 = vmul.f32 %v3504, %v3504
    %v3507 = vsel %vm95, %v3505, 0.0
    %3508 = vadd.xlane.f32.xlu0 %v3507
    %v3509 = vpop.xlane.xlu0 %3508
    %v3510 = vsel %vm95, %v3506, 0.0
    %3511 = vadd.xlane.f32.xlu0 %v3510
    %v3512 = vpop.xlane.xlu0 %3511
    %v3513 = vmul.f32 %v3509, 0.032258064
    %v3514 = vmul.f32 %v3512, 0.032258064
    %v3515 = vrsqrt.pop %v3513
    %v3516 = vmul.f32 %v3513, %v3515
    %vm3517 = vcmp.eq.f32.partialorder %v3513, inf
    %v3518 = vsel %vm3517, %v3513, %v3516
    %vm3519 = vcmp.eq.f32.partialorder %v3513, 0.0
    %v3520 = vand.u32 %v3513, 2147483648
    %v3521 = vsel %vm3519, %v3520, %v3518
    %v3522 = vrsqrt.pop %v3514
    %v3523 = vmul.f32 %v3514, %v3522
    %vm3524 = vcmp.eq.f32.partialorder %v3514, inf
    %v3525 = vsel %vm3524, %v3514, %v3523
    %vm3526 = vcmp.eq.f32.partialorder %v3514, 0.0
    %v3527 = vand.u32 %v3514, 2147483648
    %v3528 = vsel %vm3526, %v3527, %v3525
    %v3529 = vadd.f32 %v3521, 1000000.0
    %v3530 = vadd.f32 %v3528, 1000000.0
    %v3531 = vrcp.pop %v3529
    %v3532 = vrcp.pop %v3530
    %v3533 = vlaneseq
    %v3534 = vshrl.u32 %v3533, 7
    %v3535 = vsub.s32 0, %v3534
    %v3536 = vrot.slane %v3493, %v3535
    %v3537 = vmul.f32 %v3536, %v3503
    %v3538 = vmul.f32 %v3536, %v3504
    %v3539 = vmul.f32 %v3537, %v3531
    %v3540 = vmul.f32 %v3538, %v3532
    %v3541 = vlaneseq
    %v3542 = vshrl.u32 %v3541, 7
    %v3543 = vsub.s32 0, %v3542
    %v3544 = vrot.slane %v3494, %v3543
    %v3545 = vadd.f32 %v3539, %v3544
    %v3546 = vadd.f32 %v3540, %v3544
    %3547 = vst.msk [vmem:[#allocation11] sm:$0xff] %vm95, %v3545
    %3548 = vst.msk [vmem:[#allocation11 + $0x8] sm:$0xff] %vm95, %v3546
    // Predicated region
    $region42: #{tpu_custom_call.1} parent=1 // pred_check
      _
    $region43: #{tpu_custom_call.1} parent=1 // pred_check_branch
      %3550 = sbr.rel (0) target = $region45
    $region44: #{tpu_custom_call.1} parent=1 // pred_region
      %s3552 = ssub.s32 256, 256
      %3553 = vsyncadd [#allocation4], %s3552
      %s3554 = sshll.u32 [#allocation11], 4
      %s3555 = int_to_ptr.vmem [resolvable:$true] %s3554
      %3560 = dma.vmem_to_hbm [thread:$0]  %s3555, 256, %s5, [#allocation4], 128, 128, 8
    $region45: #{tpu_custom_call.1} parent=1 // pred_fallthru
      _
    // Predicated region
    $region46: #{tpu_custom_call.1} parent=1 // pred_check
      _
    $region47: #{tpu_custom_call.1} parent=1 // pred_check_branch
      %3562 = sbr.rel (0) target = $region49
    $region48: #{tpu_custom_call.1} parent=1 // pred_region
      %3563 = dma.done [#allocation4], 256
    $region49: #{tpu_custom_call.1} parent=1 // pred_fallthru
      _
    %3564 = vsyncpa [#allocation3], 1
    %3565 = vsyncpa [#allocation6], 1
    %3566 = vsyncpa [#allocation9], 1
    %3567 = vsyncpa [#allocation4], 1

</llo_original>
